<compile_context>
chip_gen: v7x
topology: tpu7x:2x2x1
jax: 0.10.0
libtpu: 0.0.40
codegen_flags: <defaults>
</compile_context>

<pallas_src>
import jax
import jax.numpy as jnp
from jax.experimental import pallas as pl
from jax.experimental.pallas import tpu as pltpu


_MIN_PALLAS_ROWS = 64            # below this M, per-call overhead dominates -> XLA conv
_VMEM_BUDGET = 12 * 1024 * 1024  # per-step budget, safe vs. v5e/v6e/v7x scoped limits


def _round_up(x, m):
    return ((x + m - 1) // m) * m


def _hard_swish(x):
    # x * relu6(x + 3) / 6
    return x * jnp.clip(x + 3.0, 0.0, 6.0) * (1.0 / 6.0)


def _conv_gemm_hswish_kernel(p_ref, w_ref, b_ref, o_ref):
    """Fused im2col-GEMM + bias + hard-swish.

    p_ref: (tm, K)     bf16 im2col patch tile
    w_ref: (K, Cout)   bf16 reshaped conv weight (native width, no lane pad)
    b_ref: (1, Cout)   f32 bias
    o_ref: (tm, Cout)  bf16 output tile
    """
    acc = jnp.dot(p_ref[...], w_ref[...], preferred_element_type=jnp.float32)
    acc = acc + b_ref[...]
    # hard-swish kept in f32 (v5e VPU has no bf16 path), cast once on store.
    o_ref[...] = _hard_swish(acc).astype(o_ref.dtype)


def _tc_count_hint():
    """2 TensorCores per chip on v7x, else 1 (v5e/v6e)."""
    try:
        kind = jax.devices()[0].device_kind.lower()
        if "v7" in kind or "7x" in kind:
            return 2
    except Exception:
        pass
    return 1


def _choose_tm(M, K, cout, n_tc):
    """Row-tile size: one tile per TensorCore; shrink only if over VMEM budget."""

    def step_vmem(tm):
        # double-buffered bf16 patch tile + resident bf16 weight + f32 bias
        # + double-buffered bf16 output tile
        return (2 * tm * K * 2) + (2 * K * cout * 2) + (2 * cout * 4) + (2 * tm * cout * 2)

    mp16 = _round_up(M, 16)                    # bf16 packs [16,128] per vreg
    tm = _round_up(pl.cdiv(mp16, n_tc), 16)    # grid == n_tc when it fits
    while tm > 16 and step_vmem(tm) > _VMEM_BUDGET:
        tm = _round_up(pl.cdiv(tm, 2), 16)
    return tm


def _conv3x3_hswish_xla(x, w, b, *, stride):
    """Plain-XLA path for tiny stages (perf review: skip Pallas at M=8..32)."""
    out = jax.lax.conv_general_dilated(
        x.astype(jnp.bfloat16), w.astype(jnp.bfloat16),
        window_strides=(stride, stride), padding=((1, 1), (1, 1)),
        dimension_numbers=("NHWC", "HWIO", "NHWC"),
        preferred_element_type=jnp.float32)
    return _hard_swish(out + b).astype(jnp.bfloat16)


def conv3x3_hswish(x, w, b, *, stride):
    """3x3 conv (padding=1) + bias + hard-swish via a Pallas GEMM kernel.

    x: (N, H, W, Cin) NHWC, w: (3, 3, Cin, Cout), b: (Cout,)
    returns (N, OH, OW, Cout) bf16
    """
    N, H, W, Cin = x.shape
    KH, KW, _, Cout = w.shape
    pad = 1
    OH = (H + 2 * pad - KH) // stride + 1
    OW = (W + 2 * pad - KW) // stride + 1
    M = N * OH * OW
    K = KH * KW * Cin

    if M < _MIN_PALLAS_ROWS:
        return _conv3x3_hswish_xla(x, w, b, stride=stride)

    n_tc = _tc_count_hint()
    tm = _choose_tm(M, K, Cout, n_tc)
    mp = _round_up(M, tm)
    grid = mp // tm

    # --- glue: im2col in bf16 (halves HBM bytes of the dominant operand) ---
    xb = x.astype(jnp.bfloat16)
    xp = jnp.pad(xb, ((0, 0), (pad, pad), (pad, pad), (0, 0)))
    cols = []
    for i in range(KH):
        for j in range(KW):
            cols.append(
                xp[:, i:i + stride * OH:stride, j:j + stride * OW:stride, :])
    patches = jnp.stack(cols, axis=3).reshape(M, K)   # (M, 9*Cin), bf16
    if mp != M:
        # Padded rows produce hard_swish(bias) garbage; they are sliced off
        # after the call (`out[:M]`), so they never reach a consumer.
        patches = jnp.pad(patches, ((0, mp - M), (0, 0)))
    # TODO(synk): patch extraction is still materialized by XLA in HBM; fully
    # fusing it into the kernel (halo DMA + strided in-VMEM gathers over
    # non-128-aligned Cin) is the remaining big win per the perf review but
    # risks Mosaic relayouts at these tiny channel counts.

    w2 = w.reshape(K, Cout).astype(jnp.bfloat16)
    b2 = b.astype(jnp.float32).reshape(1, Cout)

    cost = pl.CostEstimate(
        flops=2 * mp * K * Cout,
        transcendentals=0,
        bytes_accessed=mp * K * 2 + K * Cout * 2 + Cout * 4 + mp * Cout * 2)

    out = pl.pallas_call(
        _conv_gemm_hswish_kernel,
        out_shape=jax.ShapeDtypeStruct((mp, Cout), jnp.bfloat16),
        grid_spec=pltpu.PrefetchScalarGridSpec(
            num_scalar_prefetch=0,
            grid=(grid,),
            in_specs=[
                pl.BlockSpec((tm, K), lambda i: (i, 0)),
                # Weight/bias index maps are constant across the grid; at
                # grid<=2 with ~KB-sized weights the extra pipeline buffer is
                # negligible, so pipeline_mode=pl.Buffered(1) is intentionally
                # omitted for maximum portability.
                pl.BlockSpec((K, Cout), lambda i: (0, 0)),
                pl.BlockSpec((1, Cout), lambda i: (0, 0)),
            ],
            out_specs=pl.BlockSpec((tm, Cout), lambda i: (i, 0)),
        ),
        compiler_params=pltpu.CompilerParams(
            dimension_semantics=("parallel",),
            vmem_limit_bytes=32 * 1024 * 1024,
        ),
        cost_estimate=cost,
    )(patches, w2, b2)

    # drop padded rows only (output width is already native Cout)
    return out[:M].reshape(N, OH, OW, Cout)


def init_params(key):
    """Deterministic synthetic MobileNetV3-ish backbone parameters."""
    # stem /2: 3->16, then stages /4:/8:/16:/32 with 24/40/80/160 channels
    chan_pairs = [(3, 16), (16, 24), (24, 40), (40, 80), (80, 160)]
    params = []
    for cin, cout in chan_pairs:
        key, kw, kb = jax.random.split(key, 3)
        fan_in = 3 * 3 * cin
        w = jax.random.normal(kw, (3, 3, cin, cout), jnp.float32) * (
            2.0 / fan_in) ** 0.5
        b = jax.random.normal(kb, (cout,), jnp.float32) * 0.01
        params.append((w, b))
    return params


def basic_block_forward(params, x_nchw):
    """Forward of BasicBlock: returns (x1, x2, x3, x4) feature maps in NCHW."""
    x = jnp.transpose(x_nchw, (0, 2, 3, 1))       # NCHW -> NHWC
    x = conv3x3_hswish(x, *params[0], stride=2)   # /2  stem
    x1 = conv3x3_hswish(x, *params[1], stride=2)  # /4
    x2 = conv3x3_hswish(x1, *params[2], stride=2) # /8
    x3 = conv3x3_hswish(x2, *params[3], stride=2) # /16
    x4 = conv3x3_hswish(x3, *params[4], stride=2) # /32
    # match the reference module's f32 feature-map outputs
    to_nchw = lambda t: jnp.transpose(t, (0, 3, 1, 2)).astype(jnp.float32)
    return tuple(to_nchw(t) for t in (x1, x2, x3, x4))


if __name__ == "__main__":
    key = jax.random.PRNGKey(0)
    key, kx = jax.random.split(key)
    # small input consistent with an image backbone (NCHW)
    x = jax.random.normal(kx, (2, 3, 64, 64), jnp.float32)

    params = init_params(key)
    outs = jax.jit(basic_block_forward)(params, x)
    outs = jax.block_until_ready(outs)

    expected = [(2, 24, 16, 16), (2, 40, 8, 8), (2, 80, 4, 4), (2, 160, 2, 2)]
    assert [tuple(o.shape) for o in outs] == expected, [o.shape for o in outs]
    assert all(bool(jnp.all(jnp.isfinite(o))) for o in outs)
    print("KERNEL_OK")
</pallas_src>

<mosaic_0001>
module attributes {stable_mosaic.version = 11 : i64} {
  func.func @_conv_gemm_hswish_kernel(%arg0: i32, %arg1: memref<2048x27xbf16, #tpu.memory_space<vmem>>, %arg2: memref<27x16xbf16, #tpu.memory_space<vmem>>, %arg3: memref<1x16xf32, #tpu.memory_space<vmem>>, %arg4: memref<2048x16xbf16, #tpu.memory_space<vmem>>) attributes {dimension_semantics = [#tpu.dimension_semantics<parallel>], iteration_bounds = array<i64: 1>, scalar_prefetch = 0 : i64, scratch_operands = 0 : i64, tpu.core_type = #tpu.core_type<tc>, window_params = [{transform_indices = @transform_0, window_bounds = array<i64: 2048, 27>}, {pipeline_mode = #tpu.pipeline_mode<synchronous>, transform_indices = @transform_1, window_bounds = array<i64: 27, 16>}, {pipeline_mode = #tpu.pipeline_mode<synchronous>, transform_indices = @transform_2, window_bounds = array<i64: 1, 16>}, {transform_indices = @transform_3, window_bounds = array<i64: 2048, 16>}]} {
    %c0 = arith.constant 0 : index
    %c0_0 = arith.constant 0 : index
    %0 = vector.load %arg1[%c0, %c0_0] : memref<2048x27xbf16, #tpu.memory_space<vmem>>, vector<2048x27xbf16>
    %c0_1 = arith.constant 0 : index
    %c0_2 = arith.constant 0 : index
    %1 = vector.load %arg2[%c0_1, %c0_2] : memref<27x16xbf16, #tpu.memory_space<vmem>>, vector<27x16xbf16>
    %cst = arith.constant dense<0.000000e+00> : vector<2048x16xf32>
    %2 = tpu.matmul %0, %1, %cst {dimension_numbers = #tpu.dot_dimension_numbers<[1], [0], [0], [1], [0, 0, 1, 1], [], []>} : vector<2048x27xbf16>, vector<27x16xbf16>, vector<2048x16xf32> -> vector<2048x16xf32>
    %c0_3 = arith.constant 0 : index
    %c0_4 = arith.constant 0 : index
    %3 = vector.load %arg3[%c0_3, %c0_4] : memref<1x16xf32, #tpu.memory_space<vmem>>, vector<1x16xf32>
    %4 = vector.broadcast %3 : vector<1x16xf32> to vector<2048x16xf32>
    %5 = arith.addf %2, %4 : vector<2048x16xf32>
    %cst_5 = arith.constant 3.000000e+00 : f32
    %6 = vector.broadcast %cst_5 : f32 to vector<2048x16xf32>
    %7 = arith.addf %5, %6 : vector<2048x16xf32>
    %cst_6 = arith.constant 0.000000e+00 : f32
    %cst_7 = arith.constant 6.000000e+00 : f32
    %8 = vector.broadcast %cst_6 : f32 to vector<2048x16xf32>
    %9 = arith.maximumf %8, %7 : vector<2048x16xf32>
    %10 = vector.broadcast %cst_7 : f32 to vector<2048x16xf32>
    %11 = arith.minimumf %10, %9 : vector<2048x16xf32>
    %12 = arith.mulf %5, %11 : vector<2048x16xf32>
    %cst_8 = arith.constant 0.166666672 : f32
    %13 = vector.broadcast %cst_8 : f32 to vector<2048x16xf32>
    %14 = arith.mulf %12, %13 : vector<2048x16xf32>
    %15 = arith.truncf %14 : vector<2048x16xf32> to vector<2048x16xbf16>
    %c0_9 = arith.constant 0 : index
    %c0_10 = arith.constant 0 : index
    %16 = vector.load %arg4[%c0_9, %c0_10] : memref<2048x16xbf16, #tpu.memory_space<vmem>>, vector<2048x16xbf16>
    tpu.vector_store %arg4[%c0_9, %c0_10], %15 {strides = array<i32>} : memref<2048x16xbf16, #tpu.memory_space<vmem>>, vector<2048x16xbf16>,
    return
  }
  func.func @transform_0(%arg0: i32) -> (i32, i32) {
    %c0_i32 = arith.constant 0 : i32
    %c0_i32_0 = arith.constant 0 : i32
    return %arg0, %c0_i32 : i32, i32
  }
  func.func @transform_1(%arg0: i32) -> (i32, i32) {
    %c0_i32 = arith.constant 0 : i32
    %c0_i32_0 = arith.constant 0 : i32
    %c0_i32_1 = arith.constant 0 : i32
    return %c0_i32, %c0_i32_0 : i32, i32
  }
  func.func @transform_2(%arg0: i32) -> (i32, i32) {
    %c0_i32 = arith.constant 0 : i32
    %c0_i32_0 = arith.constant 0 : i32
    %c0_i32_1 = arith.constant 0 : i32
    return %c0_i32, %c0_i32_0 : i32, i32
  }
  func.func @transform_3(%arg0: i32) -> (i32, i32) {
    %c0_i32 = arith.constant 0 : i32
    %c0_i32_0 = arith.constant 0 : i32
    return %arg0, %c0_i32 : i32, i32
  }
}

module attributes {stable_mosaic.version = 11 : i64} {
  func.func @_conv_gemm_hswish_kernel(%arg0: i32, %arg1: memref<512x144xbf16, #tpu.memory_space<vmem>>, %arg2: memref<144x24xbf16, #tpu.memory_space<vmem>>, %arg3: memref<1x24xf32, #tpu.memory_space<vmem>>, %arg4: memref<512x24xbf16, #tpu.memory_space<vmem>>) attributes {dimension_semantics = [#tpu.dimension_semantics<parallel>], iteration_bounds = array<i64: 1>, scalar_prefetch = 0 : i64, scratch_operands = 0 : i64, tpu.core_type = #tpu.core_type<tc>, window_params = [{transform_indices = @transform_0, window_bounds = array<i64: 512, 144>}, {pipeline_mode = #tpu.pipeline_mode<synchronous>, transform_indices = @transform_1, window_bounds = array<i64: 144, 24>}, {pipeline_mode = #tpu.pipeline_mode<synchronous>, transform_indices = @transform_2, window_bounds = array<i64: 1, 24>}, {transform_indices = @transform_3, window_bounds = array<i64: 512, 24>}]} {
    %c0 = arith.constant 0 : index
    %c0_0 = arith.constant 0 : index
    %0 = vector.load %arg1[%c0, %c0_0] : memref<512x144xbf16, #tpu.memory_space<vmem>>, vector<512x144xbf16>
    %c0_1 = arith.constant 0 : index
    %c0_2 = arith.constant 0 : index
    %1 = vector.load %arg2[%c0_1, %c0_2] : memref<144x24xbf16, #tpu.memory_space<vmem>>, vector<144x24xbf16>
    %cst = arith.constant dense<0.000000e+00> : vector<512x24xf32>
    %2 = tpu.matmul %0, %1, %cst {dimension_numbers = #tpu.dot_dimension_numbers<[1], [0], [0], [1], [0, 0, 1, 1], [], []>} : vector<512x144xbf16>, vector<144x24xbf16>, vector<512x24xf32> -> vector<512x24xf32>
    %c0_3 = arith.constant 0 : index
    %c0_4 = arith.constant 0 : index
    %3 = vector.load %arg3[%c0_3, %c0_4] : memref<1x24xf32, #tpu.memory_space<vmem>>, vector<1x24xf32>
    %4 = vector.broadcast %3 : vector<1x24xf32> to vector<512x24xf32>
    %5 = arith.addf %2, %4 : vector<512x24xf32>
    %cst_5 = arith.constant 3.000000e+00 : f32
    %6 = vector.broadcast %cst_5 : f32 to vector<512x24xf32>
    %7 = arith.addf %5, %6 : vector<512x24xf32>
    %cst_6 = arith.constant 0.000000e+00 : f32
    %cst_7 = arith.constant 6.000000e+00 : f32
    %8 = vector.broadcast %cst_6 : f32 to vector<512x24xf32>
    %9 = arith.maximumf %8, %7 : vector<512x24xf32>
    %10 = vector.broadcast %cst_7 : f32 to vector<512x24xf32>
    %11 = arith.minimumf %10, %9 : vector<512x24xf32>
    %12 = arith.mulf %5, %11 : vector<512x24xf32>
    %cst_8 = arith.constant 0.166666672 : f32
    %13 = vector.broadcast %cst_8 : f32 to vector<512x24xf32>
    %14 = arith.mulf %12, %13 : vector<512x24xf32>
    %15 = arith.truncf %14 : vector<512x24xf32> to vector<512x24xbf16>
    %c0_9 = arith.constant 0 : index
    %c0_10 = arith.constant 0 : index
    %16 = vector.load %arg4[%c0_9, %c0_10] : memref<512x24xbf16, #tpu.memory_space<vmem>>, vector<512x24xbf16>
    tpu.vector_store %arg4[%c0_9, %c0_10], %15 {strides = array<i32>} : memref<512x24xbf16, #tpu.memory_space<vmem>>, vector<512x24xbf16>,
    return
  }
  func.func @transform_0(%arg0: i32) -> (i32, i32) {
    %c0_i32 = arith.constant 0 : i32
    %c0_i32_0 = arith.constant 0 : i32
    return %arg0, %c0_i32 : i32, i32
  }
  func.func @transform_1(%arg0: i32) -> (i32, i32) {
    %c0_i32 = arith.constant 0 : i32
    %c0_i32_0 = arith.constant 0 : i32
    %c0_i32_1 = arith.constant 0 : i32
    return %c0_i32, %c0_i32_0 : i32, i32
  }
  func.func @transform_2(%arg0: i32) -> (i32, i32) {
    %c0_i32 = arith.constant 0 : i32
    %c0_i32_0 = arith.constant 0 : i32
    %c0_i32_1 = arith.constant 0 : i32
    return %c0_i32, %c0_i32_0 : i32, i32
  }
  func.func @transform_3(%arg0: i32) -> (i32, i32) {
    %c0_i32 = arith.constant 0 : i32
    %c0_i32_0 = arith.constant 0 : i32
    return %arg0, %c0_i32 : i32, i32
  }
}

module attributes {stable_mosaic.version = 11 : i64} {
  func.func @_conv_gemm_hswish_kernel(%arg0: i32, %arg1: memref<128x216xbf16, #tpu.memory_space<vmem>>, %arg2: memref<216x40xbf16, #tpu.memory_space<vmem>>, %arg3: memref<1x40xf32, #tpu.memory_space<vmem>>, %arg4: memref<128x40xbf16, #tpu.memory_space<vmem>>) attributes {dimension_semantics = [#tpu.dimension_semantics<parallel>], iteration_bounds = array<i64: 1>, scalar_prefetch = 0 : i64, scratch_operands = 0 : i64, tpu.core_type = #tpu.core_type<tc>, window_params = [{transform_indices = @transform_0, window_bounds = array<i64: 128, 216>}, {pipeline_mode = #tpu.pipeline_mode<synchronous>, transform_indices = @transform_1, window_bounds = array<i64: 216, 40>}, {pipeline_mode = #tpu.pipeline_mode<synchronous>, transform_indices = @transform_2, window_bounds = array<i64: 1, 40>}, {transform_indices = @transform_3, window_bounds = array<i64: 128, 40>}]} {
    %c0 = arith.constant 0 : index
    %c0_0 = arith.constant 0 : index
    %0 = vector.load %arg1[%c0, %c0_0] : memref<128x216xbf16, #tpu.memory_space<vmem>>, vector<128x216xbf16>
    %c0_1 = arith.constant 0 : index
    %c0_2 = arith.constant 0 : index
    %1 = vector.load %arg2[%c0_1, %c0_2] : memref<216x40xbf16, #tpu.memory_space<vmem>>, vector<216x40xbf16>
    %cst = arith.constant dense<0.000000e+00> : vector<128x40xf32>
    %2 = tpu.matmul %0, %1, %cst {dimension_numbers = #tpu.dot_dimension_numbers<[1], [0], [0], [1], [0, 0, 1, 1], [], []>} : vector<128x216xbf16>, vector<216x40xbf16>, vector<128x40xf32> -> vector<128x40xf32>
    %c0_3 = arith.constant 0 : index
    %c0_4 = arith.constant 0 : index
    %3 = vector.load %arg3[%c0_3, %c0_4] : memref<1x40xf32, #tpu.memory_space<vmem>>, vector<1x40xf32>
    %4 = vector.broadcast %3 : vector<1x40xf32> to vector<128x40xf32>
    %5 = arith.addf %2, %4 : vector<128x40xf32>
    %cst_5 = arith.constant 3.000000e+00 : f32
    %6 = vector.broadcast %cst_5 : f32 to vector<128x40xf32>
    %7 = arith.addf %5, %6 : vector<128x40xf32>
    %cst_6 = arith.constant 0.000000e+00 : f32
    %cst_7 = arith.constant 6.000000e+00 : f32
    %8 = vector.broadcast %cst_6 : f32 to vector<128x40xf32>
    %9 = arith.maximumf %8, %7 : vector<128x40xf32>
    %10 = vector.broadcast %cst_7 : f32 to vector<128x40xf32>
    %11 = arith.minimumf %10, %9 : vector<128x40xf32>
    %12 = arith.mulf %5, %11 : vector<128x40xf32>
    %cst_8 = arith.constant 0.166666672 : f32
    %13 = vector.broadcast %cst_8 : f32 to vector<128x40xf32>
    %14 = arith.mulf %12, %13 : vector<128x40xf32>
    %15 = arith.truncf %14 : vector<128x40xf32> to vector<128x40xbf16>
    %c0_9 = arith.constant 0 : index
    %c0_10 = arith.constant 0 : index
    %16 = vector.load %arg4[%c0_9, %c0_10] : memref<128x40xbf16, #tpu.memory_space<vmem>>, vector<128x40xbf16>
    tpu.vector_store %arg4[%c0_9, %c0_10], %15 {strides = array<i32>} : memref<128x40xbf16, #tpu.memory_space<vmem>>, vector<128x40xbf16>,
    return
  }
  func.func @transform_0(%arg0: i32) -> (i32, i32) {
    %c0_i32 = arith.constant 0 : i32
    %c0_i32_0 = arith.constant 0 : i32
    return %arg0, %c0_i32 : i32, i32
  }
  func.func @transform_1(%arg0: i32) -> (i32, i32) {
    %c0_i32 = arith.constant 0 : i32
    %c0_i32_0 = arith.constant 0 : i32
    %c0_i32_1 = arith.constant 0 : i32
    return %c0_i32, %c0_i32_0 : i32, i32
  }
  func.func @transform_2(%arg0: i32) -> (i32, i32) {
    %c0_i32 = arith.constant 0 : i32
    %c0_i32_0 = arith.constant 0 : i32
    %c0_i32_1 = arith.constant 0 : i32
    return %c0_i32, %c0_i32_0 : i32, i32
  }
  func.func @transform_3(%arg0: i32) -> (i32, i32) {
    %c0_i32 = arith.constant 0 : i32
    %c0_i32_0 = arith.constant 0 : i32
    return %arg0, %c0_i32 : i32, i32
  }
}

</mosaic_0001>

<llo_original>
// kernel: basic_block_forward.3
$region0: #{basic_block_forward.3}
  #allocation0 [shape = 'u32[]', space=smem, size = 0x4, offset = 0x4, fixed_abs, tag = 'smem constant byte address 0x4 - core index']
  #allocation1 [shape = 'u32[144,128]{1,0:T(1,128)}', space=vmem, size = 0x12000, scoped, tag = 'internal scratch']
  %s0 = inlined_call_operand.vmem [shape: bf16[2048,27], index: 0, kind: input, shape index: {}]
  %s1 = inlined_call_operand.vmem [shape: bf16[27,16], index: 1, kind: input, shape index: {}]
  %s2 = inlined_call_operand.vmem [shape: f32[1,16], index: 2, kind: input, shape index: {}]
  %s3 = inlined_call_operand.vmem [shape: bf16[2048,16], index: 3, kind: output, shape index: {}]
  %s4 = sld [smem:[#allocation0]]
  $region22: #{basic_block_forward.3} parent=0
    _
  %s6 = ssub.s32 1, %s4
  %s7 = scalar_select 0, %s6, %s4
  // Predicated region
  $region2: #{basic_block_forward.3} parent=0 // pred_check
    _
  $region3: #{basic_block_forward.3} parent=0 // pred_check_branch
    %9 = sbr.rel (0) target = $region5
  $region4: #{basic_block_forward.3} parent=0 // pred_region
    _
  $region5: #{basic_block_forward.3} parent=0 // pred_fallthru
    _
  // Predicated region
  $region6: #{basic_block_forward.3} parent=0 // pred_check
    _
  $region7: #{basic_block_forward.3} parent=0 // pred_check_branch
    %11 = sbr.rel (0) target = $region9
  $region8: #{basic_block_forward.3} parent=0 // pred_region
    _
  $region9: #{basic_block_forward.3} parent=0 // pred_fallthru
    _
  // Predicated region
  $region10: #{basic_block_forward.3} parent=0 // pred_check
    _
  $region11: #{basic_block_forward.3} parent=0 // pred_check_branch
    %13 = sbr.rel (0) target = $region13
  $region12: #{basic_block_forward.3} parent=0 // pred_region
    _
  $region13: #{basic_block_forward.3} parent=0 // pred_fallthru
    _
  %v15 = vld [vmem:[%s0] sm:$0xf]
  %v16 = vld [vmem:[%s0 + $0x4] sm:$0xf]
  %v17 = vld [vmem:[%s0 + $0x8] sm:$0xf]
  %v18 = vld [vmem:[%s0 + $0xc] sm:$0xf]
  %v19 = vld [vmem:[%s0 + $0x10] sm:$0xf]
  %v20 = vld [vmem:[%s0 + $0x14] sm:$0xf]
  %v21 = vld [vmem:[%s0 + $0x18] sm:$0xf]
  %v22 = vld [vmem:[%s0 + $0x1c] sm:$0xf]
  %v23 = vld [vmem:[%s0 + $0x20] sm:$0xf]
  %v24 = vld [vmem:[%s0 + $0x24] sm:$0xf]
  %v25 = vld [vmem:[%s0 + $0x28] sm:$0xf]
  %v26 = vld [vmem:[%s0 + $0x2c] sm:$0xf]
  %v27 = vld [vmem:[%s0 + $0x30] sm:$0xf]
  %v28 = vld [vmem:[%s0 + $0x34] sm:$0xf]
  %v29 = vld [vmem:[%s0 + $0x38] sm:$0xf]
  %v30 = vld [vmem:[%s0 + $0x3c] sm:$0xf]
  %v31 = vld [vmem:[%s0 + $0x40] sm:$0xf]
  %v32 = vld [vmem:[%s0 + $0x44] sm:$0xf]
  %v33 = vld [vmem:[%s0 + $0x48] sm:$0xf]
  %v34 = vld [vmem:[%s0 + $0x4c] sm:$0xf]
  %v35 = vld [vmem:[%s0 + $0x50] sm:$0xf]
  %v36 = vld [vmem:[%s0 + $0x54] sm:$0xf]
  %v37 = vld [vmem:[%s0 + $0x58] sm:$0xf]
  %v38 = vld [vmem:[%s0 + $0x5c] sm:$0xf]
  %v39 = vld [vmem:[%s0 + $0x60] sm:$0xf]
  %v40 = vld [vmem:[%s0 + $0x64] sm:$0xf]
  %v41 = vld [vmem:[%s0 + $0x68] sm:$0xf]
  %v42 = vld [vmem:[%s0 + $0x6c] sm:$0xf]
  %v43 = vld [vmem:[%s0 + $0x70] sm:$0xf]
  %v44 = vld [vmem:[%s0 + $0x74] sm:$0xf]
  %v45 = vld [vmem:[%s0 + $0x78] sm:$0xf]
  %v46 = vld [vmem:[%s0 + $0x7c] sm:$0xf]
  %v47 = vld [vmem:[%s0 + $0x80] sm:$0xf]
  %v48 = vld [vmem:[%s0 + $0x84] sm:$0xf]
  %v49 = vld [vmem:[%s0 + $0x88] sm:$0xf]
  %v50 = vld [vmem:[%s0 + $0x8c] sm:$0xf]
  %v51 = vld [vmem:[%s0 + $0x90] sm:$0xf]
  %v52 = vld [vmem:[%s0 + $0x94] sm:$0xf]
  %v53 = vld [vmem:[%s0 + $0x98] sm:$0xf]
  %v54 = vld [vmem:[%s0 + $0x9c] sm:$0xf]
  %v55 = vld [vmem:[%s0 + $0xa0] sm:$0xf]
  %v56 = vld [vmem:[%s0 + $0xa4] sm:$0xf]
  %v57 = vld [vmem:[%s0 + $0xa8] sm:$0xf]
  %v58 = vld [vmem:[%s0 + $0xac] sm:$0xf]
  %v59 = vld [vmem:[%s0 + $0xb0] sm:$0xf]
  %v60 = vld [vmem:[%s0 + $0xb4] sm:$0xf]
  %v61 = vld [vmem:[%s0 + $0xb8] sm:$0xf]
  %v62 = vld [vmem:[%s0 + $0xbc] sm:$0xf]
  %v63 = vld [vmem:[%s0 + $0xc0] sm:$0xf]
  %v64 = vld [vmem:[%s0 + $0xc4] sm:$0xf]
  %v65 = vld [vmem:[%s0 + $0xc8] sm:$0xf]
  %v66 = vld [vmem:[%s0 + $0xcc] sm:$0xf]
  %v67 = vld [vmem:[%s0 + $0xd0] sm:$0xf]
  %v68 = vld [vmem:[%s0 + $0xd4] sm:$0xf]
  %v69 = vld [vmem:[%s0 + $0xd8] sm:$0xf]
  %v70 = vld [vmem:[%s0 + $0xdc] sm:$0xf]
  %v71 = vld [vmem:[%s0 + $0xe0] sm:$0xf]
  %v72 = vld [vmem:[%s0 + $0xe4] sm:$0xf]
  %v73 = vld [vmem:[%s0 + $0xe8] sm:$0xf]
  %v74 = vld [vmem:[%s0 + $0xec] sm:$0xf]
  %v75 = vld [vmem:[%s0 + $0xf0] sm:$0xf]
  %v76 = vld [vmem:[%s0 + $0xf4] sm:$0xf]
  %v77 = vld [vmem:[%s0 + $0xf8] sm:$0xf]
  %v78 = vld [vmem:[%s0 + $0xfc] sm:$0xf]
  %v79 = vld [vmem:[%s0 + $0x100] sm:$0xf]
  %v80 = vld [vmem:[%s0 + $0x104] sm:$0xf]
  %v81 = vld [vmem:[%s0 + $0x108] sm:$0xf]
  %v82 = vld [vmem:[%s0 + $0x10c] sm:$0xf]
  %v83 = vld [vmem:[%s0 + $0x110] sm:$0xf]
  %v84 = vld [vmem:[%s0 + $0x114] sm:$0xf]
  %v85 = vld [vmem:[%s0 + $0x118] sm:$0xf]
  %v86 = vld [vmem:[%s0 + $0x11c] sm:$0xf]
  %v87 = vld [vmem:[%s0 + $0x120] sm:$0xf]
  %v88 = vld [vmem:[%s0 + $0x124] sm:$0xf]
  %v89 = vld [vmem:[%s0 + $0x128] sm:$0xf]
  %v90 = vld [vmem:[%s0 + $0x12c] sm:$0xf]
  %v91 = vld [vmem:[%s0 + $0x130] sm:$0xf]
  %v92 = vld [vmem:[%s0 + $0x134] sm:$0xf]
  %v93 = vld [vmem:[%s0 + $0x138] sm:$0xf]
  %v94 = vld [vmem:[%s0 + $0x13c] sm:$0xf]
  %v95 = vld [vmem:[%s0 + $0x140] sm:$0xf]
  %v96 = vld [vmem:[%s0 + $0x144] sm:$0xf]
  %v97 = vld [vmem:[%s0 + $0x148] sm:$0xf]
  %v98 = vld [vmem:[%s0 + $0x14c] sm:$0xf]
  %v99 = vld [vmem:[%s0 + $0x150] sm:$0xf]
  %v100 = vld [vmem:[%s0 + $0x154] sm:$0xf]
  %v101 = vld [vmem:[%s0 + $0x158] sm:$0xf]
  %v102 = vld [vmem:[%s0 + $0x15c] sm:$0xf]
  %v103 = vld [vmem:[%s0 + $0x160] sm:$0xf]
  %v104 = vld [vmem:[%s0 + $0x164] sm:$0xf]
  %v105 = vld [vmem:[%s0 + $0x168] sm:$0xf]
  %v106 = vld [vmem:[%s0 + $0x16c] sm:$0xf]
  %v107 = vld [vmem:[%s0 + $0x170] sm:$0xf]
  %v108 = vld [vmem:[%s0 + $0x174] sm:$0xf]
  %v109 = vld [vmem:[%s0 + $0x178] sm:$0xf]
  %v110 = vld [vmem:[%s0 + $0x17c] sm:$0xf]
  %v111 = vld [vmem:[%s0 + $0x180] sm:$0xf]
  %v112 = vld [vmem:[%s0 + $0x184] sm:$0xf]
  %v113 = vld [vmem:[%s0 + $0x188] sm:$0xf]
  %v114 = vld [vmem:[%s0 + $0x18c] sm:$0xf]
  %v115 = vld [vmem:[%s0 + $0x190] sm:$0xf]
  %v116 = vld [vmem:[%s0 + $0x194] sm:$0xf]
  %v117 = vld [vmem:[%s0 + $0x198] sm:$0xf]
  %v118 = vld [vmem:[%s0 + $0x19c] sm:$0xf]
  %v119 = vld [vmem:[%s0 + $0x1a0] sm:$0xf]
  %v120 = vld [vmem:[%s0 + $0x1a4] sm:$0xf]
  %v121 = vld [vmem:[%s0 + $0x1a8] sm:$0xf]
  %v122 = vld [vmem:[%s0 + $0x1ac] sm:$0xf]
  %v123 = vld [vmem:[%s0 + $0x1b0] sm:$0xf]
  %v124 = vld [vmem:[%s0 + $0x1b4] sm:$0xf]
  %v125 = vld [vmem:[%s0 + $0x1b8] sm:$0xf]
  %v126 = vld [vmem:[%s0 + $0x1bc] sm:$0xf]
  %v127 = vld [vmem:[%s0 + $0x1c0] sm:$0xf]
  %v128 = vld [vmem:[%s0 + $0x1c4] sm:$0xf]
  %v129 = vld [vmem:[%s0 + $0x1c8] sm:$0xf]
  %v130 = vld [vmem:[%s0 + $0x1cc] sm:$0xf]
  %v131 = vld [vmem:[%s0 + $0x1d0] sm:$0xf]
  %v132 = vld [vmem:[%s0 + $0x1d4] sm:$0xf]
  %v133 = vld [vmem:[%s0 + $0x1d8] sm:$0xf]
  %v134 = vld [vmem:[%s0 + $0x1dc] sm:$0xf]
  %v135 = vld [vmem:[%s0 + $0x1e0] sm:$0xf]
  %v136 = vld [vmem:[%s0 + $0x1e4] sm:$0xf]
  %v137 = vld [vmem:[%s0 + $0x1e8] sm:$0xf]
  %v138 = vld [vmem:[%s0 + $0x1ec] sm:$0xf]
  %v139 = vld [vmem:[%s0 + $0x1f0] sm:$0xf]
  %v140 = vld [vmem:[%s0 + $0x1f4] sm:$0xf]
  %v141 = vld [vmem:[%s0 + $0x1f8] sm:$0xf]
  %v142 = vld [vmem:[%s0 + $0x1fc] sm:$0xf]
  %v143 = vld [vmem:[%s0 + $0x200] sm:$0xf]
  %v144 = vld [vmem:[%s0 + $0x204] sm:$0xf]
  %v145 = vld [vmem:[%s0 + $0x208] sm:$0xf]
  %v146 = vld [vmem:[%s0 + $0x20c] sm:$0xf]
  %v147 = vld [vmem:[%s0 + $0x210] sm:$0xf]
  %v148 = vld [vmem:[%s0 + $0x214] sm:$0xf]
  %v149 = vld [vmem:[%s0 + $0x218] sm:$0xf]
  %v150 = vld [vmem:[%s0 + $0x21c] sm:$0xf]
  %v151 = vld [vmem:[%s0 + $0x220] sm:$0xf]
  %v152 = vld [vmem:[%s0 + $0x224] sm:$0xf]
  %v153 = vld [vmem:[%s0 + $0x228] sm:$0xf]
  %v154 = vld [vmem:[%s0 + $0x22c] sm:$0xf]
  %v155 = vld [vmem:[%s0 + $0x230] sm:$0xf]
  %v156 = vld [vmem:[%s0 + $0x234] sm:$0xf]
  %v157 = vld [vmem:[%s0 + $0x238] sm:$0xf]
  %v158 = vld [vmem:[%s0 + $0x23c] sm:$0xf]
  %v159 = vld [vmem:[%s0 + $0x240] sm:$0xf]
  %v160 = vld [vmem:[%s0 + $0x244] sm:$0xf]
  %v161 = vld [vmem:[%s0 + $0x248] sm:$0xf]
  %v162 = vld [vmem:[%s0 + $0x24c] sm:$0xf]
  %v163 = vld [vmem:[%s0 + $0x250] sm:$0xf]
  %v164 = vld [vmem:[%s0 + $0x254] sm:$0xf]
  %v165 = vld [vmem:[%s0 + $0x258] sm:$0xf]
  %v166 = vld [vmem:[%s0 + $0x25c] sm:$0xf]
  %v167 = vld [vmem:[%s0 + $0x260] sm:$0xf]
  %v168 = vld [vmem:[%s0 + $0x264] sm:$0xf]
  %v169 = vld [vmem:[%s0 + $0x268] sm:$0xf]
  %v170 = vld [vmem:[%s0 + $0x26c] sm:$0xf]
  %v171 = vld [vmem:[%s0 + $0x270] sm:$0xf]
  %v172 = vld [vmem:[%s0 + $0x274] sm:$0xf]
  %v173 = vld [vmem:[%s0 + $0x278] sm:$0xf]
  %v174 = vld [vmem:[%s0 + $0x27c] sm:$0xf]
  %v175 = vld [vmem:[%s0 + $0x280] sm:$0xf]
  %v176 = vld [vmem:[%s0 + $0x284] sm:$0xf]
  %v177 = vld [vmem:[%s0 + $0x288] sm:$0xf]
  %v178 = vld [vmem:[%s0 + $0x28c] sm:$0xf]
  %v179 = vld [vmem:[%s0 + $0x290] sm:$0xf]
  %v180 = vld [vmem:[%s0 + $0x294] sm:$0xf]
  %v181 = vld [vmem:[%s0 + $0x298] sm:$0xf]
  %v182 = vld [vmem:[%s0 + $0x29c] sm:$0xf]
  %v183 = vld [vmem:[%s0 + $0x2a0] sm:$0xf]
  %v184 = vld [vmem:[%s0 + $0x2a4] sm:$0xf]
  %v185 = vld [vmem:[%s0 + $0x2a8] sm:$0xf]
  %v186 = vld [vmem:[%s0 + $0x2ac] sm:$0xf]
  %v187 = vld [vmem:[%s0 + $0x2b0] sm:$0xf]
  %v188 = vld [vmem:[%s0 + $0x2b4] sm:$0xf]
  %v189 = vld [vmem:[%s0 + $0x2b8] sm:$0xf]
  %v190 = vld [vmem:[%s0 + $0x2bc] sm:$0xf]
  %v191 = vld [vmem:[%s0 + $0x2c0] sm:$0xf]
  %v192 = vld [vmem:[%s0 + $0x2c4] sm:$0xf]
  %v193 = vld [vmem:[%s0 + $0x2c8] sm:$0xf]
  %v194 = vld [vmem:[%s0 + $0x2cc] sm:$0xf]
  %v195 = vld [vmem:[%s0 + $0x2d0] sm:$0xf]
  %v196 = vld [vmem:[%s0 + $0x2d4] sm:$0xf]
  %v197 = vld [vmem:[%s0 + $0x2d8] sm:$0xf]
  %v198 = vld [vmem:[%s0 + $0x2dc] sm:$0xf]
  %v199 = vld [vmem:[%s0 + $0x2e0] sm:$0xf]
  %v200 = vld [vmem:[%s0 + $0x2e4] sm:$0xf]
  %v201 = vld [vmem:[%s0 + $0x2e8] sm:$0xf]
  %v202 = vld [vmem:[%s0 + $0x2ec] sm:$0xf]
  %v203 = vld [vmem:[%s0 + $0x2f0] sm:$0xf]
  %v204 = vld [vmem:[%s0 + $0x2f4] sm:$0xf]
  %v205 = vld [vmem:[%s0 + $0x2f8] sm:$0xf]
  %v206 = vld [vmem:[%s0 + $0x2fc] sm:$0xf]
  %v207 = vld [vmem:[%s0 + $0x300] sm:$0xf]
  %v208 = vld [vmem:[%s0 + $0x304] sm:$0xf]
  %v209 = vld [vmem:[%s0 + $0x308] sm:$0xf]
  %v210 = vld [vmem:[%s0 + $0x30c] sm:$0xf]
  %v211 = vld [vmem:[%s0 + $0x310] sm:$0xf]
  %v212 = vld [vmem:[%s0 + $0x314] sm:$0xf]
  %v213 = vld [vmem:[%s0 + $0x318] sm:$0xf]
  %v214 = vld [vmem:[%s0 + $0x31c] sm:$0xf]
  %v215 = vld [vmem:[%s0 + $0x320] sm:$0xf]
  %v216 = vld [vmem:[%s0 + $0x324] sm:$0xf]
  %v217 = vld [vmem:[%s0 + $0x328] sm:$0xf]
  %v218 = vld [vmem:[%s0 + $0x32c] sm:$0xf]
  %v219 = vld [vmem:[%s0 + $0x330] sm:$0xf]
  %v220 = vld [vmem:[%s0 + $0x334] sm:$0xf]
  %v221 = vld [vmem:[%s0 + $0x338] sm:$0xf]
  %v222 = vld [vmem:[%s0 + $0x33c] sm:$0xf]
  %v223 = vld [vmem:[%s0 + $0x340] sm:$0xf]
  %v224 = vld [vmem:[%s0 + $0x344] sm:$0xf]
  %v225 = vld [vmem:[%s0 + $0x348] sm:$0xf]
  %v226 = vld [vmem:[%s0 + $0x34c] sm:$0xf]
  %v227 = vld [vmem:[%s0 + $0x350] sm:$0xf]
  %v228 = vld [vmem:[%s0 + $0x354] sm:$0xf]
  %v229 = vld [vmem:[%s0 + $0x358] sm:$0xf]
  %v230 = vld [vmem:[%s0 + $0x35c] sm:$0xf]
  %v231 = vld [vmem:[%s0 + $0x360] sm:$0xf]
  %v232 = vld [vmem:[%s0 + $0x364] sm:$0xf]
  %v233 = vld [vmem:[%s0 + $0x368] sm:$0xf]
  %v234 = vld [vmem:[%s0 + $0x36c] sm:$0xf]
  %v235 = vld [vmem:[%s0 + $0x370] sm:$0xf]
  %v236 = vld [vmem:[%s0 + $0x374] sm:$0xf]
  %v237 = vld [vmem:[%s0 + $0x378] sm:$0xf]
  %v238 = vld [vmem:[%s0 + $0x37c] sm:$0xf]
  %v239 = vld [vmem:[%s0 + $0x380] sm:$0xf]
  %v240 = vld [vmem:[%s0 + $0x384] sm:$0xf]
  %v241 = vld [vmem:[%s0 + $0x388] sm:$0xf]
  %v242 = vld [vmem:[%s0 + $0x38c] sm:$0xf]
  %v243 = vld [vmem:[%s0 + $0x390] sm:$0xf]
  %v244 = vld [vmem:[%s0 + $0x394] sm:$0xf]
  %v245 = vld [vmem:[%s0 + $0x398] sm:$0xf]
  %v246 = vld [vmem:[%s0 + $0x39c] sm:$0xf]
  %v247 = vld [vmem:[%s0 + $0x3a0] sm:$0xf]
  %v248 = vld [vmem:[%s0 + $0x3a4] sm:$0xf]
  %v249 = vld [vmem:[%s0 + $0x3a8] sm:$0xf]
  %v250 = vld [vmem:[%s0 + $0x3ac] sm:$0xf]
  %v251 = vld [vmem:[%s0 + $0x3b0] sm:$0xf]
  %v252 = vld [vmem:[%s0 + $0x3b4] sm:$0xf]
  %v253 = vld [vmem:[%s0 + $0x3b8] sm:$0xf]
  %v254 = vld [vmem:[%s0 + $0x3bc] sm:$0xf]
  %v255 = vld [vmem:[%s0 + $0x3c0] sm:$0xf]
  %v256 = vld [vmem:[%s0 + $0x3c4] sm:$0xf]
  %v257 = vld [vmem:[%s0 + $0x3c8] sm:$0xf]
  %v258 = vld [vmem:[%s0 + $0x3cc] sm:$0xf]
  %v259 = vld [vmem:[%s0 + $0x3d0] sm:$0xf]
  %v260 = vld [vmem:[%s0 + $0x3d4] sm:$0xf]
  %v261 = vld [vmem:[%s0 + $0x3d8] sm:$0xf]
  %v262 = vld [vmem:[%s0 + $0x3dc] sm:$0xf]
  %v263 = vld [vmem:[%s0 + $0x3e0] sm:$0xf]
  %v264 = vld [vmem:[%s0 + $0x3e4] sm:$0xf]
  %v265 = vld [vmem:[%s0 + $0x3e8] sm:$0xf]
  %v266 = vld [vmem:[%s0 + $0x3ec] sm:$0xf]
  %v267 = vld [vmem:[%s0 + $0x3f0] sm:$0xf]
  %v268 = vld [vmem:[%s0 + $0x3f4] sm:$0xf]
  %v269 = vld [vmem:[%s0 + $0x3f8] sm:$0xf]
  %v270 = vld [vmem:[%s0 + $0x3fc] sm:$0xf]
  %v271 = vld [vmem:[%s1] sm:$0xf]
  %v272 = vld [vmem:[%s1 + $0x4] sm:$0xf]
  %v273 = vld [vmem:[%s1 + $0x8] sm:$0xf]
  %v274 = vld [vmem:[%s1 + $0xc] sm:$0x3]
  %v275 = vld [vmem:[%s2] sm:$0x1]
  %v277 = vlaneseq
  %v278 = vshrl.u32 %v277, 7
  %v279 = vsub.s32 0, %v278
  %v280 = vrot.slane %v275, %v279
  %v538 = vunpack.c.l.b16 %v15
  %v539 = vunpack.c.l.b16 %v16
  %v540 = vunpack.c.l.b16 %v17
  %v541 = vunpack.c.l.b16 %v18
  %v542 = vunpack.c.l.b16 %v19
  %v543 = vunpack.c.l.b16 %v20
  %v544 = vunpack.c.l.b16 %v21
  %v545 = vunpack.c.l.b16 %v22
  %v546 = vunpack.c.l.b16 %v23
  %v547 = vunpack.c.l.b16 %v24
  %v548 = vunpack.c.l.b16 %v25
  %v549 = vunpack.c.l.b16 %v26
  %v550 = vunpack.c.l.b16 %v27
  %v551 = vunpack.c.l.b16 %v28
  %v552 = vunpack.c.l.b16 %v29
  %v553 = vunpack.c.l.b16 %v30
  %v554 = vunpack.c.l.b16 %v31
  %v555 = vunpack.c.l.b16 %v32
  %v556 = vunpack.c.l.b16 %v33
  %v557 = vunpack.c.l.b16 %v34
  %v558 = vunpack.c.l.b16 %v35
  %v559 = vunpack.c.l.b16 %v36
  %v560 = vunpack.c.l.b16 %v37
  %v561 = vunpack.c.l.b16 %v38
  %v562 = vunpack.c.l.b16 %v39
  %v563 = vunpack.c.l.b16 %v40
  %v564 = vunpack.c.l.b16 %v41
  %v565 = vunpack.c.l.b16 %v42
  %v566 = vunpack.c.l.b16 %v43
  %v567 = vunpack.c.l.b16 %v44
  %v568 = vunpack.c.l.b16 %v45
  %v569 = vunpack.c.l.b16 %v46
  %v570 = vunpack.c.l.b16 %v47
  %v571 = vunpack.c.l.b16 %v48
  %v572 = vunpack.c.l.b16 %v49
  %v573 = vunpack.c.l.b16 %v50
  %v574 = vunpack.c.l.b16 %v51
  %v575 = vunpack.c.l.b16 %v52
  %v576 = vunpack.c.l.b16 %v53
  %v577 = vunpack.c.l.b16 %v54
  %v578 = vunpack.c.l.b16 %v55
  %v579 = vunpack.c.l.b16 %v56
  %v580 = vunpack.c.l.b16 %v57
  %v581 = vunpack.c.l.b16 %v58
  %v582 = vunpack.c.l.b16 %v59
  %v583 = vunpack.c.l.b16 %v60
  %v584 = vunpack.c.l.b16 %v61
  %v585 = vunpack.c.l.b16 %v62
  %v586 = vunpack.c.l.b16 %v63
  %v587 = vunpack.c.l.b16 %v64
  %v588 = vunpack.c.l.b16 %v65
  %v589 = vunpack.c.l.b16 %v66
  %v590 = vunpack.c.l.b16 %v67
  %v591 = vunpack.c.l.b16 %v68
  %v592 = vunpack.c.l.b16 %v69
  %v593 = vunpack.c.l.b16 %v70
  %v594 = vunpack.c.l.b16 %v71
  %v595 = vunpack.c.l.b16 %v72
  %v596 = vunpack.c.l.b16 %v73
  %v597 = vunpack.c.l.b16 %v74
  %v598 = vunpack.c.l.b16 %v75
  %v599 = vunpack.c.l.b16 %v76
  %v600 = vunpack.c.l.b16 %v77
  %v601 = vunpack.c.l.b16 %v78
  %v602 = vunpack.c.l.b16 %v79
  %v603 = vunpack.c.l.b16 %v80
  %v604 = vunpack.c.l.b16 %v81
  %v605 = vunpack.c.l.b16 %v82
  %v606 = vunpack.c.l.b16 %v83
  %v607 = vunpack.c.l.b16 %v84
  %v608 = vunpack.c.l.b16 %v85
  %v609 = vunpack.c.l.b16 %v86
  %v610 = vunpack.c.l.b16 %v87
  %v611 = vunpack.c.l.b16 %v88
  %v612 = vunpack.c.l.b16 %v89
  %v613 = vunpack.c.l.b16 %v90
  %v614 = vunpack.c.l.b16 %v91
  %v615 = vunpack.c.l.b16 %v92
  %v616 = vunpack.c.l.b16 %v93
  %v617 = vunpack.c.l.b16 %v94
  %v618 = vunpack.c.l.b16 %v95
  %v619 = vunpack.c.l.b16 %v96
  %v620 = vunpack.c.l.b16 %v97
  %v621 = vunpack.c.l.b16 %v98
  %v622 = vunpack.c.l.b16 %v99
  %v623 = vunpack.c.l.b16 %v100
  %v624 = vunpack.c.l.b16 %v101
  %v625 = vunpack.c.l.b16 %v102
  %v626 = vunpack.c.l.b16 %v103
  %v627 = vunpack.c.l.b16 %v104
  %v628 = vunpack.c.l.b16 %v105
  %v629 = vunpack.c.l.b16 %v106
  %v630 = vunpack.c.l.b16 %v107
  %v631 = vunpack.c.l.b16 %v108
  %v632 = vunpack.c.l.b16 %v109
  %v633 = vunpack.c.l.b16 %v110
  %v634 = vunpack.c.l.b16 %v111
  %v635 = vunpack.c.l.b16 %v112
  %v636 = vunpack.c.l.b16 %v113
  %v637 = vunpack.c.l.b16 %v114
  %v638 = vunpack.c.l.b16 %v115
  %v639 = vunpack.c.l.b16 %v116
  %v640 = vunpack.c.l.b16 %v117
  %v641 = vunpack.c.l.b16 %v118
  %v642 = vunpack.c.l.b16 %v119
  %v643 = vunpack.c.l.b16 %v120
  %v644 = vunpack.c.l.b16 %v121
  %v645 = vunpack.c.l.b16 %v122
  %v646 = vunpack.c.l.b16 %v123
  %v647 = vunpack.c.l.b16 %v124
  %v648 = vunpack.c.l.b16 %v125
  %v649 = vunpack.c.l.b16 %v126
  %v650 = vunpack.c.l.b16 %v127
  %v651 = vunpack.c.l.b16 %v128
  %v652 = vunpack.c.l.b16 %v129
  %v653 = vunpack.c.l.b16 %v130
  %v654 = vunpack.c.l.b16 %v131
  %v655 = vunpack.c.l.b16 %v132
  %v656 = vunpack.c.l.b16 %v133
  %v657 = vunpack.c.l.b16 %v134
  %v658 = vunpack.c.l.b16 %v135
  %v659 = vunpack.c.l.b16 %v136
  %v660 = vunpack.c.l.b16 %v137
  %v661 = vunpack.c.l.b16 %v138
  %v662 = vunpack.c.l.b16 %v139
  %v663 = vunpack.c.l.b16 %v140
  %v664 = vunpack.c.l.b16 %v141
  %v665 = vunpack.c.l.b16 %v142
  %v666 = vunpack.c.l.b16 %v143
  %v667 = vunpack.c.l.b16 %v144
  %v668 = vunpack.c.l.b16 %v145
  %v669 = vunpack.c.l.b16 %v146
  %v670 = vunpack.c.l.b16 %v147
  %v671 = vunpack.c.l.b16 %v148
  %v672 = vunpack.c.l.b16 %v149
  %v673 = vunpack.c.l.b16 %v150
  %v674 = vunpack.c.l.b16 %v151
  %v675 = vunpack.c.l.b16 %v152
  %v676 = vunpack.c.l.b16 %v153
  %v677 = vunpack.c.l.b16 %v154
  %v678 = vunpack.c.l.b16 %v155
  %v679 = vunpack.c.l.b16 %v156
  %v680 = vunpack.c.l.b16 %v157
  %v681 = vunpack.c.l.b16 %v158
  %v682 = vunpack.c.l.b16 %v159
  %v683 = vunpack.c.l.b16 %v160
  %v684 = vunpack.c.l.b16 %v161
  %v685 = vunpack.c.l.b16 %v162
  %v686 = vunpack.c.l.b16 %v163
  %v687 = vunpack.c.l.b16 %v164
  %v688 = vunpack.c.l.b16 %v165
  %v689 = vunpack.c.l.b16 %v166
  %v690 = vunpack.c.l.b16 %v167
  %v691 = vunpack.c.l.b16 %v168
  %v692 = vunpack.c.l.b16 %v169
  %v693 = vunpack.c.l.b16 %v170
  %v694 = vunpack.c.l.b16 %v171
  %v695 = vunpack.c.l.b16 %v172
  %v696 = vunpack.c.l.b16 %v173
  %v697 = vunpack.c.l.b16 %v174
  %v698 = vunpack.c.l.b16 %v175
  %v699 = vunpack.c.l.b16 %v176
  %v700 = vunpack.c.l.b16 %v177
  %v701 = vunpack.c.l.b16 %v178
  %v702 = vunpack.c.l.b16 %v179
  %v703 = vunpack.c.l.b16 %v180
  %v704 = vunpack.c.l.b16 %v181
  %v705 = vunpack.c.l.b16 %v182
  %v706 = vunpack.c.l.b16 %v183
  %v707 = vunpack.c.l.b16 %v184
  %v708 = vunpack.c.l.b16 %v185
  %v709 = vunpack.c.l.b16 %v186
  %v710 = vunpack.c.l.b16 %v187
  %v711 = vunpack.c.l.b16 %v188
  %v712 = vunpack.c.l.b16 %v189
  %v713 = vunpack.c.l.b16 %v190
  %v714 = vunpack.c.l.b16 %v191
  %v715 = vunpack.c.l.b16 %v192
  %v716 = vunpack.c.l.b16 %v193
  %v717 = vunpack.c.l.b16 %v194
  %v718 = vunpack.c.l.b16 %v195
  %v719 = vunpack.c.l.b16 %v196
  %v720 = vunpack.c.l.b16 %v197
  %v721 = vunpack.c.l.b16 %v198
  %v722 = vunpack.c.l.b16 %v199
  %v723 = vunpack.c.l.b16 %v200
  %v724 = vunpack.c.l.b16 %v201
  %v725 = vunpack.c.l.b16 %v202
  %v726 = vunpack.c.l.b16 %v203
  %v727 = vunpack.c.l.b16 %v204
  %v728 = vunpack.c.l.b16 %v205
  %v729 = vunpack.c.l.b16 %v206
  %v730 = vunpack.c.l.b16 %v207
  %v731 = vunpack.c.l.b16 %v208
  %v732 = vunpack.c.l.b16 %v209
  %v733 = vunpack.c.l.b16 %v210
  %v734 = vunpack.c.l.b16 %v211
  %v735 = vunpack.c.l.b16 %v212
  %v736 = vunpack.c.l.b16 %v213
  %v737 = vunpack.c.l.b16 %v214
  %v738 = vunpack.c.l.b16 %v215
  %v739 = vunpack.c.l.b16 %v216
  %v740 = vunpack.c.l.b16 %v217
  %v741 = vunpack.c.l.b16 %v218
  %v742 = vunpack.c.l.b16 %v219
  %v743 = vunpack.c.l.b16 %v220
  %v744 = vunpack.c.l.b16 %v221
  %v745 = vunpack.c.l.b16 %v222
  %v746 = vunpack.c.l.b16 %v223
  %v747 = vunpack.c.l.b16 %v224
  %v748 = vunpack.c.l.b16 %v225
  %v749 = vunpack.c.l.b16 %v226
  %v750 = vunpack.c.l.b16 %v227
  %v751 = vunpack.c.l.b16 %v228
  %v752 = vunpack.c.l.b16 %v229
  %v753 = vunpack.c.l.b16 %v230
  %v754 = vunpack.c.l.b16 %v231
  %v755 = vunpack.c.l.b16 %v232
  %v756 = vunpack.c.l.b16 %v233
  %v757 = vunpack.c.l.b16 %v234
  %v758 = vunpack.c.l.b16 %v235
  %v759 = vunpack.c.l.b16 %v236
  %v760 = vunpack.c.l.b16 %v237
  %v761 = vunpack.c.l.b16 %v238
  %v762 = vunpack.c.l.b16 %v239
  %v763 = vunpack.c.l.b16 %v240
  %v764 = vunpack.c.l.b16 %v241
  %v765 = vunpack.c.l.b16 %v242
  %v766 = vunpack.c.l.b16 %v243
  %v767 = vunpack.c.l.b16 %v244
  %v768 = vunpack.c.l.b16 %v245
  %v769 = vunpack.c.l.b16 %v246
  %v770 = vunpack.c.l.b16 %v247
  %v771 = vunpack.c.l.b16 %v248
  %v772 = vunpack.c.l.b16 %v249
  %v773 = vunpack.c.l.b16 %v250
  %v774 = vunpack.c.l.b16 %v251
  %v775 = vunpack.c.l.b16 %v252
  %v776 = vunpack.c.l.b16 %v253
  %v777 = vunpack.c.l.b16 %v254
  %v778 = vunpack.c.l.b16 %v255
  %v779 = vunpack.c.l.b16 %v256
  %v780 = vunpack.c.l.b16 %v257
  %v781 = vunpack.c.l.b16 %v258
  %v782 = vunpack.c.l.b16 %v259
  %v783 = vunpack.c.l.b16 %v260
  %v784 = vunpack.c.l.b16 %v261
  %v785 = vunpack.c.l.b16 %v262
  %v786 = vunpack.c.l.b16 %v263
  %v787 = vunpack.c.l.b16 %v264
  %v788 = vunpack.c.l.b16 %v265
  %v789 = vunpack.c.l.b16 %v266
  %v790 = vunpack.c.l.b16 %v267
  %v791 = vunpack.c.l.b16 %v268
  %v792 = vunpack.c.l.b16 %v269
  %v793 = vunpack.c.l.b16 %v270
  %v794 = vpack.c.b16 %v539, %v538
  %v795 = vpack.c.b16 %v541, %v540
  %v796 = vpack.c.b16 %v543, %v542
  %v797 = vpack.c.b16 %v545, %v544
  %v798 = vpack.c.b16 %v547, %v546
  %v799 = vpack.c.b16 %v549, %v548
  %v800 = vpack.c.b16 %v551, %v550
  %v801 = vpack.c.b16 %v553, %v552
  %v802 = vpack.c.b16 %v555, %v554
  %v803 = vpack.c.b16 %v557, %v556
  %v804 = vpack.c.b16 %v559, %v558
  %v805 = vpack.c.b16 %v561, %v560
  %v806 = vpack.c.b16 %v563, %v562
  %v807 = vpack.c.b16 %v565, %v564
  %v808 = vpack.c.b16 %v567, %v566
  %v809 = vpack.c.b16 %v569, %v568
  %v810 = vpack.c.b16 %v571, %v570
  %v811 = vpack.c.b16 %v573, %v572
  %v812 = vpack.c.b16 %v575, %v574
  %v813 = vpack.c.b16 %v577, %v576
  %v814 = vpack.c.b16 %v579, %v578
  %v815 = vpack.c.b16 %v581, %v580
  %v816 = vpack.c.b16 %v583, %v582
  %v817 = vpack.c.b16 %v585, %v584
  %v818 = vpack.c.b16 %v587, %v586
  %v819 = vpack.c.b16 %v589, %v588
  %v820 = vpack.c.b16 %v591, %v590
  %v821 = vpack.c.b16 %v593, %v592
  %v822 = vpack.c.b16 %v595, %v594
  %v823 = vpack.c.b16 %v597, %v596
  %v824 = vpack.c.b16 %v599, %v598
  %v825 = vpack.c.b16 %v601, %v600
  %v826 = vpack.c.b16 %v603, %v602
  %v827 = vpack.c.b16 %v605, %v604
  %v828 = vpack.c.b16 %v607, %v606
  %v829 = vpack.c.b16 %v609, %v608
  %v830 = vpack.c.b16 %v611, %v610
  %v831 = vpack.c.b16 %v613, %v612
  %v832 = vpack.c.b16 %v615, %v614
  %v833 = vpack.c.b16 %v617, %v616
  %v834 = vpack.c.b16 %v619, %v618
  %v835 = vpack.c.b16 %v621, %v620
  %v836 = vpack.c.b16 %v623, %v622
  %v837 = vpack.c.b16 %v625, %v624
  %v838 = vpack.c.b16 %v627, %v626
  %v839 = vpack.c.b16 %v629, %v628
  %v840 = vpack.c.b16 %v631, %v630
  %v841 = vpack.c.b16 %v633, %v632
  %v842 = vpack.c.b16 %v635, %v634
  %v843 = vpack.c.b16 %v637, %v636
  %v844 = vpack.c.b16 %v639, %v638
  %v845 = vpack.c.b16 %v641, %v640
  %v846 = vpack.c.b16 %v643, %v642
  %v847 = vpack.c.b16 %v645, %v644
  %v848 = vpack.c.b16 %v647, %v646
  %v849 = vpack.c.b16 %v649, %v648
  %v850 = vpack.c.b16 %v651, %v650
  %v851 = vpack.c.b16 %v653, %v652
  %v852 = vpack.c.b16 %v655, %v654
  %v853 = vpack.c.b16 %v657, %v656
  %v854 = vpack.c.b16 %v659, %v658
  %v855 = vpack.c.b16 %v661, %v660
  %v856 = vpack.c.b16 %v663, %v662
  %v857 = vpack.c.b16 %v665, %v664
  %v858 = vpack.c.b16 %v667, %v666
  %v859 = vpack.c.b16 %v669, %v668
  %v860 = vpack.c.b16 %v671, %v670
  %v861 = vpack.c.b16 %v673, %v672
  %v862 = vpack.c.b16 %v675, %v674
  %v863 = vpack.c.b16 %v677, %v676
  %v864 = vpack.c.b16 %v679, %v678
  %v865 = vpack.c.b16 %v681, %v680
  %v866 = vpack.c.b16 %v683, %v682
  %v867 = vpack.c.b16 %v685, %v684
  %v868 = vpack.c.b16 %v687, %v686
  %v869 = vpack.c.b16 %v689, %v688
  %v870 = vpack.c.b16 %v691, %v690
  %v871 = vpack.c.b16 %v693, %v692
  %v872 = vpack.c.b16 %v695, %v694
  %v873 = vpack.c.b16 %v697, %v696
  %v874 = vpack.c.b16 %v699, %v698
  %v875 = vpack.c.b16 %v701, %v700
  %v876 = vpack.c.b16 %v703, %v702
  %v877 = vpack.c.b16 %v705, %v704
  %v878 = vpack.c.b16 %v707, %v706
  %v879 = vpack.c.b16 %v709, %v708
  %v880 = vpack.c.b16 %v711, %v710
  %v881 = vpack.c.b16 %v713, %v712
  %v882 = vpack.c.b16 %v715, %v714
  %v883 = vpack.c.b16 %v717, %v716
  %v884 = vpack.c.b16 %v719, %v718
  %v885 = vpack.c.b16 %v721, %v720
  %v886 = vpack.c.b16 %v723, %v722
  %v887 = vpack.c.b16 %v725, %v724
  %v888 = vpack.c.b16 %v727, %v726
  %v889 = vpack.c.b16 %v729, %v728
  %v890 = vpack.c.b16 %v731, %v730
  %v891 = vpack.c.b16 %v733, %v732
  %v892 = vpack.c.b16 %v735, %v734
  %v893 = vpack.c.b16 %v737, %v736
  %v894 = vpack.c.b16 %v739, %v738
  %v895 = vpack.c.b16 %v741, %v740
  %v896 = vpack.c.b16 %v743, %v742
  %v897 = vpack.c.b16 %v745, %v744
  %v898 = vpack.c.b16 %v747, %v746
  %v899 = vpack.c.b16 %v749, %v748
  %v900 = vpack.c.b16 %v751, %v750
  %v901 = vpack.c.b16 %v753, %v752
  %v902 = vpack.c.b16 %v755, %v754
  %v903 = vpack.c.b16 %v757, %v756
  %v904 = vpack.c.b16 %v759, %v758
  %v905 = vpack.c.b16 %v761, %v760
  %v906 = vpack.c.b16 %v763, %v762
  %v907 = vpack.c.b16 %v765, %v764
  %v908 = vpack.c.b16 %v767, %v766
  %v909 = vpack.c.b16 %v769, %v768
  %v910 = vpack.c.b16 %v771, %v770
  %v911 = vpack.c.b16 %v773, %v772
  %v912 = vpack.c.b16 %v775, %v774
  %v913 = vpack.c.b16 %v777, %v776
  %v914 = vpack.c.b16 %v779, %v778
  %v915 = vpack.c.b16 %v781, %v780
  %v916 = vpack.c.b16 %v783, %v782
  %v917 = vpack.c.b16 %v785, %v784
  %v918 = vpack.c.b16 %v787, %v786
  %v919 = vpack.c.b16 %v789, %v788
  %v920 = vpack.c.b16 %v791, %v790
  %v921 = vpack.c.b16 %v793, %v792
  %v926 = vunpack.c.l.b16 %v271
  %v927 = vunpack.c.l.b16 %v272
  %v928 = vunpack.c.l.b16 %v273
  %v929 = vunpack.c.l.b16 %v274
  %v930 = vpack.c.b16 %v927, %v926
  %v931 = vpack.c.b16 %v929, %v928
  %vm933 = vcmask 220160
  %v935 = vsel %vm933, %v794, 0
  %v938 = vsel %vm933, %v795, 0
  %v941 = vsel %vm933, %v796, 0
  %v944 = vsel %vm933, %v797, 0
  %v947 = vsel %vm933, %v798, 0
  %v950 = vsel %vm933, %v799, 0
  %v953 = vsel %vm933, %v800, 0
  %v956 = vsel %vm933, %v801, 0
  %v959 = vsel %vm933, %v802, 0
  %v962 = vsel %vm933, %v803, 0
  %v965 = vsel %vm933, %v804, 0
  %v968 = vsel %vm933, %v805, 0
  %v971 = vsel %vm933, %v806, 0
  %v974 = vsel %vm933, %v807, 0
  %v977 = vsel %vm933, %v808, 0
  %v980 = vsel %vm933, %v809, 0
  %v983 = vsel %vm933, %v810, 0
  %v986 = vsel %vm933, %v811, 0
  %v989 = vsel %vm933, %v812, 0
  %v992 = vsel %vm933, %v813, 0
  %v995 = vsel %vm933, %v814, 0
  %v998 = vsel %vm933, %v815, 0
  %v1001 = vsel %vm933, %v816, 0
  %v1004 = vsel %vm933, %v817, 0
  %v1007 = vsel %vm933, %v818, 0
  %v1010 = vsel %vm933, %v819, 0
  %v1013 = vsel %vm933, %v820, 0
  %v1016 = vsel %vm933, %v821, 0
  %v1019 = vsel %vm933, %v822, 0
  %v1022 = vsel %vm933, %v823, 0
  %v1025 = vsel %vm933, %v824, 0
  %v1028 = vsel %vm933, %v825, 0
  %v1031 = vsel %vm933, %v826, 0
  %v1034 = vsel %vm933, %v827, 0
  %v1037 = vsel %vm933, %v828, 0
  %v1040 = vsel %vm933, %v829, 0
  %v1043 = vsel %vm933, %v830, 0
  %v1046 = vsel %vm933, %v831, 0
  %v1049 = vsel %vm933, %v832, 0
  %v1052 = vsel %vm933, %v833, 0
  %v1055 = vsel %vm933, %v834, 0
  %v1058 = vsel %vm933, %v835, 0
  %v1061 = vsel %vm933, %v836, 0
  %v1064 = vsel %vm933, %v837, 0
  %v1067 = vsel %vm933, %v838, 0
  %v1070 = vsel %vm933, %v839, 0
  %v1073 = vsel %vm933, %v840, 0
  %v1076 = vsel %vm933, %v841, 0
  %v1079 = vsel %vm933, %v842, 0
  %v1082 = vsel %vm933, %v843, 0
  %v1085 = vsel %vm933, %v844, 0
  %v1088 = vsel %vm933, %v845, 0
  %v1091 = vsel %vm933, %v846, 0
  %v1094 = vsel %vm933, %v847, 0
  %v1097 = vsel %vm933, %v848, 0
  %v1100 = vsel %vm933, %v849, 0
  %v1103 = vsel %vm933, %v850, 0
  %v1106 = vsel %vm933, %v851, 0
  %v1109 = vsel %vm933, %v852, 0
  %v1112 = vsel %vm933, %v853, 0
  %v1115 = vsel %vm933, %v854, 0
  %v1118 = vsel %vm933, %v855, 0
  %v1121 = vsel %vm933, %v856, 0
  %v1124 = vsel %vm933, %v857, 0
  %v1127 = vsel %vm933, %v858, 0
  %v1130 = vsel %vm933, %v859, 0
  %v1133 = vsel %vm933, %v860, 0
  %v1136 = vsel %vm933, %v861, 0
  %v1139 = vsel %vm933, %v862, 0
  %v1142 = vsel %vm933, %v863, 0
  %v1145 = vsel %vm933, %v864, 0
  %v1148 = vsel %vm933, %v865, 0
  %v1151 = vsel %vm933, %v866, 0
  %v1154 = vsel %vm933, %v867, 0
  %v1157 = vsel %vm933, %v868, 0
  %v1160 = vsel %vm933, %v869, 0
  %v1163 = vsel %vm933, %v870, 0
  %v1166 = vsel %vm933, %v871, 0
  %v1169 = vsel %vm933, %v872, 0
  %v1172 = vsel %vm933, %v873, 0
  %v1175 = vsel %vm933, %v874, 0
  %v1178 = vsel %vm933, %v875, 0
  %v1181 = vsel %vm933, %v876, 0
  %v1184 = vsel %vm933, %v877, 0
  %v1187 = vsel %vm933, %v878, 0
  %v1190 = vsel %vm933, %v879, 0
  %v1193 = vsel %vm933, %v880, 0
  %v1196 = vsel %vm933, %v881, 0
  %v1199 = vsel %vm933, %v882, 0
  %v1202 = vsel %vm933, %v883, 0
  %v1205 = vsel %vm933, %v884, 0
  %v1208 = vsel %vm933, %v885, 0
  %v1211 = vsel %vm933, %v886, 0
  %v1214 = vsel %vm933, %v887, 0
  %v1217 = vsel %vm933, %v888, 0
  %v1220 = vsel %vm933, %v889, 0
  %v1223 = vsel %vm933, %v890, 0
  %v1226 = vsel %vm933, %v891, 0
  %v1229 = vsel %vm933, %v892, 0
  %v1232 = vsel %vm933, %v893, 0
  %v1235 = vsel %vm933, %v894, 0
  %v1238 = vsel %vm933, %v895, 0
  %v1241 = vsel %vm933, %v896, 0
  %v1244 = vsel %vm933, %v897, 0
  %v1247 = vsel %vm933, %v898, 0
  %v1250 = vsel %vm933, %v899, 0
  %v1253 = vsel %vm933, %v900, 0
  %v1256 = vsel %vm933, %v901, 0
  %v1259 = vsel %vm933, %v902, 0
  %v1262 = vsel %vm933, %v903, 0
  %v1265 = vsel %vm933, %v904, 0
  %v1268 = vsel %vm933, %v905, 0
  %v1271 = vsel %vm933, %v906, 0
  %v1274 = vsel %vm933, %v907, 0
  %v1277 = vsel %vm933, %v908, 0
  %v1280 = vsel %vm933, %v909, 0
  %v1283 = vsel %vm933, %v910, 0
  %v1286 = vsel %vm933, %v911, 0
  %v1289 = vsel %vm933, %v912, 0
  %v1292 = vsel %vm933, %v913, 0
  %v1295 = vsel %vm933, %v914, 0
  %v1298 = vsel %vm933, %v915, 0
  %v1301 = vsel %vm933, %v916, 0
  %v1304 = vsel %vm933, %v917, 0
  %v1307 = vsel %vm933, %v918, 0
  %v1310 = vsel %vm933, %v919, 0
  %v1313 = vsel %vm933, %v920, 0
  %v1316 = vsel %vm933, %v921, 0
  %vm1318 = vcmask 1044480
  %vm1319 = vcmask 1045504
  %v1320 = vsel %vm1318, 4294967295, 65535
  %v1321 = vsel %vm1319, %v1320, 0
  %v1323 = vand.u32 %v931, %v1321
  %1325 = vmatprep.subr.bf16.mxu0 0
  %1326 = vmatpush1.bf16.msra.mxu0 %v930
  %1327 = vmatprep.subr.bf16.mxu0 0
  %1328 = vmatpush1.bf16.msra.mxu0 %v1323
  %1329 = vmatprep.subr.bf16.mxu0 0
  %1330 = vmatpush1.bf16.msra.mxu0 0
  %1331 = vmatprep.subr.bf16.mxu0 0
  %1332 = vmatpush1.bf16.msra.mxu0 0
  %1333 = vmatprep.subr.bf16.mxu0 0
  %1334 = vmatpush1.bf16.msra.mxu0 0
  %1335 = vmatprep.subr.bf16.mxu0 0
  %1336 = vmatpush1.bf16.msra.mxu0 0
  %1337 = vmatprep.subr.bf16.mxu0 0
  %1338 = vmatpush1.bf16.msra.mxu0 0
  %1339 = vmatprep.subr.bf16.mxu0 0
  %1340 = vmatpush1.bf16.msra.mxu0 0
  %1341 = vmatprep.subr.bf16.mxu0 0
  %1342 = vmatpush1.bf16.msra.mxu0 0
  %1343 = vmatprep.subr.bf16.mxu0 0
  %1344 = vmatpush1.bf16.msra.mxu0 0
  %1345 = vmatprep.subr.bf16.mxu0 0
  %1346 = vmatpush1.bf16.msra.mxu0 0
  %1347 = vmatprep.subr.bf16.mxu0 0
  %1348 = vmatpush1.bf16.msra.mxu0 0
  %1349 = vmatprep.subr.bf16.mxu0 0
  %1350 = vmatpush1.bf16.msra.mxu0 0
  %1351 = vmatprep.subr.bf16.mxu0 0
  %1352 = vmatpush1.bf16.msra.mxu0 0
  %1353 = vmatprep.subr.bf16.mxu0 0
  %1354 = vmatpush1.bf16.msra.mxu0 0
  %1355 = vmatprep.subr.bf16.mxu0 0
  %1356 = vmatpush1.bf16.msra.mxu0 0
  %1357 = vmatprep.mubr.bf16.mxu0 0
  %1358 = vmatmul.mubr.bf16.gmra.mrb[0].mxu0 %v935
  %v1359 = vpop.f32.mrb[0].mxu0
  %v1360 = vadd.f32 %v280, %v1359
  %v1361 = vpop.f32.mrb[0].mxu0
  %v1362 = vpop.f32.mrb[0].mxu0
  %v1363 = vadd.f32 %v280, %v1362
  %v1364 = vpop.f32.mrb[0].mxu0
  %1365 = vmatprep.mubr.bf16.mxu0 0
  %1366 = vmatmul.mubr.bf16.gmra.mrb[0].mxu0 %v938
  %v1367 = vpop.f32.mrb[0].mxu0
  %v1368 = vadd.f32 %v280, %v1367
  %v1369 = vpop.f32.mrb[0].mxu0
  %v1370 = vpop.f32.mrb[0].mxu0
  %v1371 = vadd.f32 %v280, %v1370
  %v1372 = vpop.f32.mrb[0].mxu0
  %1373 = vmatprep.mubr.bf16.mxu0 0
  %1374 = vmatmul.mubr.bf16.gmra.mrb[0].mxu0 %v941
  %v1375 = vpop.f32.mrb[0].mxu0
  %v1376 = vadd.f32 %v280, %v1375
  %v1377 = vpop.f32.mrb[0].mxu0
  %v1378 = vpop.f32.mrb[0].mxu0
  %v1379 = vadd.f32 %v280, %v1378
  %v1380 = vpop.f32.mrb[0].mxu0
  %1381 = vmatprep.mubr.bf16.mxu0 0
  %1382 = vmatmul.mubr.bf16.gmra.mrb[0].mxu0 %v944
  %v1383 = vpop.f32.mrb[0].mxu0
  %v1384 = vadd.f32 %v280, %v1383
  %v1385 = vpop.f32.mrb[0].mxu0
  %v1386 = vpop.f32.mrb[0].mxu0
  %v1387 = vadd.f32 %v280, %v1386
  %v1388 = vpop.f32.mrb[0].mxu0
  %1389 = vmatprep.mubr.bf16.mxu0 0
  %1390 = vmatmul.mubr.bf16.gmra.mrb[0].mxu0 %v947
  %v1391 = vpop.f32.mrb[0].mxu0
  %v1392 = vadd.f32 %v280, %v1391
  %v1393 = vpop.f32.mrb[0].mxu0
  %v1394 = vpop.f32.mrb[0].mxu0
  %v1395 = vadd.f32 %v280, %v1394
  %v1396 = vpop.f32.mrb[0].mxu0
  %1397 = vmatprep.mubr.bf16.mxu0 0
  %1398 = vmatmul.mubr.bf16.gmra.mrb[0].mxu0 %v950
  %v1399 = vpop.f32.mrb[0].mxu0
  %v1400 = vadd.f32 %v280, %v1399
  %v1401 = vpop.f32.mrb[0].mxu0
  %v1402 = vpop.f32.mrb[0].mxu0
  %v1403 = vadd.f32 %v280, %v1402
  %v1404 = vpop.f32.mrb[0].mxu0
  %1405 = vmatprep.mubr.bf16.mxu0 0
  %1406 = vmatmul.mubr.bf16.gmra.mrb[0].mxu0 %v953
  %v1407 = vpop.f32.mrb[0].mxu0
  %v1408 = vadd.f32 %v280, %v1407
  %v1409 = vpop.f32.mrb[0].mxu0
  %v1410 = vpop.f32.mrb[0].mxu0
  %v1411 = vadd.f32 %v280, %v1410
  %v1412 = vpop.f32.mrb[0].mxu0
  %1413 = vmatprep.mubr.bf16.mxu0 0
  %1414 = vmatmul.mubr.bf16.gmra.mrb[0].mxu0 %v956
  %v1415 = vpop.f32.mrb[0].mxu0
  %v1416 = vadd.f32 %v280, %v1415
  %v1417 = vpop.f32.mrb[0].mxu0
  %v1418 = vpop.f32.mrb[0].mxu0
  %v1419 = vadd.f32 %v280, %v1418
  %v1420 = vpop.f32.mrb[0].mxu0
  %1421 = vmatprep.mubr.bf16.mxu0 0
  %1422 = vmatmul.mubr.bf16.gmra.mrb[0].mxu0 %v959
  %v1423 = vpop.f32.mrb[0].mxu0
  %v1424 = vadd.f32 %v280, %v1423
  %v1425 = vpop.f32.mrb[0].mxu0
  %v1426 = vpop.f32.mrb[0].mxu0
  %v1427 = vadd.f32 %v280, %v1426
  %v1428 = vpop.f32.mrb[0].mxu0
  %1429 = vmatprep.mubr.bf16.mxu0 0
  %1430 = vmatmul.mubr.bf16.gmra.mrb[0].mxu0 %v962
  %v1431 = vpop.f32.mrb[0].mxu0
  %v1432 = vadd.f32 %v280, %v1431
  %v1433 = vpop.f32.mrb[0].mxu0
  %v1434 = vpop.f32.mrb[0].mxu0
  %v1435 = vadd.f32 %v280, %v1434
  %v1436 = vpop.f32.mrb[0].mxu0
  %1437 = vmatprep.mubr.bf16.mxu0 0
  %1438 = vmatmul.mubr.bf16.gmra.mrb[0].mxu0 %v965
  %v1439 = vpop.f32.mrb[0].mxu0
  %v1440 = vadd.f32 %v280, %v1439
  %v1441 = vpop.f32.mrb[0].mxu0
  %v1442 = vpop.f32.mrb[0].mxu0
  %v1443 = vadd.f32 %v280, %v1442
  %v1444 = vpop.f32.mrb[0].mxu0
  %1445 = vmatprep.mubr.bf16.mxu0 0
  %1446 = vmatmul.mubr.bf16.gmra.mrb[0].mxu0 %v968
  %v1447 = vpop.f32.mrb[0].mxu0
  %v1448 = vadd.f32 %v280, %v1447
  %v1449 = vpop.f32.mrb[0].mxu0
  %v1450 = vpop.f32.mrb[0].mxu0
  %v1451 = vadd.f32 %v280, %v1450
  %v1452 = vpop.f32.mrb[0].mxu0
  %1453 = vmatprep.mubr.bf16.mxu0 0
  %1454 = vmatmul.mubr.bf16.gmra.mrb[0].mxu0 %v971
  %v1455 = vpop.f32.mrb[0].mxu0
  %v1456 = vadd.f32 %v280, %v1455
  %v1457 = vpop.f32.mrb[0].mxu0
  %v1458 = vpop.f32.mrb[0].mxu0
  %v1459 = vadd.f32 %v280, %v1458
  %v1460 = vpop.f32.mrb[0].mxu0
  %1461 = vmatprep.mubr.bf16.mxu0 0
  %1462 = vmatmul.mubr.bf16.gmra.mrb[0].mxu0 %v974
  %v1463 = vpop.f32.mrb[0].mxu0
  %v1464 = vadd.f32 %v280, %v1463
  %v1465 = vpop.f32.mrb[0].mxu0
  %v1466 = vpop.f32.mrb[0].mxu0
  %v1467 = vadd.f32 %v280, %v1466
  %v1468 = vpop.f32.mrb[0].mxu0
  %1469 = vmatprep.mubr.bf16.mxu0 0
  %1470 = vmatmul.mubr.bf16.gmra.mrb[0].mxu0 %v977
  %v1471 = vpop.f32.mrb[0].mxu0
  %v1472 = vadd.f32 %v280, %v1471
  %v1473 = vpop.f32.mrb[0].mxu0
  %v1474 = vpop.f32.mrb[0].mxu0
  %v1475 = vadd.f32 %v280, %v1474
  %v1476 = vpop.f32.mrb[0].mxu0
  %1477 = vmatprep.mubr.bf16.mxu0 0
  %1478 = vmatmul.mubr.bf16.gmra.mrb[0].mxu0 %v980
  %v1479 = vpop.f32.mrb[0].mxu0
  %v1480 = vadd.f32 %v280, %v1479
  %v1481 = vpop.f32.mrb[0].mxu0
  %v1482 = vpop.f32.mrb[0].mxu0
  %v1483 = vadd.f32 %v280, %v1482
  %v1484 = vpop.f32.mrb[0].mxu0
  %1485 = vmatprep.mubr.bf16.mxu0 0
  %1486 = vmatmul.mubr.bf16.gmra.mrb[0].mxu0 %v983
  %v1487 = vpop.f32.mrb[0].mxu0
  %v1488 = vadd.f32 %v280, %v1487
  %v1489 = vpop.f32.mrb[0].mxu0
  %v1490 = vpop.f32.mrb[0].mxu0
  %v1491 = vadd.f32 %v280, %v1490
  %v1492 = vpop.f32.mrb[0].mxu0
  %1493 = vmatprep.mubr.bf16.mxu0 0
  %1494 = vmatmul.mubr.bf16.gmra.mrb[0].mxu0 %v986
  %v1495 = vpop.f32.mrb[0].mxu0
  %v1496 = vadd.f32 %v280, %v1495
  %v1497 = vpop.f32.mrb[0].mxu0
  %v1498 = vpop.f32.mrb[0].mxu0
  %v1499 = vadd.f32 %v280, %v1498
  %v1500 = vpop.f32.mrb[0].mxu0
  %1501 = vmatprep.mubr.bf16.mxu0 0
  %1502 = vmatmul.mubr.bf16.gmra.mrb[0].mxu0 %v989
  %v1503 = vpop.f32.mrb[0].mxu0
  %v1504 = vadd.f32 %v280, %v1503
  %v1505 = vpop.f32.mrb[0].mxu0
  %v1506 = vpop.f32.mrb[0].mxu0
  %v1507 = vadd.f32 %v280, %v1506
  %v1508 = vpop.f32.mrb[0].mxu0
  %1509 = vmatprep.mubr.bf16.mxu0 0
  %1510 = vmatmul.mubr.bf16.gmra.mrb[0].mxu0 %v992
  %v1511 = vpop.f32.mrb[0].mxu0
  %v1512 = vadd.f32 %v280, %v1511
  %v1513 = vpop.f32.mrb[0].mxu0
  %v1514 = vpop.f32.mrb[0].mxu0
  %v1515 = vadd.f32 %v280, %v1514
  %v1516 = vpop.f32.mrb[0].mxu0
  %1517 = vmatprep.mubr.bf16.mxu0 0
  %1518 = vmatmul.mubr.bf16.gmra.mrb[0].mxu0 %v995
  %v1519 = vpop.f32.mrb[0].mxu0
  %v1520 = vadd.f32 %v280, %v1519
  %v1521 = vpop.f32.mrb[0].mxu0
  %v1522 = vpop.f32.mrb[0].mxu0
  %v1523 = vadd.f32 %v280, %v1522
  %v1524 = vpop.f32.mrb[0].mxu0
  %1525 = vmatprep.mubr.bf16.mxu0 0
  %1526 = vmatmul.mubr.bf16.gmra.mrb[0].mxu0 %v998
  %v1527 = vpop.f32.mrb[0].mxu0
  %v1528 = vadd.f32 %v280, %v1527
  %v1529 = vpop.f32.mrb[0].mxu0
  %v1530 = vpop.f32.mrb[0].mxu0
  %v1531 = vadd.f32 %v280, %v1530
  %v1532 = vpop.f32.mrb[0].mxu0
  %1533 = vmatprep.mubr.bf16.mxu0 0
  %1534 = vmatmul.mubr.bf16.gmra.mrb[0].mxu0 %v1001
  %v1535 = vpop.f32.mrb[0].mxu0
  %v1536 = vadd.f32 %v280, %v1535
  %v1537 = vpop.f32.mrb[0].mxu0
  %v1538 = vpop.f32.mrb[0].mxu0
  %v1539 = vadd.f32 %v280, %v1538
  %v1540 = vpop.f32.mrb[0].mxu0
  %1541 = vmatprep.mubr.bf16.mxu0 0
  %1542 = vmatmul.mubr.bf16.gmra.mrb[0].mxu0 %v1004
  %v1543 = vpop.f32.mrb[0].mxu0
  %v1544 = vadd.f32 %v280, %v1543
  %v1545 = vpop.f32.mrb[0].mxu0
  %v1546 = vpop.f32.mrb[0].mxu0
  %v1547 = vadd.f32 %v280, %v1546
  %v1548 = vpop.f32.mrb[0].mxu0
  %1549 = vmatprep.mubr.bf16.mxu0 0
  %1550 = vmatmul.mubr.bf16.gmra.mrb[0].mxu0 %v1007
  %v1551 = vpop.f32.mrb[0].mxu0
  %v1552 = vadd.f32 %v280, %v1551
  %v1553 = vpop.f32.mrb[0].mxu0
  %v1554 = vpop.f32.mrb[0].mxu0
  %v1555 = vadd.f32 %v280, %v1554
  %v1556 = vpop.f32.mrb[0].mxu0
  %1557 = vmatprep.mubr.bf16.mxu0 0
  %1558 = vmatmul.mubr.bf16.gmra.mrb[0].mxu0 %v1010
  %v1559 = vpop.f32.mrb[0].mxu0
  %v1560 = vadd.f32 %v280, %v1559
  %v1561 = vpop.f32.mrb[0].mxu0
  %v1562 = vpop.f32.mrb[0].mxu0
  %v1563 = vadd.f32 %v280, %v1562
  %v1564 = vpop.f32.mrb[0].mxu0
  %1565 = vmatprep.mubr.bf16.mxu0 0
  %1566 = vmatmul.mubr.bf16.gmra.mrb[0].mxu0 %v1013
  %v1567 = vpop.f32.mrb[0].mxu0
  %v1568 = vadd.f32 %v280, %v1567
  %v1569 = vpop.f32.mrb[0].mxu0
  %v1570 = vpop.f32.mrb[0].mxu0
  %v1571 = vadd.f32 %v280, %v1570
  %v1572 = vpop.f32.mrb[0].mxu0
  %1573 = vmatprep.mubr.bf16.mxu0 0
  %1574 = vmatmul.mubr.bf16.gmra.mrb[0].mxu0 %v1016
  %v1575 = vpop.f32.mrb[0].mxu0
  %v1576 = vadd.f32 %v280, %v1575
  %v1577 = vpop.f32.mrb[0].mxu0
  %v1578 = vpop.f32.mrb[0].mxu0
  %v1579 = vadd.f32 %v280, %v1578
  %v1580 = vpop.f32.mrb[0].mxu0
  %1581 = vmatprep.mubr.bf16.mxu0 0
  %1582 = vmatmul.mubr.bf16.gmra.mrb[0].mxu0 %v1019
  %v1583 = vpop.f32.mrb[0].mxu0
  %v1584 = vadd.f32 %v280, %v1583
  %v1585 = vpop.f32.mrb[0].mxu0
  %v1586 = vpop.f32.mrb[0].mxu0
  %v1587 = vadd.f32 %v280, %v1586
  %v1588 = vpop.f32.mrb[0].mxu0
  %1589 = vmatprep.mubr.bf16.mxu0 0
  %1590 = vmatmul.mubr.bf16.gmra.mrb[0].mxu0 %v1022
  %v1591 = vpop.f32.mrb[0].mxu0
  %v1592 = vadd.f32 %v280, %v1591
  %v1593 = vpop.f32.mrb[0].mxu0
  %v1594 = vpop.f32.mrb[0].mxu0
  %v1595 = vadd.f32 %v280, %v1594
  %v1596 = vpop.f32.mrb[0].mxu0
  %1597 = vmatprep.mubr.bf16.mxu0 0
  %1598 = vmatmul.mubr.bf16.gmra.mrb[0].mxu0 %v1025
  %v1599 = vpop.f32.mrb[0].mxu0
  %v1600 = vadd.f32 %v280, %v1599
  %v1601 = vpop.f32.mrb[0].mxu0
  %v1602 = vpop.f32.mrb[0].mxu0
  %v1603 = vadd.f32 %v280, %v1602
  %v1604 = vpop.f32.mrb[0].mxu0
  %1605 = vmatprep.mubr.bf16.mxu0 0
  %1606 = vmatmul.mubr.bf16.gmra.mrb[0].mxu0 %v1028
  %v1607 = vpop.f32.mrb[0].mxu0
  %v1608 = vadd.f32 %v280, %v1607
  %v1609 = vpop.f32.mrb[0].mxu0
  %v1610 = vpop.f32.mrb[0].mxu0
  %v1611 = vadd.f32 %v280, %v1610
  %v1612 = vpop.f32.mrb[0].mxu0
  %1613 = vmatprep.mubr.bf16.mxu0 0
  %1614 = vmatmul.mubr.bf16.gmra.mrb[0].mxu0 %v1031
  %v1615 = vpop.f32.mrb[0].mxu0
  %v1616 = vadd.f32 %v280, %v1615
  %v1617 = vpop.f32.mrb[0].mxu0
  %v1618 = vpop.f32.mrb[0].mxu0
  %v1619 = vadd.f32 %v280, %v1618
  %v1620 = vpop.f32.mrb[0].mxu0
  %1621 = vmatprep.mubr.bf16.mxu0 0
  %1622 = vmatmul.mubr.bf16.gmra.mrb[0].mxu0 %v1034
  %v1623 = vpop.f32.mrb[0].mxu0
  %v1624 = vadd.f32 %v280, %v1623
  %v1625 = vpop.f32.mrb[0].mxu0
  %v1626 = vpop.f32.mrb[0].mxu0
  %v1627 = vadd.f32 %v280, %v1626
  %v1628 = vpop.f32.mrb[0].mxu0
  %1629 = vmatprep.mubr.bf16.mxu0 0
  %1630 = vmatmul.mubr.bf16.gmra.mrb[0].mxu0 %v1037
  %v1631 = vpop.f32.mrb[0].mxu0
  %v1632 = vadd.f32 %v280, %v1631
  %v1633 = vpop.f32.mrb[0].mxu0
  %v1634 = vpop.f32.mrb[0].mxu0
  %v1635 = vadd.f32 %v280, %v1634
  %v1636 = vpop.f32.mrb[0].mxu0
  %1637 = vmatprep.mubr.bf16.mxu0 0
  %1638 = vmatmul.mubr.bf16.gmra.mrb[0].mxu0 %v1040
  %v1639 = vpop.f32.mrb[0].mxu0
  %v1640 = vadd.f32 %v280, %v1639
  %v1641 = vpop.f32.mrb[0].mxu0
  %v1642 = vpop.f32.mrb[0].mxu0
  %v1643 = vadd.f32 %v280, %v1642
  %v1644 = vpop.f32.mrb[0].mxu0
  %1645 = vmatprep.mubr.bf16.mxu0 0
  %1646 = vmatmul.mubr.bf16.gmra.mrb[0].mxu0 %v1043
  %v1647 = vpop.f32.mrb[0].mxu0
  %v1648 = vadd.f32 %v280, %v1647
  %v1649 = vpop.f32.mrb[0].mxu0
  %v1650 = vpop.f32.mrb[0].mxu0
  %v1651 = vadd.f32 %v280, %v1650
  %v1652 = vpop.f32.mrb[0].mxu0
  %1653 = vmatprep.mubr.bf16.mxu0 0
  %1654 = vmatmul.mubr.bf16.gmra.mrb[0].mxu0 %v1046
  %v1655 = vpop.f32.mrb[0].mxu0
  %v1656 = vadd.f32 %v280, %v1655
  %v1657 = vpop.f32.mrb[0].mxu0
  %v1658 = vpop.f32.mrb[0].mxu0
  %v1659 = vadd.f32 %v280, %v1658
  %v1660 = vpop.f32.mrb[0].mxu0
  %1661 = vmatprep.mubr.bf16.mxu0 0
  %1662 = vmatmul.mubr.bf16.gmra.mrb[0].mxu0 %v1049
  %v1663 = vpop.f32.mrb[0].mxu0
  %v1664 = vadd.f32 %v280, %v1663
  %v1665 = vpop.f32.mrb[0].mxu0
  %v1666 = vpop.f32.mrb[0].mxu0
  %v1667 = vadd.f32 %v280, %v1666
  %v1668 = vpop.f32.mrb[0].mxu0
  %1669 = vmatprep.mubr.bf16.mxu0 0
  %1670 = vmatmul.mubr.bf16.gmra.mrb[0].mxu0 %v1052
  %v1671 = vpop.f32.mrb[0].mxu0
  %v1672 = vadd.f32 %v280, %v1671
  %v1673 = vpop.f32.mrb[0].mxu0
  %v1674 = vpop.f32.mrb[0].mxu0
  %v1675 = vadd.f32 %v280, %v1674
  %v1676 = vpop.f32.mrb[0].mxu0
  %1677 = vmatprep.mubr.bf16.mxu0 0
  %1678 = vmatmul.mubr.bf16.gmra.mrb[0].mxu0 %v1055
  %v1679 = vpop.f32.mrb[0].mxu0
  %v1680 = vadd.f32 %v280, %v1679
  %v1681 = vpop.f32.mrb[0].mxu0
  %v1682 = vpop.f32.mrb[0].mxu0
  %v1683 = vadd.f32 %v280, %v1682
  %v1684 = vpop.f32.mrb[0].mxu0
  %1685 = vmatprep.mubr.bf16.mxu0 0
  %1686 = vmatmul.mubr.bf16.gmra.mrb[0].mxu0 %v1058
  %v1687 = vpop.f32.mrb[0].mxu0
  %v1688 = vadd.f32 %v280, %v1687
  %v1689 = vpop.f32.mrb[0].mxu0
  %v1690 = vpop.f32.mrb[0].mxu0
  %v1691 = vadd.f32 %v280, %v1690
  %v1692 = vpop.f32.mrb[0].mxu0
  %1693 = vmatprep.mubr.bf16.mxu0 0
  %1694 = vmatmul.mubr.bf16.gmra.mrb[0].mxu0 %v1061
  %v1695 = vpop.f32.mrb[0].mxu0
  %v1696 = vadd.f32 %v280, %v1695
  %v1697 = vpop.f32.mrb[0].mxu0
  %v1698 = vpop.f32.mrb[0].mxu0
  %v1699 = vadd.f32 %v280, %v1698
  %v1700 = vpop.f32.mrb[0].mxu0
  %1701 = vmatprep.mubr.bf16.mxu0 0
  %1702 = vmatmul.mubr.bf16.gmra.mrb[0].mxu0 %v1064
  %v1703 = vpop.f32.mrb[0].mxu0
  %v1704 = vadd.f32 %v280, %v1703
  %v1705 = vpop.f32.mrb[0].mxu0
  %v1706 = vpop.f32.mrb[0].mxu0
  %v1707 = vadd.f32 %v280, %v1706
  %v1708 = vpop.f32.mrb[0].mxu0
  %1709 = vmatprep.mubr.bf16.mxu0 0
  %1710 = vmatmul.mubr.bf16.gmra.mrb[0].mxu0 %v1067
  %v1711 = vpop.f32.mrb[0].mxu0
  %v1712 = vadd.f32 %v280, %v1711
  %v1713 = vpop.f32.mrb[0].mxu0
  %v1714 = vpop.f32.mrb[0].mxu0
  %v1715 = vadd.f32 %v280, %v1714
  %v1716 = vpop.f32.mrb[0].mxu0
  %1717 = vmatprep.mubr.bf16.mxu0 0
  %1718 = vmatmul.mubr.bf16.gmra.mrb[0].mxu0 %v1070
  %v1719 = vpop.f32.mrb[0].mxu0
  %v1720 = vadd.f32 %v280, %v1719
  %v1721 = vpop.f32.mrb[0].mxu0
  %v1722 = vpop.f32.mrb[0].mxu0
  %v1723 = vadd.f32 %v280, %v1722
  %v1724 = vpop.f32.mrb[0].mxu0
  %1725 = vmatprep.mubr.bf16.mxu0 0
  %1726 = vmatmul.mubr.bf16.gmra.mrb[0].mxu0 %v1073
  %v1727 = vpop.f32.mrb[0].mxu0
  %v1728 = vadd.f32 %v280, %v1727
  %v1729 = vpop.f32.mrb[0].mxu0
  %v1730 = vpop.f32.mrb[0].mxu0
  %v1731 = vadd.f32 %v280, %v1730
  %v1732 = vpop.f32.mrb[0].mxu0
  %1733 = vmatprep.mubr.bf16.mxu0 0
  %1734 = vmatmul.mubr.bf16.gmra.mrb[0].mxu0 %v1076
  %v1735 = vpop.f32.mrb[0].mxu0
  %v1736 = vadd.f32 %v280, %v1735
  %v1737 = vpop.f32.mrb[0].mxu0
  %v1738 = vpop.f32.mrb[0].mxu0
  %v1739 = vadd.f32 %v280, %v1738
  %v1740 = vpop.f32.mrb[0].mxu0
  %1741 = vmatprep.mubr.bf16.mxu0 0
  %1742 = vmatmul.mubr.bf16.gmra.mrb[0].mxu0 %v1079
  %v1743 = vpop.f32.mrb[0].mxu0
  %v1744 = vadd.f32 %v280, %v1743
  %v1745 = vpop.f32.mrb[0].mxu0
  %v1746 = vpop.f32.mrb[0].mxu0
  %v1747 = vadd.f32 %v280, %v1746
  %v1748 = vpop.f32.mrb[0].mxu0
  %1749 = vmatprep.mubr.bf16.mxu0 0
  %1750 = vmatmul.mubr.bf16.gmra.mrb[0].mxu0 %v1082
  %v1751 = vpop.f32.mrb[0].mxu0
  %v1752 = vadd.f32 %v280, %v1751
  %v1753 = vpop.f32.mrb[0].mxu0
  %v1754 = vpop.f32.mrb[0].mxu0
  %v1755 = vadd.f32 %v280, %v1754
  %v1756 = vpop.f32.mrb[0].mxu0
  %1757 = vmatprep.mubr.bf16.mxu0 0
  %1758 = vmatmul.mubr.bf16.gmra.mrb[0].mxu0 %v1085
  %v1759 = vpop.f32.mrb[0].mxu0
  %v1760 = vadd.f32 %v280, %v1759
  %v1761 = vpop.f32.mrb[0].mxu0
  %v1762 = vpop.f32.mrb[0].mxu0
  %v1763 = vadd.f32 %v280, %v1762
  %v1764 = vpop.f32.mrb[0].mxu0
  %1765 = vmatprep.mubr.bf16.mxu0 0
  %1766 = vmatmul.mubr.bf16.gmra.mrb[0].mxu0 %v1088
  %v1767 = vpop.f32.mrb[0].mxu0
  %v1768 = vadd.f32 %v280, %v1767
  %v1769 = vpop.f32.mrb[0].mxu0
  %v1770 = vpop.f32.mrb[0].mxu0
  %v1771 = vadd.f32 %v280, %v1770
  %v1772 = vpop.f32.mrb[0].mxu0
  %1773 = vmatprep.mubr.bf16.mxu0 0
  %1774 = vmatmul.mubr.bf16.gmra.mrb[0].mxu0 %v1091
  %v1775 = vpop.f32.mrb[0].mxu0
  %v1776 = vadd.f32 %v280, %v1775
  %v1777 = vpop.f32.mrb[0].mxu0
  %v1778 = vpop.f32.mrb[0].mxu0
  %v1779 = vadd.f32 %v280, %v1778
  %v1780 = vpop.f32.mrb[0].mxu0
  %1781 = vmatprep.mubr.bf16.mxu0 0
  %1782 = vmatmul.mubr.bf16.gmra.mrb[0].mxu0 %v1094
  %v1783 = vpop.f32.mrb[0].mxu0
  %v1784 = vadd.f32 %v280, %v1783
  %v1785 = vpop.f32.mrb[0].mxu0
  %v1786 = vpop.f32.mrb[0].mxu0
  %v1787 = vadd.f32 %v280, %v1786
  %v1788 = vpop.f32.mrb[0].mxu0
  %1789 = vmatprep.mubr.bf16.mxu0 0
  %1790 = vmatmul.mubr.bf16.gmra.mrb[0].mxu0 %v1097
  %v1791 = vpop.f32.mrb[0].mxu0
  %v1792 = vadd.f32 %v280, %v1791
  %v1793 = vpop.f32.mrb[0].mxu0
  %v1794 = vpop.f32.mrb[0].mxu0
  %v1795 = vadd.f32 %v280, %v1794
  %v1796 = vpop.f32.mrb[0].mxu0
  %1797 = vmatprep.mubr.bf16.mxu0 0
  %1798 = vmatmul.mubr.bf16.gmra.mrb[0].mxu0 %v1100
  %v1799 = vpop.f32.mrb[0].mxu0
  %v1800 = vadd.f32 %v280, %v1799
  %v1801 = vpop.f32.mrb[0].mxu0
  %v1802 = vpop.f32.mrb[0].mxu0
  %v1803 = vadd.f32 %v280, %v1802
  %v1804 = vpop.f32.mrb[0].mxu0
  %1805 = vmatprep.mubr.bf16.mxu0 0
  %1806 = vmatmul.mubr.bf16.gmra.mrb[0].mxu0 %v1103
  %v1807 = vpop.f32.mrb[0].mxu0
  %v1808 = vadd.f32 %v280, %v1807
  %v1809 = vpop.f32.mrb[0].mxu0
  %v1810 = vpop.f32.mrb[0].mxu0
  %v1811 = vadd.f32 %v280, %v1810
  %v1812 = vpop.f32.mrb[0].mxu0
  %1813 = vmatprep.mubr.bf16.mxu0 0
  %1814 = vmatmul.mubr.bf16.gmra.mrb[0].mxu0 %v1106
  %v1815 = vpop.f32.mrb[0].mxu0
  %v1816 = vadd.f32 %v280, %v1815
  %v1817 = vpop.f32.mrb[0].mxu0
  %v1818 = vpop.f32.mrb[0].mxu0
  %v1819 = vadd.f32 %v280, %v1818
  %v1820 = vpop.f32.mrb[0].mxu0
  %1821 = vmatprep.mubr.bf16.mxu0 0
  %1822 = vmatmul.mubr.bf16.gmra.mrb[0].mxu0 %v1109
  %v1823 = vpop.f32.mrb[0].mxu0
  %v1824 = vadd.f32 %v280, %v1823
  %v1825 = vpop.f32.mrb[0].mxu0
  %v1826 = vpop.f32.mrb[0].mxu0
  %v1827 = vadd.f32 %v280, %v1826
  %v1828 = vpop.f32.mrb[0].mxu0
  %1829 = vmatprep.mubr.bf16.mxu0 0
  %1830 = vmatmul.mubr.bf16.gmra.mrb[0].mxu0 %v1112
  %v1831 = vpop.f32.mrb[0].mxu0
  %v1832 = vadd.f32 %v280, %v1831
  %v1833 = vpop.f32.mrb[0].mxu0
  %v1834 = vpop.f32.mrb[0].mxu0
  %v1835 = vadd.f32 %v280, %v1834
  %v1836 = vpop.f32.mrb[0].mxu0
  %1837 = vmatprep.mubr.bf16.mxu0 0
  %1838 = vmatmul.mubr.bf16.gmra.mrb[0].mxu0 %v1115
  %v1839 = vpop.f32.mrb[0].mxu0
  %v1840 = vadd.f32 %v280, %v1839
  %v1841 = vpop.f32.mrb[0].mxu0
  %v1842 = vpop.f32.mrb[0].mxu0
  %v1843 = vadd.f32 %v280, %v1842
  %v1844 = vpop.f32.mrb[0].mxu0
  %1845 = vmatprep.mubr.bf16.mxu0 0
  %1846 = vmatmul.mubr.bf16.gmra.mrb[0].mxu0 %v1118
  %v1847 = vpop.f32.mrb[0].mxu0
  %v1848 = vadd.f32 %v280, %v1847
  %v1849 = vpop.f32.mrb[0].mxu0
  %v1850 = vpop.f32.mrb[0].mxu0
  %v1851 = vadd.f32 %v280, %v1850
  %v1852 = vpop.f32.mrb[0].mxu0
  %1853 = vmatprep.mubr.bf16.mxu0 0
  %1854 = vmatmul.mubr.bf16.gmra.mrb[0].mxu0 %v1121
  %v1855 = vpop.f32.mrb[0].mxu0
  %v1856 = vadd.f32 %v280, %v1855
  %v1857 = vpop.f32.mrb[0].mxu0
  %v1858 = vpop.f32.mrb[0].mxu0
  %v1859 = vadd.f32 %v280, %v1858
  %v1860 = vpop.f32.mrb[0].mxu0
  %1861 = vmatprep.mubr.bf16.mxu0 0
  %1862 = vmatmul.mubr.bf16.gmra.mrb[0].mxu0 %v1124
  %v1863 = vpop.f32.mrb[0].mxu0
  %v1864 = vadd.f32 %v280, %v1863
  %v1865 = vpop.f32.mrb[0].mxu0
  %v1866 = vpop.f32.mrb[0].mxu0
  %v1867 = vadd.f32 %v280, %v1866
  %v1868 = vpop.f32.mrb[0].mxu0
  %1869 = vmatprep.mubr.bf16.mxu0 0
  %1870 = vmatmul.mubr.bf16.gmra.mrb[0].mxu0 %v1127
  %v1871 = vpop.f32.mrb[0].mxu0
  %v1872 = vadd.f32 %v280, %v1871
  %v1873 = vpop.f32.mrb[0].mxu0
  %v1874 = vpop.f32.mrb[0].mxu0
  %v1875 = vadd.f32 %v280, %v1874
  %v1876 = vpop.f32.mrb[0].mxu0
  %1877 = vmatprep.mubr.bf16.mxu0 0
  %1878 = vmatmul.mubr.bf16.gmra.mrb[0].mxu0 %v1130
  %v1879 = vpop.f32.mrb[0].mxu0
  %v1880 = vadd.f32 %v280, %v1879
  %v1881 = vpop.f32.mrb[0].mxu0
  %v1882 = vpop.f32.mrb[0].mxu0
  %v1883 = vadd.f32 %v280, %v1882
  %v1884 = vpop.f32.mrb[0].mxu0
  %1885 = vmatprep.mubr.bf16.mxu0 0
  %1886 = vmatmul.mubr.bf16.gmra.mrb[0].mxu0 %v1133
  %v1887 = vpop.f32.mrb[0].mxu0
  %v1888 = vadd.f32 %v280, %v1887
  %v1889 = vpop.f32.mrb[0].mxu0
  %v1890 = vpop.f32.mrb[0].mxu0
  %v1891 = vadd.f32 %v280, %v1890
  %v1892 = vpop.f32.mrb[0].mxu0
  %1893 = vmatprep.mubr.bf16.mxu0 0
  %1894 = vmatmul.mubr.bf16.gmra.mrb[0].mxu0 %v1136
  %v1895 = vpop.f32.mrb[0].mxu0
  %v1896 = vadd.f32 %v280, %v1895
  %v1897 = vpop.f32.mrb[0].mxu0
  %v1898 = vpop.f32.mrb[0].mxu0
  %v1899 = vadd.f32 %v280, %v1898
  %v1900 = vpop.f32.mrb[0].mxu0
  %1901 = vmatprep.mubr.bf16.mxu0 0
  %1902 = vmatmul.mubr.bf16.gmra.mrb[0].mxu0 %v1139
  %v1903 = vpop.f32.mrb[0].mxu0
  %v1904 = vadd.f32 %v280, %v1903
  %v1905 = vpop.f32.mrb[0].mxu0
  %v1906 = vpop.f32.mrb[0].mxu0
  %v1907 = vadd.f32 %v280, %v1906
  %v1908 = vpop.f32.mrb[0].mxu0
  %1909 = vmatprep.mubr.bf16.mxu0 0
  %1910 = vmatmul.mubr.bf16.gmra.mrb[0].mxu0 %v1142
  %v1911 = vpop.f32.mrb[0].mxu0
  %v1912 = vadd.f32 %v280, %v1911
  %v1913 = vpop.f32.mrb[0].mxu0
  %v1914 = vpop.f32.mrb[0].mxu0
  %v1915 = vadd.f32 %v280, %v1914
  %v1916 = vpop.f32.mrb[0].mxu0
  %1917 = vmatprep.mubr.bf16.mxu0 0
  %1918 = vmatmul.mubr.bf16.gmra.mrb[0].mxu0 %v1145
  %v1919 = vpop.f32.mrb[0].mxu0
  %v1920 = vadd.f32 %v280, %v1919
  %v1921 = vpop.f32.mrb[0].mxu0
  %v1922 = vpop.f32.mrb[0].mxu0
  %v1923 = vadd.f32 %v280, %v1922
  %v1924 = vpop.f32.mrb[0].mxu0
  %1925 = vmatprep.mubr.bf16.mxu0 0
  %1926 = vmatmul.mubr.bf16.gmra.mrb[0].mxu0 %v1148
  %v1927 = vpop.f32.mrb[0].mxu0
  %v1928 = vadd.f32 %v280, %v1927
  %v1929 = vpop.f32.mrb[0].mxu0
  %v1930 = vpop.f32.mrb[0].mxu0
  %v1931 = vadd.f32 %v280, %v1930
  %v1932 = vpop.f32.mrb[0].mxu0
  %1933 = vmatprep.mubr.bf16.mxu0 0
  %1934 = vmatmul.mubr.bf16.gmra.mrb[0].mxu0 %v1151
  %v1935 = vpop.f32.mrb[0].mxu0
  %v1936 = vadd.f32 %v280, %v1935
  %v1937 = vpop.f32.mrb[0].mxu0
  %v1938 = vpop.f32.mrb[0].mxu0
  %v1939 = vadd.f32 %v280, %v1938
  %v1940 = vpop.f32.mrb[0].mxu0
  %1941 = vmatprep.mubr.bf16.mxu0 0
  %1942 = vmatmul.mubr.bf16.gmra.mrb[0].mxu0 %v1154
  %v1943 = vpop.f32.mrb[0].mxu0
  %v1944 = vadd.f32 %v280, %v1943
  %v1945 = vpop.f32.mrb[0].mxu0
  %v1946 = vpop.f32.mrb[0].mxu0
  %v1947 = vadd.f32 %v280, %v1946
  %v1948 = vpop.f32.mrb[0].mxu0
  %1949 = vmatprep.mubr.bf16.mxu0 0
  %1950 = vmatmul.mubr.bf16.gmra.mrb[0].mxu0 %v1157
  %v1951 = vpop.f32.mrb[0].mxu0
  %v1952 = vadd.f32 %v280, %v1951
  %v1953 = vpop.f32.mrb[0].mxu0
  %v1954 = vpop.f32.mrb[0].mxu0
  %v1955 = vadd.f32 %v280, %v1954
  %v1956 = vpop.f32.mrb[0].mxu0
  %1957 = vmatprep.mubr.bf16.mxu0 0
  %1958 = vmatmul.mubr.bf16.gmra.mrb[0].mxu0 %v1160
  %v1959 = vpop.f32.mrb[0].mxu0
  %v1960 = vadd.f32 %v280, %v1959
  %v1961 = vpop.f32.mrb[0].mxu0
  %v1962 = vpop.f32.mrb[0].mxu0
  %v1963 = vadd.f32 %v280, %v1962
  %v1964 = vpop.f32.mrb[0].mxu0
  %1965 = vmatprep.mubr.bf16.mxu0 0
  %1966 = vmatmul.mubr.bf16.gmra.mrb[0].mxu0 %v1163
  %v1967 = vpop.f32.mrb[0].mxu0
  %v1968 = vadd.f32 %v280, %v1967
  %v1969 = vpop.f32.mrb[0].mxu0
  %v1970 = vpop.f32.mrb[0].mxu0
  %v1971 = vadd.f32 %v280, %v1970
  %v1972 = vpop.f32.mrb[0].mxu0
  %1973 = vmatprep.mubr.bf16.mxu0 0
  %1974 = vmatmul.mubr.bf16.gmra.mrb[0].mxu0 %v1166
  %v1975 = vpop.f32.mrb[0].mxu0
  %v1976 = vadd.f32 %v280, %v1975
  %v1977 = vpop.f32.mrb[0].mxu0
  %v1978 = vpop.f32.mrb[0].mxu0
  %v1979 = vadd.f32 %v280, %v1978
  %v1980 = vpop.f32.mrb[0].mxu0
  %1981 = vmatprep.mubr.bf16.mxu0 0
  %1982 = vmatmul.mubr.bf16.gmra.mrb[0].mxu0 %v1169
  %v1983 = vpop.f32.mrb[0].mxu0
  %v1984 = vadd.f32 %v280, %v1983
  %v1985 = vpop.f32.mrb[0].mxu0
  %v1986 = vpop.f32.mrb[0].mxu0
  %v1987 = vadd.f32 %v280, %v1986
  %v1988 = vpop.f32.mrb[0].mxu0
  %1989 = vmatprep.mubr.bf16.mxu0 0
  %1990 = vmatmul.mubr.bf16.gmra.mrb[0].mxu0 %v1172
  %v1991 = vpop.f32.mrb[0].mxu0
  %v1992 = vadd.f32 %v280, %v1991
  %v1993 = vpop.f32.mrb[0].mxu0
  %v1994 = vpop.f32.mrb[0].mxu0
  %v1995 = vadd.f32 %v280, %v1994
  %v1996 = vpop.f32.mrb[0].mxu0
  %1997 = vmatprep.mubr.bf16.mxu0 0
  %1998 = vmatmul.mubr.bf16.gmra.mrb[0].mxu0 %v1175
  %v1999 = vpop.f32.mrb[0].mxu0
  %v2000 = vadd.f32 %v280, %v1999
  %v2001 = vpop.f32.mrb[0].mxu0
  %v2002 = vpop.f32.mrb[0].mxu0
  %v2003 = vadd.f32 %v280, %v2002
  %v2004 = vpop.f32.mrb[0].mxu0
  %2005 = vmatprep.mubr.bf16.mxu0 0
  %2006 = vmatmul.mubr.bf16.gmra.mrb[0].mxu0 %v1178
  %v2007 = vpop.f32.mrb[0].mxu0
  %v2008 = vadd.f32 %v280, %v2007
  %v2009 = vpop.f32.mrb[0].mxu0
  %v2010 = vpop.f32.mrb[0].mxu0
  %v2011 = vadd.f32 %v280, %v2010
  %v2012 = vpop.f32.mrb[0].mxu0
  %2013 = vmatprep.mubr.bf16.mxu0 0
  %2014 = vmatmul.mubr.bf16.gmra.mrb[0].mxu0 %v1181
  %v2015 = vpop.f32.mrb[0].mxu0
  %v2016 = vadd.f32 %v280, %v2015
  %v2017 = vpop.f32.mrb[0].mxu0
  %v2018 = vpop.f32.mrb[0].mxu0
  %v2019 = vadd.f32 %v280, %v2018
  %v2020 = vpop.f32.mrb[0].mxu0
  %2021 = vmatprep.mubr.bf16.mxu0 0
  %2022 = vmatmul.mubr.bf16.gmra.mrb[0].mxu0 %v1184
  %v2023 = vpop.f32.mrb[0].mxu0
  %v2024 = vadd.f32 %v280, %v2023
  %v2025 = vpop.f32.mrb[0].mxu0
  %v2026 = vpop.f32.mrb[0].mxu0
  %v2027 = vadd.f32 %v280, %v2026
  %v2028 = vpop.f32.mrb[0].mxu0
  %2029 = vmatprep.mubr.bf16.mxu0 0
  %2030 = vmatmul.mubr.bf16.gmra.mrb[0].mxu0 %v1187
  %v2031 = vpop.f32.mrb[0].mxu0
  %v2032 = vadd.f32 %v280, %v2031
  %v2033 = vpop.f32.mrb[0].mxu0
  %v2034 = vpop.f32.mrb[0].mxu0
  %v2035 = vadd.f32 %v280, %v2034
  %v2036 = vpop.f32.mrb[0].mxu0
  %2037 = vmatprep.mubr.bf16.mxu0 0
  %2038 = vmatmul.mubr.bf16.gmra.mrb[0].mxu0 %v1190
  %v2039 = vpop.f32.mrb[0].mxu0
  %v2040 = vadd.f32 %v280, %v2039
  %v2041 = vpop.f32.mrb[0].mxu0
  %v2042 = vpop.f32.mrb[0].mxu0
  %v2043 = vadd.f32 %v280, %v2042
  %v2044 = vpop.f32.mrb[0].mxu0
  %2045 = vmatprep.mubr.bf16.mxu0 0
  %2046 = vmatmul.mubr.bf16.gmra.mrb[0].mxu0 %v1193
  %v2047 = vpop.f32.mrb[0].mxu0
  %v2048 = vadd.f32 %v280, %v2047
  %v2049 = vpop.f32.mrb[0].mxu0
  %v2050 = vpop.f32.mrb[0].mxu0
  %v2051 = vadd.f32 %v280, %v2050
  %v2052 = vpop.f32.mrb[0].mxu0
  %2053 = vmatprep.mubr.bf16.mxu0 0
  %2054 = vmatmul.mubr.bf16.gmra.mrb[0].mxu0 %v1196
  %v2055 = vpop.f32.mrb[0].mxu0
  %v2056 = vadd.f32 %v280, %v2055
  %v2057 = vpop.f32.mrb[0].mxu0
  %v2058 = vpop.f32.mrb[0].mxu0
  %v2059 = vadd.f32 %v280, %v2058
  %v2060 = vpop.f32.mrb[0].mxu0
  %2061 = vmatprep.mubr.bf16.mxu0 0
  %2062 = vmatmul.mubr.bf16.gmra.mrb[0].mxu0 %v1199
  %v2063 = vpop.f32.mrb[0].mxu0
  %v2064 = vadd.f32 %v280, %v2063
  %v2065 = vpop.f32.mrb[0].mxu0
  %v2066 = vpop.f32.mrb[0].mxu0
  %v2067 = vadd.f32 %v280, %v2066
  %v2068 = vpop.f32.mrb[0].mxu0
  %2069 = vmatprep.mubr.bf16.mxu0 0
  %2070 = vmatmul.mubr.bf16.gmra.mrb[0].mxu0 %v1202
  %v2071 = vpop.f32.mrb[0].mxu0
  %v2072 = vadd.f32 %v280, %v2071
  %v2073 = vpop.f32.mrb[0].mxu0
  %v2074 = vpop.f32.mrb[0].mxu0
  %v2075 = vadd.f32 %v280, %v2074
  %v2076 = vpop.f32.mrb[0].mxu0
  %2077 = vmatprep.mubr.bf16.mxu0 0
  %2078 = vmatmul.mubr.bf16.gmra.mrb[0].mxu0 %v1205
  %v2079 = vpop.f32.mrb[0].mxu0
  %v2080 = vadd.f32 %v280, %v2079
  %v2081 = vpop.f32.mrb[0].mxu0
  %v2082 = vpop.f32.mrb[0].mxu0
  %v2083 = vadd.f32 %v280, %v2082
  %v2084 = vpop.f32.mrb[0].mxu0
  %2085 = vmatprep.mubr.bf16.mxu0 0
  %2086 = vmatmul.mubr.bf16.gmra.mrb[0].mxu0 %v1208
  %v2087 = vpop.f32.mrb[0].mxu0
  %v2088 = vadd.f32 %v280, %v2087
  %v2089 = vpop.f32.mrb[0].mxu0
  %v2090 = vpop.f32.mrb[0].mxu0
  %v2091 = vadd.f32 %v280, %v2090
  %v2092 = vpop.f32.mrb[0].mxu0
  %2093 = vmatprep.mubr.bf16.mxu0 0
  %2094 = vmatmul.mubr.bf16.gmra.mrb[0].mxu0 %v1211
  %v2095 = vpop.f32.mrb[0].mxu0
  %v2096 = vadd.f32 %v280, %v2095
  %v2097 = vpop.f32.mrb[0].mxu0
  %v2098 = vpop.f32.mrb[0].mxu0
  %v2099 = vadd.f32 %v280, %v2098
  %v2100 = vpop.f32.mrb[0].mxu0
  %2101 = vmatprep.mubr.bf16.mxu0 0
  %2102 = vmatmul.mubr.bf16.gmra.mrb[0].mxu0 %v1214
  %v2103 = vpop.f32.mrb[0].mxu0
  %v2104 = vadd.f32 %v280, %v2103
  %v2105 = vpop.f32.mrb[0].mxu0
  %v2106 = vpop.f32.mrb[0].mxu0
  %v2107 = vadd.f32 %v280, %v2106
  %v2108 = vpop.f32.mrb[0].mxu0
  %2109 = vmatprep.mubr.bf16.mxu0 0
  %2110 = vmatmul.mubr.bf16.gmra.mrb[0].mxu0 %v1217
  %v2111 = vpop.f32.mrb[0].mxu0
  %v2112 = vadd.f32 %v280, %v2111
  %v2113 = vpop.f32.mrb[0].mxu0
  %v2114 = vpop.f32.mrb[0].mxu0
  %v2115 = vadd.f32 %v280, %v2114
  %v2116 = vpop.f32.mrb[0].mxu0
  %2117 = vmatprep.mubr.bf16.mxu0 0
  %2118 = vmatmul.mubr.bf16.gmra.mrb[0].mxu0 %v1220
  %v2119 = vpop.f32.mrb[0].mxu0
  %v2120 = vadd.f32 %v280, %v2119
  %v2121 = vpop.f32.mrb[0].mxu0
  %v2122 = vpop.f32.mrb[0].mxu0
  %v2123 = vadd.f32 %v280, %v2122
  %v2124 = vpop.f32.mrb[0].mxu0
  %2125 = vmatprep.mubr.bf16.mxu0 0
  %2126 = vmatmul.mubr.bf16.gmra.mrb[0].mxu0 %v1223
  %v2127 = vpop.f32.mrb[0].mxu0
  %v2128 = vadd.f32 %v280, %v2127
  %v2129 = vpop.f32.mrb[0].mxu0
  %v2130 = vpop.f32.mrb[0].mxu0
  %v2131 = vadd.f32 %v280, %v2130
  %v2132 = vpop.f32.mrb[0].mxu0
  %2133 = vmatprep.mubr.bf16.mxu0 0
  %2134 = vmatmul.mubr.bf16.gmra.mrb[0].mxu0 %v1226
  %v2135 = vpop.f32.mrb[0].mxu0
  %v2136 = vadd.f32 %v280, %v2135
  %v2137 = vpop.f32.mrb[0].mxu0
  %v2138 = vpop.f32.mrb[0].mxu0
  %v2139 = vadd.f32 %v280, %v2138
  %v2140 = vpop.f32.mrb[0].mxu0
  %2141 = vmatprep.mubr.bf16.mxu0 0
  %2142 = vmatmul.mubr.bf16.gmra.mrb[0].mxu0 %v1229
  %v2143 = vpop.f32.mrb[0].mxu0
  %v2144 = vadd.f32 %v280, %v2143
  %v2145 = vpop.f32.mrb[0].mxu0
  %v2146 = vpop.f32.mrb[0].mxu0
  %v2147 = vadd.f32 %v280, %v2146
  %v2148 = vpop.f32.mrb[0].mxu0
  %2149 = vmatprep.mubr.bf16.mxu0 0
  %2150 = vmatmul.mubr.bf16.gmra.mrb[0].mxu0 %v1232
  %v2151 = vpop.f32.mrb[0].mxu0
  %v2152 = vadd.f32 %v280, %v2151
  %v2153 = vpop.f32.mrb[0].mxu0
  %v2154 = vpop.f32.mrb[0].mxu0
  %v2155 = vadd.f32 %v280, %v2154
  %v2156 = vpop.f32.mrb[0].mxu0
  %2157 = vmatprep.mubr.bf16.mxu0 0
  %2158 = vmatmul.mubr.bf16.gmra.mrb[0].mxu0 %v1235
  %v2159 = vpop.f32.mrb[0].mxu0
  %v2160 = vadd.f32 %v280, %v2159
  %v2161 = vpop.f32.mrb[0].mxu0
  %v2162 = vpop.f32.mrb[0].mxu0
  %v2163 = vadd.f32 %v280, %v2162
  %v2164 = vpop.f32.mrb[0].mxu0
  %2165 = vmatprep.mubr.bf16.mxu0 0
  %2166 = vmatmul.mubr.bf16.gmra.mrb[0].mxu0 %v1238
  %v2167 = vpop.f32.mrb[0].mxu0
  %v2168 = vadd.f32 %v280, %v2167
  %v2169 = vpop.f32.mrb[0].mxu0
  %v2170 = vpop.f32.mrb[0].mxu0
  %v2171 = vadd.f32 %v280, %v2170
  %v2172 = vpop.f32.mrb[0].mxu0
  %2173 = vmatprep.mubr.bf16.mxu0 0
  %2174 = vmatmul.mubr.bf16.gmra.mrb[0].mxu0 %v1241
  %v2175 = vpop.f32.mrb[0].mxu0
  %v2176 = vadd.f32 %v280, %v2175
  %v2177 = vpop.f32.mrb[0].mxu0
  %v2178 = vpop.f32.mrb[0].mxu0
  %v2179 = vadd.f32 %v280, %v2178
  %v2180 = vpop.f32.mrb[0].mxu0
  %2181 = vmatprep.mubr.bf16.mxu0 0
  %2182 = vmatmul.mubr.bf16.gmra.mrb[0].mxu0 %v1244
  %v2183 = vpop.f32.mrb[0].mxu0
  %v2184 = vadd.f32 %v280, %v2183
  %v2185 = vpop.f32.mrb[0].mxu0
  %v2186 = vpop.f32.mrb[0].mxu0
  %v2187 = vadd.f32 %v280, %v2186
  %v2188 = vpop.f32.mrb[0].mxu0
  %2189 = vmatprep.mubr.bf16.mxu0 0
  %2190 = vmatmul.mubr.bf16.gmra.mrb[0].mxu0 %v1247
  %v2191 = vpop.f32.mrb[0].mxu0
  %v2192 = vadd.f32 %v280, %v2191
  %v2193 = vpop.f32.mrb[0].mxu0
  %v2194 = vpop.f32.mrb[0].mxu0
  %v2195 = vadd.f32 %v280, %v2194
  %v2196 = vpop.f32.mrb[0].mxu0
  %2197 = vmatprep.mubr.bf16.mxu0 0
  %2198 = vmatmul.mubr.bf16.gmra.mrb[0].mxu0 %v1250
  %v2199 = vpop.f32.mrb[0].mxu0
  %v2200 = vadd.f32 %v280, %v2199
  %v2201 = vpop.f32.mrb[0].mxu0
  %v2202 = vpop.f32.mrb[0].mxu0
  %v2203 = vadd.f32 %v280, %v2202
  %v2204 = vpop.f32.mrb[0].mxu0
  %2205 = vmatprep.mubr.bf16.mxu0 0
  %2206 = vmatmul.mubr.bf16.gmra.mrb[0].mxu0 %v1253
  %v2207 = vpop.f32.mrb[0].mxu0
  %v2208 = vadd.f32 %v280, %v2207
  %v2209 = vpop.f32.mrb[0].mxu0
  %v2210 = vpop.f32.mrb[0].mxu0
  %v2211 = vadd.f32 %v280, %v2210
  %v2212 = vpop.f32.mrb[0].mxu0
  %2213 = vmatprep.mubr.bf16.mxu0 0
  %2214 = vmatmul.mubr.bf16.gmra.mrb[0].mxu0 %v1256
  %v2215 = vpop.f32.mrb[0].mxu0
  %v2216 = vadd.f32 %v280, %v2215
  %v2217 = vpop.f32.mrb[0].mxu0
  %v2218 = vpop.f32.mrb[0].mxu0
  %v2219 = vadd.f32 %v280, %v2218
  %v2220 = vpop.f32.mrb[0].mxu0
  %2221 = vmatprep.mubr.bf16.mxu0 0
  %2222 = vmatmul.mubr.bf16.gmra.mrb[0].mxu0 %v1259
  %v2223 = vpop.f32.mrb[0].mxu0
  %v2224 = vadd.f32 %v280, %v2223
  %v2225 = vpop.f32.mrb[0].mxu0
  %v2226 = vpop.f32.mrb[0].mxu0
  %v2227 = vadd.f32 %v280, %v2226
  %v2228 = vpop.f32.mrb[0].mxu0
  %2229 = vmatprep.mubr.bf16.mxu0 0
  %2230 = vmatmul.mubr.bf16.gmra.mrb[0].mxu0 %v1262
  %v2231 = vpop.f32.mrb[0].mxu0
  %v2232 = vadd.f32 %v280, %v2231
  %v2233 = vpop.f32.mrb[0].mxu0
  %v2234 = vpop.f32.mrb[0].mxu0
  %v2235 = vadd.f32 %v280, %v2234
  %v2236 = vpop.f32.mrb[0].mxu0
  %2237 = vmatprep.mubr.bf16.mxu0 0
  %2238 = vmatmul.mubr.bf16.gmra.mrb[0].mxu0 %v1265
  %v2239 = vpop.f32.mrb[0].mxu0
  %v2240 = vadd.f32 %v280, %v2239
  %v2241 = vpop.f32.mrb[0].mxu0
  %v2242 = vpop.f32.mrb[0].mxu0
  %v2243 = vadd.f32 %v280, %v2242
  %v2244 = vpop.f32.mrb[0].mxu0
  %2245 = vmatprep.mubr.bf16.mxu0 0
  %2246 = vmatmul.mubr.bf16.gmra.mrb[0].mxu0 %v1268
  %v2247 = vpop.f32.mrb[0].mxu0
  %v2248 = vadd.f32 %v280, %v2247
  %v2249 = vpop.f32.mrb[0].mxu0
  %v2250 = vpop.f32.mrb[0].mxu0
  %v2251 = vadd.f32 %v280, %v2250
  %v2252 = vpop.f32.mrb[0].mxu0
  %2253 = vmatprep.mubr.bf16.mxu0 0
  %2254 = vmatmul.mubr.bf16.gmra.mrb[0].mxu0 %v1271
  %v2255 = vpop.f32.mrb[0].mxu0
  %v2256 = vadd.f32 %v280, %v2255
  %v2257 = vpop.f32.mrb[0].mxu0
  %v2258 = vpop.f32.mrb[0].mxu0
  %v2259 = vadd.f32 %v280, %v2258
  %v2260 = vpop.f32.mrb[0].mxu0
  %2261 = vmatprep.mubr.bf16.mxu0 0
  %2262 = vmatmul.mubr.bf16.gmra.mrb[0].mxu0 %v1274
  %v2263 = vpop.f32.mrb[0].mxu0
  %v2264 = vadd.f32 %v280, %v2263
  %v2265 = vpop.f32.mrb[0].mxu0
  %v2266 = vpop.f32.mrb[0].mxu0
  %v2267 = vadd.f32 %v280, %v2266
  %v2268 = vpop.f32.mrb[0].mxu0
  %2269 = vmatprep.mubr.bf16.mxu0 0
  %2270 = vmatmul.mubr.bf16.gmra.mrb[0].mxu0 %v1277
  %v2271 = vpop.f32.mrb[0].mxu0
  %v2272 = vadd.f32 %v280, %v2271
  %v2273 = vpop.f32.mrb[0].mxu0
  %v2274 = vpop.f32.mrb[0].mxu0
  %v2275 = vadd.f32 %v280, %v2274
  %v2276 = vpop.f32.mrb[0].mxu0
  %2277 = vmatprep.mubr.bf16.mxu0 0
  %2278 = vmatmul.mubr.bf16.gmra.mrb[0].mxu0 %v1280
  %v2279 = vpop.f32.mrb[0].mxu0
  %v2280 = vadd.f32 %v280, %v2279
  %v2281 = vpop.f32.mrb[0].mxu0
  %v2282 = vpop.f32.mrb[0].mxu0
  %v2283 = vadd.f32 %v280, %v2282
  %v2284 = vpop.f32.mrb[0].mxu0
  %2285 = vmatprep.mubr.bf16.mxu0 0
  %2286 = vmatmul.mubr.bf16.gmra.mrb[0].mxu0 %v1283
  %v2287 = vpop.f32.mrb[0].mxu0
  %v2288 = vadd.f32 %v280, %v2287
  %v2289 = vpop.f32.mrb[0].mxu0
  %v2290 = vpop.f32.mrb[0].mxu0
  %v2291 = vadd.f32 %v280, %v2290
  %v2292 = vpop.f32.mrb[0].mxu0
  %2293 = vmatprep.mubr.bf16.mxu0 0
  %2294 = vmatmul.mubr.bf16.gmra.mrb[0].mxu0 %v1286
  %v2295 = vpop.f32.mrb[0].mxu0
  %v2296 = vadd.f32 %v280, %v2295
  %v2297 = vpop.f32.mrb[0].mxu0
  %v2298 = vpop.f32.mrb[0].mxu0
  %v2299 = vadd.f32 %v280, %v2298
  %v2300 = vpop.f32.mrb[0].mxu0
  %2301 = vmatprep.mubr.bf16.mxu0 0
  %2302 = vmatmul.mubr.bf16.gmra.mrb[0].mxu0 %v1289
  %v2303 = vpop.f32.mrb[0].mxu0
  %v2304 = vadd.f32 %v280, %v2303
  %v2305 = vpop.f32.mrb[0].mxu0
  %v2306 = vpop.f32.mrb[0].mxu0
  %v2307 = vadd.f32 %v280, %v2306
  %v2308 = vpop.f32.mrb[0].mxu0
  %2309 = vmatprep.mubr.bf16.mxu0 0
  %2310 = vmatmul.mubr.bf16.gmra.mrb[0].mxu0 %v1292
  %v2311 = vpop.f32.mrb[0].mxu0
  %v2312 = vadd.f32 %v280, %v2311
  %v2313 = vpop.f32.mrb[0].mxu0
  %v2314 = vpop.f32.mrb[0].mxu0
  %v2315 = vadd.f32 %v280, %v2314
  %v2316 = vpop.f32.mrb[0].mxu0
  %2317 = vmatprep.mubr.bf16.mxu0 0
  %2318 = vmatmul.mubr.bf16.gmra.mrb[0].mxu0 %v1295
  %v2319 = vpop.f32.mrb[0].mxu0
  %v2320 = vadd.f32 %v280, %v2319
  %v2321 = vpop.f32.mrb[0].mxu0
  %v2322 = vpop.f32.mrb[0].mxu0
  %v2323 = vadd.f32 %v280, %v2322
  %v2324 = vpop.f32.mrb[0].mxu0
  %2325 = vmatprep.mubr.bf16.mxu0 0
  %2326 = vmatmul.mubr.bf16.gmra.mrb[0].mxu0 %v1298
  %v2327 = vpop.f32.mrb[0].mxu0
  %v2328 = vadd.f32 %v280, %v2327
  %v2329 = vpop.f32.mrb[0].mxu0
  %v2330 = vpop.f32.mrb[0].mxu0
  %v2331 = vadd.f32 %v280, %v2330
  %v2332 = vpop.f32.mrb[0].mxu0
  %2333 = vmatprep.mubr.bf16.mxu0 0
  %2334 = vmatmul.mubr.bf16.gmra.mrb[0].mxu0 %v1301
  %v2335 = vpop.f32.mrb[0].mxu0
  %v2336 = vadd.f32 %v280, %v2335
  %v2337 = vpop.f32.mrb[0].mxu0
  %v2338 = vpop.f32.mrb[0].mxu0
  %v2339 = vadd.f32 %v280, %v2338
  %v2340 = vpop.f32.mrb[0].mxu0
  %2341 = vmatprep.mubr.bf16.mxu0 0
  %2342 = vmatmul.mubr.bf16.gmra.mrb[0].mxu0 %v1304
  %v2343 = vpop.f32.mrb[0].mxu0
  %v2344 = vadd.f32 %v280, %v2343
  %v2345 = vpop.f32.mrb[0].mxu0
  %v2346 = vpop.f32.mrb[0].mxu0
  %v2347 = vadd.f32 %v280, %v2346
  %v2348 = vpop.f32.mrb[0].mxu0
  %2349 = vmatprep.mubr.bf16.mxu0 0
  %2350 = vmatmul.mubr.bf16.gmra.mrb[0].mxu0 %v1307
  %v2351 = vpop.f32.mrb[0].mxu0
  %v2352 = vadd.f32 %v280, %v2351
  %v2353 = vpop.f32.mrb[0].mxu0
  %v2354 = vpop.f32.mrb[0].mxu0
  %v2355 = vadd.f32 %v280, %v2354
  %v2356 = vpop.f32.mrb[0].mxu0
  %2357 = vmatprep.mubr.bf16.mxu0 0
  %2358 = vmatmul.mubr.bf16.gmra.mrb[0].mxu0 %v1310
  %v2359 = vpop.f32.mrb[0].mxu0
  %v2360 = vadd.f32 %v280, %v2359
  %v2361 = vpop.f32.mrb[0].mxu0
  %v2362 = vpop.f32.mrb[0].mxu0
  %v2363 = vadd.f32 %v280, %v2362
  %v2364 = vpop.f32.mrb[0].mxu0
  %2365 = vmatprep.mubr.bf16.mxu0 0
  %2366 = vmatmul.mubr.bf16.gmra.mrb[0].mxu0 %v1313
  %v2367 = vpop.f32.mrb[0].mxu0
  %v2368 = vadd.f32 %v280, %v2367
  %v2369 = vpop.f32.mrb[0].mxu0
  %v2370 = vpop.f32.mrb[0].mxu0
  %v2371 = vadd.f32 %v280, %v2370
  %v2372 = vpop.f32.mrb[0].mxu0
  %2373 = vmatprep.mubr.bf16.mxu0 0
  %2374 = vmatmul.mubr.bf16.gmra.mrb[0].mxu0 %v1316
  %v2375 = vpop.f32.mrb[0].mxu0
  %v2376 = vadd.f32 %v280, %v2375
  %v2377 = vpop.f32.mrb[0].mxu0
  %v2378 = vpop.f32.mrb[0].mxu0
  %v2379 = vadd.f32 %v280, %v2378
  %v2380 = vpop.f32.mrb[0].mxu0
  %2381 = vdwg.mxu0
  %v2382 = vadd.f32 %v1360, 3.0
  %v2383 = vadd.f32 %v1363, 3.0
  %v2384 = vadd.f32 %v1368, 3.0
  %v2385 = vadd.f32 %v1371, 3.0
  %v2386 = vadd.f32 %v1376, 3.0
  %v2387 = vadd.f32 %v1379, 3.0
  %v2388 = vadd.f32 %v1384, 3.0
  %v2389 = vadd.f32 %v1387, 3.0
  %v2390 = vadd.f32 %v1392, 3.0
  %v2391 = vadd.f32 %v1395, 3.0
  %v2392 = vadd.f32 %v1400, 3.0
  %v2393 = vadd.f32 %v1403, 3.0
  %v2394 = vadd.f32 %v1408, 3.0
  %v2395 = vadd.f32 %v1411, 3.0
  %v2396 = vadd.f32 %v1416, 3.0
  %v2397 = vadd.f32 %v1419, 3.0
  %v2398 = vadd.f32 %v1424, 3.0
  %v2399 = vadd.f32 %v1427, 3.0
  %v2400 = vadd.f32 %v1432, 3.0
  %v2401 = vadd.f32 %v1435, 3.0
  %v2402 = vadd.f32 %v1440, 3.0
  %v2403 = vadd.f32 %v1443, 3.0
  %v2404 = vadd.f32 %v1448, 3.0
  %v2405 = vadd.f32 %v1451, 3.0
  %v2406 = vadd.f32 %v1456, 3.0
  %v2407 = vadd.f32 %v1459, 3.0
  %v2408 = vadd.f32 %v1464, 3.0
  %v2409 = vadd.f32 %v1467, 3.0
  %v2410 = vadd.f32 %v1472, 3.0
  %v2411 = vadd.f32 %v1475, 3.0
  %v2412 = vadd.f32 %v1480, 3.0
  %v2413 = vadd.f32 %v1483, 3.0
  %v2414 = vadd.f32 %v1488, 3.0
  %v2415 = vadd.f32 %v1491, 3.0
  %v2416 = vadd.f32 %v1496, 3.0
  %v2417 = vadd.f32 %v1499, 3.0
  %v2418 = vadd.f32 %v1504, 3.0
  %v2419 = vadd.f32 %v1507, 3.0
  %v2420 = vadd.f32 %v1512, 3.0
  %v2421 = vadd.f32 %v1515, 3.0
  %v2422 = vadd.f32 %v1520, 3.0
  %v2423 = vadd.f32 %v1523, 3.0
  %v2424 = vadd.f32 %v1528, 3.0
  %v2425 = vadd.f32 %v1531, 3.0
  %v2426 = vadd.f32 %v1536, 3.0
  %v2427 = vadd.f32 %v1539, 3.0
  %v2428 = vadd.f32 %v1544, 3.0
  %v2429 = vadd.f32 %v1547, 3.0
  %v2430 = vadd.f32 %v1552, 3.0
  %v2431 = vadd.f32 %v1555, 3.0
  %v2432 = vadd.f32 %v1560, 3.0
  %v2433 = vadd.f32 %v1563, 3.0
  %v2434 = vadd.f32 %v1568, 3.0
  %v2435 = vadd.f32 %v1571, 3.0
  %v2436 = vadd.f32 %v1576, 3.0
  %v2437 = vadd.f32 %v1579, 3.0
  %v2438 = vadd.f32 %v1584, 3.0
  %v2439 = vadd.f32 %v1587, 3.0
  %v2440 = vadd.f32 %v1592, 3.0
  %v2441 = vadd.f32 %v1595, 3.0
  %v2442 = vadd.f32 %v1600, 3.0
  %v2443 = vadd.f32 %v1603, 3.0
  %v2444 = vadd.f32 %v1608, 3.0
  %v2445 = vadd.f32 %v1611, 3.0
  %v2446 = vadd.f32 %v1616, 3.0
  %v2447 = vadd.f32 %v1619, 3.0
  %v2448 = vadd.f32 %v1624, 3.0
  %v2449 = vadd.f32 %v1627, 3.0
  %v2450 = vadd.f32 %v1632, 3.0
  %v2451 = vadd.f32 %v1635, 3.0
  %v2452 = vadd.f32 %v1640, 3.0
  %v2453 = vadd.f32 %v1643, 3.0
  %v2454 = vadd.f32 %v1648, 3.0
  %v2455 = vadd.f32 %v1651, 3.0
  %v2456 = vadd.f32 %v1656, 3.0
  %v2457 = vadd.f32 %v1659, 3.0
  %v2458 = vadd.f32 %v1664, 3.0
  %v2459 = vadd.f32 %v1667, 3.0
  %v2460 = vadd.f32 %v1672, 3.0
  %v2461 = vadd.f32 %v1675, 3.0
  %v2462 = vadd.f32 %v1680, 3.0
  %v2463 = vadd.f32 %v1683, 3.0
  %v2464 = vadd.f32 %v1688, 3.0
  %v2465 = vadd.f32 %v1691, 3.0
  %v2466 = vadd.f32 %v1696, 3.0
  %v2467 = vadd.f32 %v1699, 3.0
  %v2468 = vadd.f32 %v1704, 3.0
  %v2469 = vadd.f32 %v1707, 3.0
  %v2470 = vadd.f32 %v1712, 3.0
  %v2471 = vadd.f32 %v1715, 3.0
  %v2472 = vadd.f32 %v1720, 3.0
  %v2473 = vadd.f32 %v1723, 3.0
  %v2474 = vadd.f32 %v1728, 3.0
  %v2475 = vadd.f32 %v1731, 3.0
  %v2476 = vadd.f32 %v1736, 3.0
  %v2477 = vadd.f32 %v1739, 3.0
  %v2478 = vadd.f32 %v1744, 3.0
  %v2479 = vadd.f32 %v1747, 3.0
  %v2480 = vadd.f32 %v1752, 3.0
  %v2481 = vadd.f32 %v1755, 3.0
  %v2482 = vadd.f32 %v1760, 3.0
  %v2483 = vadd.f32 %v1763, 3.0
  %v2484 = vadd.f32 %v1768, 3.0
  %v2485 = vadd.f32 %v1771, 3.0
  %v2486 = vadd.f32 %v1776, 3.0
  %v2487 = vadd.f32 %v1779, 3.0
  %v2488 = vadd.f32 %v1784, 3.0
  %v2489 = vadd.f32 %v1787, 3.0
  %v2490 = vadd.f32 %v1792, 3.0
  %v2491 = vadd.f32 %v1795, 3.0
  %v2492 = vadd.f32 %v1800, 3.0
  %v2493 = vadd.f32 %v1803, 3.0
  %v2494 = vadd.f32 %v1808, 3.0
  %v2495 = vadd.f32 %v1811, 3.0
  %v2496 = vadd.f32 %v1816, 3.0
  %v2497 = vadd.f32 %v1819, 3.0
  %v2498 = vadd.f32 %v1824, 3.0
  %v2499 = vadd.f32 %v1827, 3.0
  %v2500 = vadd.f32 %v1832, 3.0
  %v2501 = vadd.f32 %v1835, 3.0
  %v2502 = vadd.f32 %v1840, 3.0
  %v2503 = vadd.f32 %v1843, 3.0
  %v2504 = vadd.f32 %v1848, 3.0
  %v2505 = vadd.f32 %v1851, 3.0
  %v2506 = vadd.f32 %v1856, 3.0
  %v2507 = vadd.f32 %v1859, 3.0
  %v2508 = vadd.f32 %v1864, 3.0
  %v2509 = vadd.f32 %v1867, 3.0
  %v2510 = vadd.f32 %v1872, 3.0
  %v2511 = vadd.f32 %v1875, 3.0
  %v2512 = vadd.f32 %v1880, 3.0
  %v2513 = vadd.f32 %v1883, 3.0
  %v2514 = vadd.f32 %v1888, 3.0
  %v2515 = vadd.f32 %v1891, 3.0
  %v2516 = vadd.f32 %v1896, 3.0
  %v2517 = vadd.f32 %v1899, 3.0
  %v2518 = vadd.f32 %v1904, 3.0
  %v2519 = vadd.f32 %v1907, 3.0
  %v2520 = vadd.f32 %v1912, 3.0
  %v2521 = vadd.f32 %v1915, 3.0
  %v2522 = vadd.f32 %v1920, 3.0
  %v2523 = vadd.f32 %v1923, 3.0
  %v2524 = vadd.f32 %v1928, 3.0
  %v2525 = vadd.f32 %v1931, 3.0
  %v2526 = vadd.f32 %v1936, 3.0
  %v2527 = vadd.f32 %v1939, 3.0
  %v2528 = vadd.f32 %v1944, 3.0
  %v2529 = vadd.f32 %v1947, 3.0
  %v2530 = vadd.f32 %v1952, 3.0
  %v2531 = vadd.f32 %v1955, 3.0
  %v2532 = vadd.f32 %v1960, 3.0
  %v2533 = vadd.f32 %v1963, 3.0
  %v2534 = vadd.f32 %v1968, 3.0
  %v2535 = vadd.f32 %v1971, 3.0
  %v2536 = vadd.f32 %v1976, 3.0
  %v2537 = vadd.f32 %v1979, 3.0
  %v2538 = vadd.f32 %v1984, 3.0
  %v2539 = vadd.f32 %v1987, 3.0
  %v2540 = vadd.f32 %v1992, 3.0
  %v2541 = vadd.f32 %v1995, 3.0
  %v2542 = vadd.f32 %v2000, 3.0
  %v2543 = vadd.f32 %v2003, 3.0
  %v2544 = vadd.f32 %v2008, 3.0
  %v2545 = vadd.f32 %v2011, 3.0
  %v2546 = vadd.f32 %v2016, 3.0
  %v2547 = vadd.f32 %v2019, 3.0
  %v2548 = vadd.f32 %v2024, 3.0
  %v2549 = vadd.f32 %v2027, 3.0
  %v2550 = vadd.f32 %v2032, 3.0
  %v2551 = vadd.f32 %v2035, 3.0
  %v2552 = vadd.f32 %v2040, 3.0
  %v2553 = vadd.f32 %v2043, 3.0
  %v2554 = vadd.f32 %v2048, 3.0
  %v2555 = vadd.f32 %v2051, 3.0
  %v2556 = vadd.f32 %v2056, 3.0
  %v2557 = vadd.f32 %v2059, 3.0
  %v2558 = vadd.f32 %v2064, 3.0
  %v2559 = vadd.f32 %v2067, 3.0
  %v2560 = vadd.f32 %v2072, 3.0
  %v2561 = vadd.f32 %v2075, 3.0
  %v2562 = vadd.f32 %v2080, 3.0
  %v2563 = vadd.f32 %v2083, 3.0
  %v2564 = vadd.f32 %v2088, 3.0
  %v2565 = vadd.f32 %v2091, 3.0
  %v2566 = vadd.f32 %v2096, 3.0
  %v2567 = vadd.f32 %v2099, 3.0
  %v2568 = vadd.f32 %v2104, 3.0
  %v2569 = vadd.f32 %v2107, 3.0
  %v2570 = vadd.f32 %v2112, 3.0
  %v2571 = vadd.f32 %v2115, 3.0
  %v2572 = vadd.f32 %v2120, 3.0
  %v2573 = vadd.f32 %v2123, 3.0
  %v2574 = vadd.f32 %v2128, 3.0
  %v2575 = vadd.f32 %v2131, 3.0
  %v2576 = vadd.f32 %v2136, 3.0
  %v2577 = vadd.f32 %v2139, 3.0
  %v2578 = vadd.f32 %v2144, 3.0
  %v2579 = vadd.f32 %v2147, 3.0
  %v2580 = vadd.f32 %v2152, 3.0
  %v2581 = vadd.f32 %v2155, 3.0
  %v2582 = vadd.f32 %v2160, 3.0
  %v2583 = vadd.f32 %v2163, 3.0
  %v2584 = vadd.f32 %v2168, 3.0
  %v2585 = vadd.f32 %v2171, 3.0
  %v2586 = vadd.f32 %v2176, 3.0
  %v2587 = vadd.f32 %v2179, 3.0
  %v2588 = vadd.f32 %v2184, 3.0
  %v2589 = vadd.f32 %v2187, 3.0
  %v2590 = vadd.f32 %v2192, 3.0
  %v2591 = vadd.f32 %v2195, 3.0
  %v2592 = vadd.f32 %v2200, 3.0
  %v2593 = vadd.f32 %v2203, 3.0
  %v2594 = vadd.f32 %v2208, 3.0
  %v2595 = vadd.f32 %v2211, 3.0
  %v2596 = vadd.f32 %v2216, 3.0
  %v2597 = vadd.f32 %v2219, 3.0
  %v2598 = vadd.f32 %v2224, 3.0
  %v2599 = vadd.f32 %v2227, 3.0
  %v2600 = vadd.f32 %v2232, 3.0
  %v2601 = vadd.f32 %v2235, 3.0
  %v2602 = vadd.f32 %v2240, 3.0
  %v2603 = vadd.f32 %v2243, 3.0
  %v2604 = vadd.f32 %v2248, 3.0
  %v2605 = vadd.f32 %v2251, 3.0
  %v2606 = vadd.f32 %v2256, 3.0
  %v2607 = vadd.f32 %v2259, 3.0
  %v2608 = vadd.f32 %v2264, 3.0
  %v2609 = vadd.f32 %v2267, 3.0
  %v2610 = vadd.f32 %v2272, 3.0
  %v2611 = vadd.f32 %v2275, 3.0
  %v2612 = vadd.f32 %v2280, 3.0
  %v2613 = vadd.f32 %v2283, 3.0
  %v2614 = vadd.f32 %v2288, 3.0
  %v2615 = vadd.f32 %v2291, 3.0
  %v2616 = vadd.f32 %v2296, 3.0
  %v2617 = vadd.f32 %v2299, 3.0
  %v2618 = vadd.f32 %v2304, 3.0
  %v2619 = vadd.f32 %v2307, 3.0
  %v2620 = vadd.f32 %v2312, 3.0
  %v2621 = vadd.f32 %v2315, 3.0
  %v2622 = vadd.f32 %v2320, 3.0
  %v2623 = vadd.f32 %v2323, 3.0
  %v2624 = vadd.f32 %v2328, 3.0
  %v2625 = vadd.f32 %v2331, 3.0
  %v2626 = vadd.f32 %v2336, 3.0
  %v2627 = vadd.f32 %v2339, 3.0
  %v2628 = vadd.f32 %v2344, 3.0
  %v2629 = vadd.f32 %v2347, 3.0
  %v2630 = vadd.f32 %v2352, 3.0
  %v2631 = vadd.f32 %v2355, 3.0
  %v2632 = vadd.f32 %v2360, 3.0
  %v2633 = vadd.f32 %v2363, 3.0
  %v2634 = vadd.f32 %v2368, 3.0
  %v2635 = vadd.f32 %v2371, 3.0
  %v2636 = vadd.f32 %v2376, 3.0
  %v2637 = vadd.f32 %v2379, 3.0
  %v2638 = vmax.f32 %v2382, 0.0
  %v2639 = vmax.f32 %v2383, 0.0
  %v2640 = vmax.f32 %v2384, 0.0
  %v2641 = vmax.f32 %v2385, 0.0
  %v2642 = vmax.f32 %v2386, 0.0
  %v2643 = vmax.f32 %v2387, 0.0
  %v2644 = vmax.f32 %v2388, 0.0
  %v2645 = vmax.f32 %v2389, 0.0
  %v2646 = vmax.f32 %v2390, 0.0
  %v2647 = vmax.f32 %v2391, 0.0
  %v2648 = vmax.f32 %v2392, 0.0
  %v2649 = vmax.f32 %v2393, 0.0
  %v2650 = vmax.f32 %v2394, 0.0
  %v2651 = vmax.f32 %v2395, 0.0
  %v2652 = vmax.f32 %v2396, 0.0
  %v2653 = vmax.f32 %v2397, 0.0
  %v2654 = vmax.f32 %v2398, 0.0
  %v2655 = vmax.f32 %v2399, 0.0
  %v2656 = vmax.f32 %v2400, 0.0
  %v2657 = vmax.f32 %v2401, 0.0
  %v2658 = vmax.f32 %v2402, 0.0
  %v2659 = vmax.f32 %v2403, 0.0
  %v2660 = vmax.f32 %v2404, 0.0
  %v2661 = vmax.f32 %v2405, 0.0
  %v2662 = vmax.f32 %v2406, 0.0
  %v2663 = vmax.f32 %v2407, 0.0
  %v2664 = vmax.f32 %v2408, 0.0
  %v2665 = vmax.f32 %v2409, 0.0
  %v2666 = vmax.f32 %v2410, 0.0
  %v2667 = vmax.f32 %v2411, 0.0
  %v2668 = vmax.f32 %v2412, 0.0
  %v2669 = vmax.f32 %v2413, 0.0
  %v2670 = vmax.f32 %v2414, 0.0
  %v2671 = vmax.f32 %v2415, 0.0
  %v2672 = vmax.f32 %v2416, 0.0
  %v2673 = vmax.f32 %v2417, 0.0
  %v2674 = vmax.f32 %v2418, 0.0
  %v2675 = vmax.f32 %v2419, 0.0
  %v2676 = vmax.f32 %v2420, 0.0
  %v2677 = vmax.f32 %v2421, 0.0
  %v2678 = vmax.f32 %v2422, 0.0
  %v2679 = vmax.f32 %v2423, 0.0
  %v2680 = vmax.f32 %v2424, 0.0
  %v2681 = vmax.f32 %v2425, 0.0
  %v2682 = vmax.f32 %v2426, 0.0
  %v2683 = vmax.f32 %v2427, 0.0
  %v2684 = vmax.f32 %v2428, 0.0
  %v2685 = vmax.f32 %v2429, 0.0
  %v2686 = vmax.f32 %v2430, 0.0
  %v2687 = vmax.f32 %v2431, 0.0
  %v2688 = vmax.f32 %v2432, 0.0
  %v2689 = vmax.f32 %v2433, 0.0
  %v2690 = vmax.f32 %v2434, 0.0
  %v2691 = vmax.f32 %v2435, 0.0
  %v2692 = vmax.f32 %v2436, 0.0
  %v2693 = vmax.f32 %v2437, 0.0
  %v2694 = vmax.f32 %v2438, 0.0
  %v2695 = vmax.f32 %v2439, 0.0
  %v2696 = vmax.f32 %v2440, 0.0
  %v2697 = vmax.f32 %v2441, 0.0
  %v2698 = vmax.f32 %v2442, 0.0
  %v2699 = vmax.f32 %v2443, 0.0
  %v2700 = vmax.f32 %v2444, 0.0
  %v2701 = vmax.f32 %v2445, 0.0
  %v2702 = vmax.f32 %v2446, 0.0
  %v2703 = vmax.f32 %v2447, 0.0
  %v2704 = vmax.f32 %v2448, 0.0
  %v2705 = vmax.f32 %v2449, 0.0
  %v2706 = vmax.f32 %v2450, 0.0
  %v2707 = vmax.f32 %v2451, 0.0
  %v2708 = vmax.f32 %v2452, 0.0
  %v2709 = vmax.f32 %v2453, 0.0
  %v2710 = vmax.f32 %v2454, 0.0
  %v2711 = vmax.f32 %v2455, 0.0
  %v2712 = vmax.f32 %v2456, 0.0
  %v2713 = vmax.f32 %v2457, 0.0
  %v2714 = vmax.f32 %v2458, 0.0
  %v2715 = vmax.f32 %v2459, 0.0
  %v2716 = vmax.f32 %v2460, 0.0
  %v2717 = vmax.f32 %v2461, 0.0
  %v2718 = vmax.f32 %v2462, 0.0
  %v2719 = vmax.f32 %v2463, 0.0
  %v2720 = vmax.f32 %v2464, 0.0
  %v2721 = vmax.f32 %v2465, 0.0
  %v2722 = vmax.f32 %v2466, 0.0
  %v2723 = vmax.f32 %v2467, 0.0
  %v2724 = vmax.f32 %v2468, 0.0
  %v2725 = vmax.f32 %v2469, 0.0
  %v2726 = vmax.f32 %v2470, 0.0
  %v2727 = vmax.f32 %v2471, 0.0
  %v2728 = vmax.f32 %v2472, 0.0
  %v2729 = vmax.f32 %v2473, 0.0
  %v2730 = vmax.f32 %v2474, 0.0
  %v2731 = vmax.f32 %v2475, 0.0
  %v2732 = vmax.f32 %v2476, 0.0
  %v2733 = vmax.f32 %v2477, 0.0
  %v2734 = vmax.f32 %v2478, 0.0
  %v2735 = vmax.f32 %v2479, 0.0
  %v2736 = vmax.f32 %v2480, 0.0
  %v2737 = vmax.f32 %v2481, 0.0
  %v2738 = vmax.f32 %v2482, 0.0
  %v2739 = vmax.f32 %v2483, 0.0
  %v2740 = vmax.f32 %v2484, 0.0
  %v2741 = vmax.f32 %v2485, 0.0
  %v2742 = vmax.f32 %v2486, 0.0
  %v2743 = vmax.f32 %v2487, 0.0
  %v2744 = vmax.f32 %v2488, 0.0
  %v2745 = vmax.f32 %v2489, 0.0
  %v2746 = vmax.f32 %v2490, 0.0
  %v2747 = vmax.f32 %v2491, 0.0
  %v2748 = vmax.f32 %v2492, 0.0
  %v2749 = vmax.f32 %v2493, 0.0
  %v2750 = vmax.f32 %v2494, 0.0
  %v2751 = vmax.f32 %v2495, 0.0
  %v2752 = vmax.f32 %v2496, 0.0
  %v2753 = vmax.f32 %v2497, 0.0
  %v2754 = vmax.f32 %v2498, 0.0
  %v2755 = vmax.f32 %v2499, 0.0
  %v2756 = vmax.f32 %v2500, 0.0
  %v2757 = vmax.f32 %v2501, 0.0
  %v2758 = vmax.f32 %v2502, 0.0
  %v2759 = vmax.f32 %v2503, 0.0
  %v2760 = vmax.f32 %v2504, 0.0
  %v2761 = vmax.f32 %v2505, 0.0
  %v2762 = vmax.f32 %v2506, 0.0
  %v2763 = vmax.f32 %v2507, 0.0
  %v2764 = vmax.f32 %v2508, 0.0
  %v2765 = vmax.f32 %v2509, 0.0
  %v2766 = vmax.f32 %v2510, 0.0
  %v2767 = vmax.f32 %v2511, 0.0
  %v2768 = vmax.f32 %v2512, 0.0
  %v2769 = vmax.f32 %v2513, 0.0
  %v2770 = vmax.f32 %v2514, 0.0
  %v2771 = vmax.f32 %v2515, 0.0
  %v2772 = vmax.f32 %v2516, 0.0
  %v2773 = vmax.f32 %v2517, 0.0
  %v2774 = vmax.f32 %v2518, 0.0
  %v2775 = vmax.f32 %v2519, 0.0
  %v2776 = vmax.f32 %v2520, 0.0
  %v2777 = vmax.f32 %v2521, 0.0
  %v2778 = vmax.f32 %v2522, 0.0
  %v2779 = vmax.f32 %v2523, 0.0
  %v2780 = vmax.f32 %v2524, 0.0
  %v2781 = vmax.f32 %v2525, 0.0
  %v2782 = vmax.f32 %v2526, 0.0
  %v2783 = vmax.f32 %v2527, 0.0
  %v2784 = vmax.f32 %v2528, 0.0
  %v2785 = vmax.f32 %v2529, 0.0
  %v2786 = vmax.f32 %v2530, 0.0
  %v2787 = vmax.f32 %v2531, 0.0
  %v2788 = vmax.f32 %v2532, 0.0
  %v2789 = vmax.f32 %v2533, 0.0
  %v2790 = vmax.f32 %v2534, 0.0
  %v2791 = vmax.f32 %v2535, 0.0
  %v2792 = vmax.f32 %v2536, 0.0
  %v2793 = vmax.f32 %v2537, 0.0
  %v2794 = vmax.f32 %v2538, 0.0
  %v2795 = vmax.f32 %v2539, 0.0
  %v2796 = vmax.f32 %v2540, 0.0
  %v2797 = vmax.f32 %v2541, 0.0
  %v2798 = vmax.f32 %v2542, 0.0
  %v2799 = vmax.f32 %v2543, 0.0
  %v2800 = vmax.f32 %v2544, 0.0
  %v2801 = vmax.f32 %v2545, 0.0
  %v2802 = vmax.f32 %v2546, 0.0
  %v2803 = vmax.f32 %v2547, 0.0
  %v2804 = vmax.f32 %v2548, 0.0
  %v2805 = vmax.f32 %v2549, 0.0
  %v2806 = vmax.f32 %v2550, 0.0
  %v2807 = vmax.f32 %v2551, 0.0
  %v2808 = vmax.f32 %v2552, 0.0
  %v2809 = vmax.f32 %v2553, 0.0
  %v2810 = vmax.f32 %v2554, 0.0
  %v2811 = vmax.f32 %v2555, 0.0
  %v2812 = vmax.f32 %v2556, 0.0
  %v2813 = vmax.f32 %v2557, 0.0
  %v2814 = vmax.f32 %v2558, 0.0
  %v2815 = vmax.f32 %v2559, 0.0
  %v2816 = vmax.f32 %v2560, 0.0
  %v2817 = vmax.f32 %v2561, 0.0
  %v2818 = vmax.f32 %v2562, 0.0
  %v2819 = vmax.f32 %v2563, 0.0
  %v2820 = vmax.f32 %v2564, 0.0
  %v2821 = vmax.f32 %v2565, 0.0
  %v2822 = vmax.f32 %v2566, 0.0
  %v2823 = vmax.f32 %v2567, 0.0
  %v2824 = vmax.f32 %v2568, 0.0
  %v2825 = vmax.f32 %v2569, 0.0
  %v2826 = vmax.f32 %v2570, 0.0
  %v2827 = vmax.f32 %v2571, 0.0
  %v2828 = vmax.f32 %v2572, 0.0
  %v2829 = vmax.f32 %v2573, 0.0
  %v2830 = vmax.f32 %v2574, 0.0
  %v2831 = vmax.f32 %v2575, 0.0
  %v2832 = vmax.f32 %v2576, 0.0
  %v2833 = vmax.f32 %v2577, 0.0
  %v2834 = vmax.f32 %v2578, 0.0
  %v2835 = vmax.f32 %v2579, 0.0
  %v2836 = vmax.f32 %v2580, 0.0
  %v2837 = vmax.f32 %v2581, 0.0
  %v2838 = vmax.f32 %v2582, 0.0
  %v2839 = vmax.f32 %v2583, 0.0
  %v2840 = vmax.f32 %v2584, 0.0
  %v2841 = vmax.f32 %v2585, 0.0
  %v2842 = vmax.f32 %v2586, 0.0
  %v2843 = vmax.f32 %v2587, 0.0
  %v2844 = vmax.f32 %v2588, 0.0
  %v2845 = vmax.f32 %v2589, 0.0
  %v2846 = vmax.f32 %v2590, 0.0
  %v2847 = vmax.f32 %v2591, 0.0
  %v2848 = vmax.f32 %v2592, 0.0
  %v2849 = vmax.f32 %v2593, 0.0
  %v2850 = vmax.f32 %v2594, 0.0
  %v2851 = vmax.f32 %v2595, 0.0
  %v2852 = vmax.f32 %v2596, 0.0
  %v2853 = vmax.f32 %v2597, 0.0
  %v2854 = vmax.f32 %v2598, 0.0
  %v2855 = vmax.f32 %v2599, 0.0
  %v2856 = vmax.f32 %v2600, 0.0
  %v2857 = vmax.f32 %v2601, 0.0
  %v2858 = vmax.f32 %v2602, 0.0
  %v2859 = vmax.f32 %v2603, 0.0
  %v2860 = vmax.f32 %v2604, 0.0
  %v2861 = vmax.f32 %v2605, 0.0
  %v2862 = vmax.f32 %v2606, 0.0
  %v2863 = vmax.f32 %v2607, 0.0
  %v2864 = vmax.f32 %v2608, 0.0
  %v2865 = vmax.f32 %v2609, 0.0
  %v2866 = vmax.f32 %v2610, 0.0
  %v2867 = vmax.f32 %v2611, 0.0
  %v2868 = vmax.f32 %v2612, 0.0
  %v2869 = vmax.f32 %v2613, 0.0
  %v2870 = vmax.f32 %v2614, 0.0
  %v2871 = vmax.f32 %v2615, 0.0
  %v2872 = vmax.f32 %v2616, 0.0
  %v2873 = vmax.f32 %v2617, 0.0
  %v2874 = vmax.f32 %v2618, 0.0
  %v2875 = vmax.f32 %v2619, 0.0
  %v2876 = vmax.f32 %v2620, 0.0
  %v2877 = vmax.f32 %v2621, 0.0
  %v2878 = vmax.f32 %v2622, 0.0
  %v2879 = vmax.f32 %v2623, 0.0
  %v2880 = vmax.f32 %v2624, 0.0
  %v2881 = vmax.f32 %v2625, 0.0
  %v2882 = vmax.f32 %v2626, 0.0
  %v2883 = vmax.f32 %v2627, 0.0
  %v2884 = vmax.f32 %v2628, 0.0
  %v2885 = vmax.f32 %v2629, 0.0
  %v2886 = vmax.f32 %v2630, 0.0
  %v2887 = vmax.f32 %v2631, 0.0
  %v2888 = vmax.f32 %v2632, 0.0
  %v2889 = vmax.f32 %v2633, 0.0
  %v2890 = vmax.f32 %v2634, 0.0
  %v2891 = vmax.f32 %v2635, 0.0
  %v2892 = vmax.f32 %v2636, 0.0
  %v2893 = vmax.f32 %v2637, 0.0
  %v2894 = vmin.f32 %v2638, 6.0
  %v2895 = vmin.f32 %v2639, 6.0
  %v2896 = vmin.f32 %v2640, 6.0
  %v2897 = vmin.f32 %v2641, 6.0
  %v2898 = vmin.f32 %v2642, 6.0
  %v2899 = vmin.f32 %v2643, 6.0
  %v2900 = vmin.f32 %v2644, 6.0
  %v2901 = vmin.f32 %v2645, 6.0
  %v2902 = vmin.f32 %v2646, 6.0
  %v2903 = vmin.f32 %v2647, 6.0
  %v2904 = vmin.f32 %v2648, 6.0
  %v2905 = vmin.f32 %v2649, 6.0
  %v2906 = vmin.f32 %v2650, 6.0
  %v2907 = vmin.f32 %v2651, 6.0
  %v2908 = vmin.f32 %v2652, 6.0
  %v2909 = vmin.f32 %v2653, 6.0
  %v2910 = vmin.f32 %v2654, 6.0
  %v2911 = vmin.f32 %v2655, 6.0
  %v2912 = vmin.f32 %v2656, 6.0
  %v2913 = vmin.f32 %v2657, 6.0
  %v2914 = vmin.f32 %v2658, 6.0
  %v2915 = vmin.f32 %v2659, 6.0
  %v2916 = vmin.f32 %v2660, 6.0
  %v2917 = vmin.f32 %v2661, 6.0
  %v2918 = vmin.f32 %v2662, 6.0
  %v2919 = vmin.f32 %v2663, 6.0
  %v2920 = vmin.f32 %v2664, 6.0
  %v2921 = vmin.f32 %v2665, 6.0
  %v2922 = vmin.f32 %v2666, 6.0
  %v2923 = vmin.f32 %v2667, 6.0
  %v2924 = vmin.f32 %v2668, 6.0
  %v2925 = vmin.f32 %v2669, 6.0
  %v2926 = vmin.f32 %v2670, 6.0
  %v2927 = vmin.f32 %v2671, 6.0
  %v2928 = vmin.f32 %v2672, 6.0
  %v2929 = vmin.f32 %v2673, 6.0
  %v2930 = vmin.f32 %v2674, 6.0
  %v2931 = vmin.f32 %v2675, 6.0
  %v2932 = vmin.f32 %v2676, 6.0
  %v2933 = vmin.f32 %v2677, 6.0
  %v2934 = vmin.f32 %v2678, 6.0
  %v2935 = vmin.f32 %v2679, 6.0
  %v2936 = vmin.f32 %v2680, 6.0
  %v2937 = vmin.f32 %v2681, 6.0
  %v2938 = vmin.f32 %v2682, 6.0
  %v2939 = vmin.f32 %v2683, 6.0
  %v2940 = vmin.f32 %v2684, 6.0
  %v2941 = vmin.f32 %v2685, 6.0
  %v2942 = vmin.f32 %v2686, 6.0
  %v2943 = vmin.f32 %v2687, 6.0
  %v2944 = vmin.f32 %v2688, 6.0
  %v2945 = vmin.f32 %v2689, 6.0
  %v2946 = vmin.f32 %v2690, 6.0
  %v2947 = vmin.f32 %v2691, 6.0
  %v2948 = vmin.f32 %v2692, 6.0
  %v2949 = vmin.f32 %v2693, 6.0
  %v2950 = vmin.f32 %v2694, 6.0
  %v2951 = vmin.f32 %v2695, 6.0
  %v2952 = vmin.f32 %v2696, 6.0
  %v2953 = vmin.f32 %v2697, 6.0
  %v2954 = vmin.f32 %v2698, 6.0
  %v2955 = vmin.f32 %v2699, 6.0
  %v2956 = vmin.f32 %v2700, 6.0
  %v2957 = vmin.f32 %v2701, 6.0
  %v2958 = vmin.f32 %v2702, 6.0
  %v2959 = vmin.f32 %v2703, 6.0
  %v2960 = vmin.f32 %v2704, 6.0
  %v2961 = vmin.f32 %v2705, 6.0
  %v2962 = vmin.f32 %v2706, 6.0
  %v2963 = vmin.f32 %v2707, 6.0
  %v2964 = vmin.f32 %v2708, 6.0
  %v2965 = vmin.f32 %v2709, 6.0
  %v2966 = vmin.f32 %v2710, 6.0
  %v2967 = vmin.f32 %v2711, 6.0
  %v2968 = vmin.f32 %v2712, 6.0
  %v2969 = vmin.f32 %v2713, 6.0
  %v2970 = vmin.f32 %v2714, 6.0
  %v2971 = vmin.f32 %v2715, 6.0
  %v2972 = vmin.f32 %v2716, 6.0
  %v2973 = vmin.f32 %v2717, 6.0
  %v2974 = vmin.f32 %v2718, 6.0
  %v2975 = vmin.f32 %v2719, 6.0
  %v2976 = vmin.f32 %v2720, 6.0
  %v2977 = vmin.f32 %v2721, 6.0
  %v2978 = vmin.f32 %v2722, 6.0
  %v2979 = vmin.f32 %v2723, 6.0
  %v2980 = vmin.f32 %v2724, 6.0
  %v2981 = vmin.f32 %v2725, 6.0
  %v2982 = vmin.f32 %v2726, 6.0
  %v2983 = vmin.f32 %v2727, 6.0
  %v2984 = vmin.f32 %v2728, 6.0
  %v2985 = vmin.f32 %v2729, 6.0
  %v2986 = vmin.f32 %v2730, 6.0
  %v2987 = vmin.f32 %v2731, 6.0
  %v2988 = vmin.f32 %v2732, 6.0
  %v2989 = vmin.f32 %v2733, 6.0
  %v2990 = vmin.f32 %v2734, 6.0
  %v2991 = vmin.f32 %v2735, 6.0
  %v2992 = vmin.f32 %v2736, 6.0
  %v2993 = vmin.f32 %v2737, 6.0
  %v2994 = vmin.f32 %v2738, 6.0
  %v2995 = vmin.f32 %v2739, 6.0
  %v2996 = vmin.f32 %v2740, 6.0
  %v2997 = vmin.f32 %v2741, 6.0
  %v2998 = vmin.f32 %v2742, 6.0
  %v2999 = vmin.f32 %v2743, 6.0
  %v3000 = vmin.f32 %v2744, 6.0
  %v3001 = vmin.f32 %v2745, 6.0
  %v3002 = vmin.f32 %v2746, 6.0
  %v3003 = vmin.f32 %v2747, 6.0
  %v3004 = vmin.f32 %v2748, 6.0
  %v3005 = vmin.f32 %v2749, 6.0
  %v3006 = vmin.f32 %v2750, 6.0
  %v3007 = vmin.f32 %v2751, 6.0
  %v3008 = vmin.f32 %v2752, 6.0
  %v3009 = vmin.f32 %v2753, 6.0
  %v3010 = vmin.f32 %v2754, 6.0
  %v3011 = vmin.f32 %v2755, 6.0
  %v3012 = vmin.f32 %v2756, 6.0
  %v3013 = vmin.f32 %v2757, 6.0
  %v3014 = vmin.f32 %v2758, 6.0
  %v3015 = vmin.f32 %v2759, 6.0
  %v3016 = vmin.f32 %v2760, 6.0
  %v3017 = vmin.f32 %v2761, 6.0
  %v3018 = vmin.f32 %v2762, 6.0
  %v3019 = vmin.f32 %v2763, 6.0
  %v3020 = vmin.f32 %v2764, 6.0
  %v3021 = vmin.f32 %v2765, 6.0
  %v3022 = vmin.f32 %v2766, 6.0
  %v3023 = vmin.f32 %v2767, 6.0
  %v3024 = vmin.f32 %v2768, 6.0
  %v3025 = vmin.f32 %v2769, 6.0
  %v3026 = vmin.f32 %v2770, 6.0
  %v3027 = vmin.f32 %v2771, 6.0
  %v3028 = vmin.f32 %v2772, 6.0
  %v3029 = vmin.f32 %v2773, 6.0
  %v3030 = vmin.f32 %v2774, 6.0
  %v3031 = vmin.f32 %v2775, 6.0
  %v3032 = vmin.f32 %v2776, 6.0
  %v3033 = vmin.f32 %v2777, 6.0
  %v3034 = vmin.f32 %v2778, 6.0
  %v3035 = vmin.f32 %v2779, 6.0
  %v3036 = vmin.f32 %v2780, 6.0
  %v3037 = vmin.f32 %v2781, 6.0
  %v3038 = vmin.f32 %v2782, 6.0
  %v3039 = vmin.f32 %v2783, 6.0
  %v3040 = vmin.f32 %v2784, 6.0
  %v3041 = vmin.f32 %v2785, 6.0
  %v3042 = vmin.f32 %v2786, 6.0
  %v3043 = vmin.f32 %v2787, 6.0
  %v3044 = vmin.f32 %v2788, 6.0
  %v3045 = vmin.f32 %v2789, 6.0
  %v3046 = vmin.f32 %v2790, 6.0
  %v3047 = vmin.f32 %v2791, 6.0
  %v3048 = vmin.f32 %v2792, 6.0
  %v3049 = vmin.f32 %v2793, 6.0
  %v3050 = vmin.f32 %v2794, 6.0
  %v3051 = vmin.f32 %v2795, 6.0
  %v3052 = vmin.f32 %v2796, 6.0
  %v3053 = vmin.f32 %v2797, 6.0
  %v3054 = vmin.f32 %v2798, 6.0
  %v3055 = vmin.f32 %v2799, 6.0
  %v3056 = vmin.f32 %v2800, 6.0
  %v3057 = vmin.f32 %v2801, 6.0
  %v3058 = vmin.f32 %v2802, 6.0
  %v3059 = vmin.f32 %v2803, 6.0
  %v3060 = vmin.f32 %v2804, 6.0
  %v3061 = vmin.f32 %v2805, 6.0
  %v3062 = vmin.f32 %v2806, 6.0
  %v3063 = vmin.f32 %v2807, 6.0
  %v3064 = vmin.f32 %v2808, 6.0
  %v3065 = vmin.f32 %v2809, 6.0
  %v3066 = vmin.f32 %v2810, 6.0
  %v3067 = vmin.f32 %v2811, 6.0
  %v3068 = vmin.f32 %v2812, 6.0
  %v3069 = vmin.f32 %v2813, 6.0
  %v3070 = vmin.f32 %v2814, 6.0
  %v3071 = vmin.f32 %v2815, 6.0
  %v3072 = vmin.f32 %v2816, 6.0
  %v3073 = vmin.f32 %v2817, 6.0
  %v3074 = vmin.f32 %v2818, 6.0
  %v3075 = vmin.f32 %v2819, 6.0
  %v3076 = vmin.f32 %v2820, 6.0
  %v3077 = vmin.f32 %v2821, 6.0
  %v3078 = vmin.f32 %v2822, 6.0
  %v3079 = vmin.f32 %v2823, 6.0
  %v3080 = vmin.f32 %v2824, 6.0
  %v3081 = vmin.f32 %v2825, 6.0
  %v3082 = vmin.f32 %v2826, 6.0
  %v3083 = vmin.f32 %v2827, 6.0
  %v3084 = vmin.f32 %v2828, 6.0
  %v3085 = vmin.f32 %v2829, 6.0
  %v3086 = vmin.f32 %v2830, 6.0
  %v3087 = vmin.f32 %v2831, 6.0
  %v3088 = vmin.f32 %v2832, 6.0
  %v3089 = vmin.f32 %v2833, 6.0
  %v3090 = vmin.f32 %v2834, 6.0
  %v3091 = vmin.f32 %v2835, 6.0
  %v3092 = vmin.f32 %v2836, 6.0
  %v3093 = vmin.f32 %v2837, 6.0
  %v3094 = vmin.f32 %v2838, 6.0
  %v3095 = vmin.f32 %v2839, 6.0
  %v3096 = vmin.f32 %v2840, 6.0
  %v3097 = vmin.f32 %v2841, 6.0
  %v3098 = vmin.f32 %v2842, 6.0
  %v3099 = vmin.f32 %v2843, 6.0
  %v3100 = vmin.f32 %v2844, 6.0
  %v3101 = vmin.f32 %v2845, 6.0
  %v3102 = vmin.f32 %v2846, 6.0
  %v3103 = vmin.f32 %v2847, 6.0
  %v3104 = vmin.f32 %v2848, 6.0
  %v3105 = vmin.f32 %v2849, 6.0
  %v3106 = vmin.f32 %v2850, 6.0
  %v3107 = vmin.f32 %v2851, 6.0
  %v3108 = vmin.f32 %v2852, 6.0
  %v3109 = vmin.f32 %v2853, 6.0
  %v3110 = vmin.f32 %v2854, 6.0
  %v3111 = vmin.f32 %v2855, 6.0
  %v3112 = vmin.f32 %v2856, 6.0
  %v3113 = vmin.f32 %v2857, 6.0
  %v3114 = vmin.f32 %v2858, 6.0
  %v3115 = vmin.f32 %v2859, 6.0
  %v3116 = vmin.f32 %v2860, 6.0
  %v3117 = vmin.f32 %v2861, 6.0
  %v3118 = vmin.f32 %v2862, 6.0
  %v3119 = vmin.f32 %v2863, 6.0
  %v3120 = vmin.f32 %v2864, 6.0
  %v3121 = vmin.f32 %v2865, 6.0
  %v3122 = vmin.f32 %v2866, 6.0
  %v3123 = vmin.f32 %v2867, 6.0
  %v3124 = vmin.f32 %v2868, 6.0
  %v3125 = vmin.f32 %v2869, 6.0
  %v3126 = vmin.f32 %v2870, 6.0
  %v3127 = vmin.f32 %v2871, 6.0
  %v3128 = vmin.f32 %v2872, 6.0
  %v3129 = vmin.f32 %v2873, 6.0
  %v3130 = vmin.f32 %v2874, 6.0
  %v3131 = vmin.f32 %v2875, 6.0
  %v3132 = vmin.f32 %v2876, 6.0
  %v3133 = vmin.f32 %v2877, 6.0
  %v3134 = vmin.f32 %v2878, 6.0
  %v3135 = vmin.f32 %v2879, 6.0
  %v3136 = vmin.f32 %v2880, 6.0
  %v3137 = vmin.f32 %v2881, 6.0
  %v3138 = vmin.f32 %v2882, 6.0
  %v3139 = vmin.f32 %v2883, 6.0
  %v3140 = vmin.f32 %v2884, 6.0
  %v3141 = vmin.f32 %v2885, 6.0
  %v3142 = vmin.f32 %v2886, 6.0
  %v3143 = vmin.f32 %v2887, 6.0
  %v3144 = vmin.f32 %v2888, 6.0
  %v3145 = vmin.f32 %v2889, 6.0
  %v3146 = vmin.f32 %v2890, 6.0
  %v3147 = vmin.f32 %v2891, 6.0
  %v3148 = vmin.f32 %v2892, 6.0
  %v3149 = vmin.f32 %v2893, 6.0
  %v3150 = vmul.f32 %v1360, %v2894
  %v3151 = vmul.f32 %v1363, %v2895
  %v3152 = vmul.f32 %v1368, %v2896
  %v3153 = vmul.f32 %v1371, %v2897
  %v3154 = vmul.f32 %v1376, %v2898
  %v3155 = vmul.f32 %v1379, %v2899
  %v3156 = vmul.f32 %v1384, %v2900
  %v3157 = vmul.f32 %v1387, %v2901
  %v3158 = vmul.f32 %v1392, %v2902
  %v3159 = vmul.f32 %v1395, %v2903
  %v3160 = vmul.f32 %v1400, %v2904
  %v3161 = vmul.f32 %v1403, %v2905
  %v3162 = vmul.f32 %v1408, %v2906
  %v3163 = vmul.f32 %v1411, %v2907
  %v3164 = vmul.f32 %v1416, %v2908
  %v3165 = vmul.f32 %v1419, %v2909
  %v3166 = vmul.f32 %v1424, %v2910
  %v3167 = vmul.f32 %v1427, %v2911
  %v3168 = vmul.f32 %v1432, %v2912
  %v3169 = vmul.f32 %v1435, %v2913
  %v3170 = vmul.f32 %v1440, %v2914
  %v3171 = vmul.f32 %v1443, %v2915
  %v3172 = vmul.f32 %v1448, %v2916
  %v3173 = vmul.f32 %v1451, %v2917
  %v3174 = vmul.f32 %v1456, %v2918
  %v3175 = vmul.f32 %v1459, %v2919
  %v3176 = vmul.f32 %v1464, %v2920
  %v3177 = vmul.f32 %v1467, %v2921
  %v3178 = vmul.f32 %v1472, %v2922
  %v3179 = vmul.f32 %v1475, %v2923
  %v3180 = vmul.f32 %v1480, %v2924
  %v3181 = vmul.f32 %v1483, %v2925
  %v3182 = vmul.f32 %v1488, %v2926
  %v3183 = vmul.f32 %v1491, %v2927
  %v3184 = vmul.f32 %v1496, %v2928
  %v3185 = vmul.f32 %v1499, %v2929
  %v3186 = vmul.f32 %v1504, %v2930
  %v3187 = vmul.f32 %v1507, %v2931
  %v3188 = vmul.f32 %v1512, %v2932
  %v3189 = vmul.f32 %v1515, %v2933
  %v3190 = vmul.f32 %v1520, %v2934
  %v3191 = vmul.f32 %v1523, %v2935
  %v3192 = vmul.f32 %v1528, %v2936
  %v3193 = vmul.f32 %v1531, %v2937
  %v3194 = vmul.f32 %v1536, %v2938
  %v3195 = vmul.f32 %v1539, %v2939
  %v3196 = vmul.f32 %v1544, %v2940
  %v3197 = vmul.f32 %v1547, %v2941
  %v3198 = vmul.f32 %v1552, %v2942
  %v3199 = vmul.f32 %v1555, %v2943
  %v3200 = vmul.f32 %v1560, %v2944
  %v3201 = vmul.f32 %v1563, %v2945
  %v3202 = vmul.f32 %v1568, %v2946
  %v3203 = vmul.f32 %v1571, %v2947
  %v3204 = vmul.f32 %v1576, %v2948
  %v3205 = vmul.f32 %v1579, %v2949
  %v3206 = vmul.f32 %v1584, %v2950
  %v3207 = vmul.f32 %v1587, %v2951
  %v3208 = vmul.f32 %v1592, %v2952
  %v3209 = vmul.f32 %v1595, %v2953
  %v3210 = vmul.f32 %v1600, %v2954
  %v3211 = vmul.f32 %v1603, %v2955
  %v3212 = vmul.f32 %v1608, %v2956
  %v3213 = vmul.f32 %v1611, %v2957
  %v3214 = vmul.f32 %v1616, %v2958
  %v3215 = vmul.f32 %v1619, %v2959
  %v3216 = vmul.f32 %v1624, %v2960
  %v3217 = vmul.f32 %v1627, %v2961
  %v3218 = vmul.f32 %v1632, %v2962
  %v3219 = vmul.f32 %v1635, %v2963
  %v3220 = vmul.f32 %v1640, %v2964
  %v3221 = vmul.f32 %v1643, %v2965
  %v3222 = vmul.f32 %v1648, %v2966
  %v3223 = vmul.f32 %v1651, %v2967
  %v3224 = vmul.f32 %v1656, %v2968
  %v3225 = vmul.f32 %v1659, %v2969
  %v3226 = vmul.f32 %v1664, %v2970
  %v3227 = vmul.f32 %v1667, %v2971
  %v3228 = vmul.f32 %v1672, %v2972
  %v3229 = vmul.f32 %v1675, %v2973
  %v3230 = vmul.f32 %v1680, %v2974
  %v3231 = vmul.f32 %v1683, %v2975
  %v3232 = vmul.f32 %v1688, %v2976
  %v3233 = vmul.f32 %v1691, %v2977
  %v3234 = vmul.f32 %v1696, %v2978
  %v3235 = vmul.f32 %v1699, %v2979
  %v3236 = vmul.f32 %v1704, %v2980
  %v3237 = vmul.f32 %v1707, %v2981
  %v3238 = vmul.f32 %v1712, %v2982
  %v3239 = vmul.f32 %v1715, %v2983
  %v3240 = vmul.f32 %v1720, %v2984
  %v3241 = vmul.f32 %v1723, %v2985
  %v3242 = vmul.f32 %v1728, %v2986
  %v3243 = vmul.f32 %v1731, %v2987
  %v3244 = vmul.f32 %v1736, %v2988
  %v3245 = vmul.f32 %v1739, %v2989
  %v3246 = vmul.f32 %v1744, %v2990
  %v3247 = vmul.f32 %v1747, %v2991
  %v3248 = vmul.f32 %v1752, %v2992
  %v3249 = vmul.f32 %v1755, %v2993
  %v3250 = vmul.f32 %v1760, %v2994
  %v3251 = vmul.f32 %v1763, %v2995
  %v3252 = vmul.f32 %v1768, %v2996
  %v3253 = vmul.f32 %v1771, %v2997
  %v3254 = vmul.f32 %v1776, %v2998
  %v3255 = vmul.f32 %v1779, %v2999
  %v3256 = vmul.f32 %v1784, %v3000
  %v3257 = vmul.f32 %v1787, %v3001
  %v3258 = vmul.f32 %v1792, %v3002
  %v3259 = vmul.f32 %v1795, %v3003
  %v3260 = vmul.f32 %v1800, %v3004
  %v3261 = vmul.f32 %v1803, %v3005
  %v3262 = vmul.f32 %v1808, %v3006
  %v3263 = vmul.f32 %v1811, %v3007
  %v3264 = vmul.f32 %v1816, %v3008
  %v3265 = vmul.f32 %v1819, %v3009
  %v3266 = vmul.f32 %v1824, %v3010
  %v3267 = vmul.f32 %v1827, %v3011
  %v3268 = vmul.f32 %v1832, %v3012
  %v3269 = vmul.f32 %v1835, %v3013
  %v3270 = vmul.f32 %v1840, %v3014
  %v3271 = vmul.f32 %v1843, %v3015
  %v3272 = vmul.f32 %v1848, %v3016
  %v3273 = vmul.f32 %v1851, %v3017
  %v3274 = vmul.f32 %v1856, %v3018
  %v3275 = vmul.f32 %v1859, %v3019
  %v3276 = vmul.f32 %v1864, %v3020
  %v3277 = vmul.f32 %v1867, %v3021
  %v3278 = vmul.f32 %v1872, %v3022
  %v3279 = vmul.f32 %v1875, %v3023
  %v3280 = vmul.f32 %v1880, %v3024
  %v3281 = vmul.f32 %v1883, %v3025
  %v3282 = vmul.f32 %v1888, %v3026
  %v3283 = vmul.f32 %v1891, %v3027
  %v3284 = vmul.f32 %v1896, %v3028
  %v3285 = vmul.f32 %v1899, %v3029
  %v3286 = vmul.f32 %v1904, %v3030
  %v3287 = vmul.f32 %v1907, %v3031
  %v3288 = vmul.f32 %v1912, %v3032
  %v3289 = vmul.f32 %v1915, %v3033
  %v3290 = vmul.f32 %v1920, %v3034
  %v3291 = vmul.f32 %v1923, %v3035
  %v3292 = vmul.f32 %v1928, %v3036
  %v3293 = vmul.f32 %v1931, %v3037
  %v3294 = vmul.f32 %v1936, %v3038
  %v3295 = vmul.f32 %v1939, %v3039
  %v3296 = vmul.f32 %v1944, %v3040
  %v3297 = vmul.f32 %v1947, %v3041
  %v3298 = vmul.f32 %v1952, %v3042
  %v3299 = vmul.f32 %v1955, %v3043
  %v3300 = vmul.f32 %v1960, %v3044
  %v3301 = vmul.f32 %v1963, %v3045
  %v3302 = vmul.f32 %v1968, %v3046
  %v3303 = vmul.f32 %v1971, %v3047
  %v3304 = vmul.f32 %v1976, %v3048
  %v3305 = vmul.f32 %v1979, %v3049
  %v3306 = vmul.f32 %v1984, %v3050
  %v3307 = vmul.f32 %v1987, %v3051
  %v3308 = vmul.f32 %v1992, %v3052
  %v3309 = vmul.f32 %v1995, %v3053
  %v3310 = vmul.f32 %v2000, %v3054
  %v3311 = vmul.f32 %v2003, %v3055
  %v3312 = vmul.f32 %v2008, %v3056
  %v3313 = vmul.f32 %v2011, %v3057
  %v3314 = vmul.f32 %v2016, %v3058
  %v3315 = vmul.f32 %v2019, %v3059
  %v3316 = vmul.f32 %v2024, %v3060
  %v3317 = vmul.f32 %v2027, %v3061
  %v3318 = vmul.f32 %v2032, %v3062
  %v3319 = vmul.f32 %v2035, %v3063
  %v3320 = vmul.f32 %v2040, %v3064
  %v3321 = vmul.f32 %v2043, %v3065
  %v3322 = vmul.f32 %v2048, %v3066
  %v3323 = vmul.f32 %v2051, %v3067
  %v3324 = vmul.f32 %v2056, %v3068
  %v3325 = vmul.f32 %v2059, %v3069
  %v3326 = vmul.f32 %v2064, %v3070
  %v3327 = vmul.f32 %v2067, %v3071
  %v3328 = vmul.f32 %v2072, %v3072
  %v3329 = vmul.f32 %v2075, %v3073
  %v3330 = vmul.f32 %v2080, %v3074
  %v3331 = vmul.f32 %v2083, %v3075
  %v3332 = vmul.f32 %v2088, %v3076
  %v3333 = vmul.f32 %v2091, %v3077
  %v3334 = vmul.f32 %v2096, %v3078
  %v3335 = vmul.f32 %v2099, %v3079
  %v3336 = vmul.f32 %v2104, %v3080
  %v3337 = vmul.f32 %v2107, %v3081
  %v3338 = vmul.f32 %v2112, %v3082
  %v3339 = vmul.f32 %v2115, %v3083
  %v3340 = vmul.f32 %v2120, %v3084
  %v3341 = vmul.f32 %v2123, %v3085
  %v3342 = vmul.f32 %v2128, %v3086
  %v3343 = vmul.f32 %v2131, %v3087
  %v3344 = vmul.f32 %v2136, %v3088
  %v3345 = vmul.f32 %v2139, %v3089
  %v3346 = vmul.f32 %v2144, %v3090
  %v3347 = vmul.f32 %v2147, %v3091
  %v3348 = vmul.f32 %v2152, %v3092
  %v3349 = vmul.f32 %v2155, %v3093
  %v3350 = vmul.f32 %v2160, %v3094
  %v3351 = vmul.f32 %v2163, %v3095
  %v3352 = vmul.f32 %v2168, %v3096
  %v3353 = vmul.f32 %v2171, %v3097
  %v3354 = vmul.f32 %v2176, %v3098
  %v3355 = vmul.f32 %v2179, %v3099
  %v3356 = vmul.f32 %v2184, %v3100
  %v3357 = vmul.f32 %v2187, %v3101
  %v3358 = vmul.f32 %v2192, %v3102
  %v3359 = vmul.f32 %v2195, %v3103
  %v3360 = vmul.f32 %v2200, %v3104
  %v3361 = vmul.f32 %v2203, %v3105
  %v3362 = vmul.f32 %v2208, %v3106
  %v3363 = vmul.f32 %v2211, %v3107
  %v3364 = vmul.f32 %v2216, %v3108
  %v3365 = vmul.f32 %v2219, %v3109
  %v3366 = vmul.f32 %v2224, %v3110
  %v3367 = vmul.f32 %v2227, %v3111
  %v3368 = vmul.f32 %v2232, %v3112
  %v3369 = vmul.f32 %v2235, %v3113
  %v3370 = vmul.f32 %v2240, %v3114
  %v3371 = vmul.f32 %v2243, %v3115
  %v3372 = vmul.f32 %v2248, %v3116
  %v3373 = vmul.f32 %v2251, %v3117
  %v3374 = vmul.f32 %v2256, %v3118
  %v3375 = vmul.f32 %v2259, %v3119
  %v3376 = vmul.f32 %v2264, %v3120
  %v3377 = vmul.f32 %v2267, %v3121
  %v3378 = vmul.f32 %v2272, %v3122
  %v3379 = vmul.f32 %v2275, %v3123
  %v3380 = vmul.f32 %v2280, %v3124
  %v3381 = vmul.f32 %v2283, %v3125
  %v3382 = vmul.f32 %v2288, %v3126
  %v3383 = vmul.f32 %v2291, %v3127
  %v3384 = vmul.f32 %v2296, %v3128
  %v3385 = vmul.f32 %v2299, %v3129
  %v3386 = vmul.f32 %v2304, %v3130
  %v3387 = vmul.f32 %v2307, %v3131
  %v3388 = vmul.f32 %v2312, %v3132
  %v3389 = vmul.f32 %v2315, %v3133
  %v3390 = vmul.f32 %v2320, %v3134
  %v3391 = vmul.f32 %v2323, %v3135
  %v3392 = vmul.f32 %v2328, %v3136
  %v3393 = vmul.f32 %v2331, %v3137
  %v3394 = vmul.f32 %v2336, %v3138
  %v3395 = vmul.f32 %v2339, %v3139
  %v3396 = vmul.f32 %v2344, %v3140
  %v3397 = vmul.f32 %v2347, %v3141
  %v3398 = vmul.f32 %v2352, %v3142
  %v3399 = vmul.f32 %v2355, %v3143
  %v3400 = vmul.f32 %v2360, %v3144
  %v3401 = vmul.f32 %v2363, %v3145
  %v3402 = vmul.f32 %v2368, %v3146
  %v3403 = vmul.f32 %v2371, %v3147
  %v3404 = vmul.f32 %v2376, %v3148
  %v3405 = vmul.f32 %v2379, %v3149
  %v3406 = vmul.f32 %v3150, 0.16666667
  %v3407 = vmul.f32 %v3151, 0.16666667
  %v3408 = vmul.f32 %v3152, 0.16666667
  %v3409 = vmul.f32 %v3153, 0.16666667
  %v3410 = vmul.f32 %v3154, 0.16666667
  %v3411 = vmul.f32 %v3155, 0.16666667
  %v3412 = vmul.f32 %v3156, 0.16666667
  %v3413 = vmul.f32 %v3157, 0.16666667
  %v3414 = vmul.f32 %v3158, 0.16666667
  %v3415 = vmul.f32 %v3159, 0.16666667
  %v3416 = vmul.f32 %v3160, 0.16666667
  %v3417 = vmul.f32 %v3161, 0.16666667
  %v3418 = vmul.f32 %v3162, 0.16666667
  %v3419 = vmul.f32 %v3163, 0.16666667
  %v3420 = vmul.f32 %v3164, 0.16666667
  %v3421 = vmul.f32 %v3165, 0.16666667
  %v3422 = vmul.f32 %v3166, 0.16666667
  %v3423 = vmul.f32 %v3167, 0.16666667
  %v3424 = vmul.f32 %v3168, 0.16666667
  %v3425 = vmul.f32 %v3169, 0.16666667
  %v3426 = vmul.f32 %v3170, 0.16666667
  %v3427 = vmul.f32 %v3171, 0.16666667
  %v3428 = vmul.f32 %v3172, 0.16666667
  %v3429 = vmul.f32 %v3173, 0.16666667
  %v3430 = vmul.f32 %v3174, 0.16666667
  %v3431 = vmul.f32 %v3175, 0.16666667
  %v3432 = vmul.f32 %v3176, 0.16666667
  %v3433 = vmul.f32 %v3177, 0.16666667
  %v3434 = vmul.f32 %v3178, 0.16666667
  %v3435 = vmul.f32 %v3179, 0.16666667
  %v3436 = vmul.f32 %v3180, 0.16666667
  %v3437 = vmul.f32 %v3181, 0.16666667
  %v3438 = vmul.f32 %v3182, 0.16666667
  %v3439 = vmul.f32 %v3183, 0.16666667
  %v3440 = vmul.f32 %v3184, 0.16666667
  %v3441 = vmul.f32 %v3185, 0.16666667
  %v3442 = vmul.f32 %v3186, 0.16666667
  %v3443 = vmul.f32 %v3187, 0.16666667
  %v3444 = vmul.f32 %v3188, 0.16666667
  %v3445 = vmul.f32 %v3189, 0.16666667
  %v3446 = vmul.f32 %v3190, 0.16666667
  %v3447 = vmul.f32 %v3191, 0.16666667
  %v3448 = vmul.f32 %v3192, 0.16666667
  %v3449 = vmul.f32 %v3193, 0.16666667
  %v3450 = vmul.f32 %v3194, 0.16666667
  %v3451 = vmul.f32 %v3195, 0.16666667
  %v3452 = vmul.f32 %v3196, 0.16666667
  %v3453 = vmul.f32 %v3197, 0.16666667
  %v3454 = vmul.f32 %v3198, 0.16666667
  %v3455 = vmul.f32 %v3199, 0.16666667
  %v3456 = vmul.f32 %v3200, 0.16666667
  %v3457 = vmul.f32 %v3201, 0.16666667
  %v3458 = vmul.f32 %v3202, 0.16666667
  %v3459 = vmul.f32 %v3203, 0.16666667
  %v3460 = vmul.f32 %v3204, 0.16666667
  %v3461 = vmul.f32 %v3205, 0.16666667
  %v3462 = vmul.f32 %v3206, 0.16666667
  %v3463 = vmul.f32 %v3207, 0.16666667
  %v3464 = vmul.f32 %v3208, 0.16666667
  %v3465 = vmul.f32 %v3209, 0.16666667
  %v3466 = vmul.f32 %v3210, 0.16666667
  %v3467 = vmul.f32 %v3211, 0.16666667
  %v3468 = vmul.f32 %v3212, 0.16666667
  %v3469 = vmul.f32 %v3213, 0.16666667
  %v3470 = vmul.f32 %v3214, 0.16666667
  %v3471 = vmul.f32 %v3215, 0.16666667
  %v3472 = vmul.f32 %v3216, 0.16666667
  %v3473 = vmul.f32 %v3217, 0.16666667
  %v3474 = vmul.f32 %v3218, 0.16666667
  %v3475 = vmul.f32 %v3219, 0.16666667
  %v3476 = vmul.f32 %v3220, 0.16666667
  %v3477 = vmul.f32 %v3221, 0.16666667
  %v3478 = vmul.f32 %v3222, 0.16666667
  %v3479 = vmul.f32 %v3223, 0.16666667
  %v3480 = vmul.f32 %v3224, 0.16666667
  %v3481 = vmul.f32 %v3225, 0.16666667
  %v3482 = vmul.f32 %v3226, 0.16666667
  %v3483 = vmul.f32 %v3227, 0.16666667
  %v3484 = vmul.f32 %v3228, 0.16666667
  %v3485 = vmul.f32 %v3229, 0.16666667
  %v3486 = vmul.f32 %v3230, 0.16666667
  %v3487 = vmul.f32 %v3231, 0.16666667
  %v3488 = vmul.f32 %v3232, 0.16666667
  %v3489 = vmul.f32 %v3233, 0.16666667
  %v3490 = vmul.f32 %v3234, 0.16666667
  %v3491 = vmul.f32 %v3235, 0.16666667
  %v3492 = vmul.f32 %v3236, 0.16666667
  %v3493 = vmul.f32 %v3237, 0.16666667
  %v3494 = vmul.f32 %v3238, 0.16666667
  %v3495 = vmul.f32 %v3239, 0.16666667
  %v3496 = vmul.f32 %v3240, 0.16666667
  %v3497 = vmul.f32 %v3241, 0.16666667
  %v3498 = vmul.f32 %v3242, 0.16666667
  %v3499 = vmul.f32 %v3243, 0.16666667
  %v3500 = vmul.f32 %v3244, 0.16666667
  %v3501 = vmul.f32 %v3245, 0.16666667
  %v3502 = vmul.f32 %v3246, 0.16666667
  %v3503 = vmul.f32 %v3247, 0.16666667
  %v3504 = vmul.f32 %v3248, 0.16666667
  %v3505 = vmul.f32 %v3249, 0.16666667
  %v3506 = vmul.f32 %v3250, 0.16666667
  %v3507 = vmul.f32 %v3251, 0.16666667
  %v3508 = vmul.f32 %v3252, 0.16666667
  %v3509 = vmul.f32 %v3253, 0.16666667
  %v3510 = vmul.f32 %v3254, 0.16666667
  %v3511 = vmul.f32 %v3255, 0.16666667
  %v3512 = vmul.f32 %v3256, 0.16666667
  %v3513 = vmul.f32 %v3257, 0.16666667
  %v3514 = vmul.f32 %v3258, 0.16666667
  %v3515 = vmul.f32 %v3259, 0.16666667
  %v3516 = vmul.f32 %v3260, 0.16666667
  %v3517 = vmul.f32 %v3261, 0.16666667
  %v3518 = vmul.f32 %v3262, 0.16666667
  %v3519 = vmul.f32 %v3263, 0.16666667
  %v3520 = vmul.f32 %v3264, 0.16666667
  %v3521 = vmul.f32 %v3265, 0.16666667
  %v3522 = vmul.f32 %v3266, 0.16666667
  %v3523 = vmul.f32 %v3267, 0.16666667
  %v3524 = vmul.f32 %v3268, 0.16666667
  %v3525 = vmul.f32 %v3269, 0.16666667
  %v3526 = vmul.f32 %v3270, 0.16666667
  %v3527 = vmul.f32 %v3271, 0.16666667
  %v3528 = vmul.f32 %v3272, 0.16666667
  %v3529 = vmul.f32 %v3273, 0.16666667
  %v3530 = vmul.f32 %v3274, 0.16666667
  %v3531 = vmul.f32 %v3275, 0.16666667
  %v3532 = vmul.f32 %v3276, 0.16666667
  %v3533 = vmul.f32 %v3277, 0.16666667
  %v3534 = vmul.f32 %v3278, 0.16666667
  %v3535 = vmul.f32 %v3279, 0.16666667
  %v3536 = vmul.f32 %v3280, 0.16666667
  %v3537 = vmul.f32 %v3281, 0.16666667
  %v3538 = vmul.f32 %v3282, 0.16666667
  %v3539 = vmul.f32 %v3283, 0.16666667
  %v3540 = vmul.f32 %v3284, 0.16666667
  %v3541 = vmul.f32 %v3285, 0.16666667
  %v3542 = vmul.f32 %v3286, 0.16666667
  %v3543 = vmul.f32 %v3287, 0.16666667
  %v3544 = vmul.f32 %v3288, 0.16666667
  %v3545 = vmul.f32 %v3289, 0.16666667
  %v3546 = vmul.f32 %v3290, 0.16666667
  %v3547 = vmul.f32 %v3291, 0.16666667
  %v3548 = vmul.f32 %v3292, 0.16666667
  %v3549 = vmul.f32 %v3293, 0.16666667
  %v3550 = vmul.f32 %v3294, 0.16666667
  %v3551 = vmul.f32 %v3295, 0.16666667
  %v3552 = vmul.f32 %v3296, 0.16666667
  %v3553 = vmul.f32 %v3297, 0.16666667
  %v3554 = vmul.f32 %v3298, 0.16666667
  %v3555 = vmul.f32 %v3299, 0.16666667
  %v3556 = vmul.f32 %v3300, 0.16666667
  %v3557 = vmul.f32 %v3301, 0.16666667
  %v3558 = vmul.f32 %v3302, 0.16666667
  %v3559 = vmul.f32 %v3303, 0.16666667
  %v3560 = vmul.f32 %v3304, 0.16666667
  %v3561 = vmul.f32 %v3305, 0.16666667
  %v3562 = vmul.f32 %v3306, 0.16666667
  %v3563 = vmul.f32 %v3307, 0.16666667
  %v3564 = vmul.f32 %v3308, 0.16666667
  %v3565 = vmul.f32 %v3309, 0.16666667
  %v3566 = vmul.f32 %v3310, 0.16666667
  %v3567 = vmul.f32 %v3311, 0.16666667
  %v3568 = vmul.f32 %v3312, 0.16666667
  %v3569 = vmul.f32 %v3313, 0.16666667
  %v3570 = vmul.f32 %v3314, 0.16666667
  %v3571 = vmul.f32 %v3315, 0.16666667
  %v3572 = vmul.f32 %v3316, 0.16666667
  %v3573 = vmul.f32 %v3317, 0.16666667
  %v3574 = vmul.f32 %v3318, 0.16666667
  %v3575 = vmul.f32 %v3319, 0.16666667
  %v3576 = vmul.f32 %v3320, 0.16666667
  %v3577 = vmul.f32 %v3321, 0.16666667
  %v3578 = vmul.f32 %v3322, 0.16666667
  %v3579 = vmul.f32 %v3323, 0.16666667
  %v3580 = vmul.f32 %v3324, 0.16666667
  %v3581 = vmul.f32 %v3325, 0.16666667
  %v3582 = vmul.f32 %v3326, 0.16666667
  %v3583 = vmul.f32 %v3327, 0.16666667
  %v3584 = vmul.f32 %v3328, 0.16666667
  %v3585 = vmul.f32 %v3329, 0.16666667
  %v3586 = vmul.f32 %v3330, 0.16666667
  %v3587 = vmul.f32 %v3331, 0.16666667
  %v3588 = vmul.f32 %v3332, 0.16666667
  %v3589 = vmul.f32 %v3333, 0.16666667
  %v3590 = vmul.f32 %v3334, 0.16666667
  %v3591 = vmul.f32 %v3335, 0.16666667
  %v3592 = vmul.f32 %v3336, 0.16666667
  %v3593 = vmul.f32 %v3337, 0.16666667
  %v3594 = vmul.f32 %v3338, 0.16666667
  %v3595 = vmul.f32 %v3339, 0.16666667
  %v3596 = vmul.f32 %v3340, 0.16666667
  %v3597 = vmul.f32 %v3341, 0.16666667
  %v3598 = vmul.f32 %v3342, 0.16666667
  %v3599 = vmul.f32 %v3343, 0.16666667
  %v3600 = vmul.f32 %v3344, 0.16666667
  %v3601 = vmul.f32 %v3345, 0.16666667
  %v3602 = vmul.f32 %v3346, 0.16666667
  %v3603 = vmul.f32 %v3347, 0.16666667
  %v3604 = vmul.f32 %v3348, 0.16666667
  %v3605 = vmul.f32 %v3349, 0.16666667
  %v3606 = vmul.f32 %v3350, 0.16666667
  %v3607 = vmul.f32 %v3351, 0.16666667
  %v3608 = vmul.f32 %v3352, 0.16666667
  %v3609 = vmul.f32 %v3353, 0.16666667
  %v3610 = vmul.f32 %v3354, 0.16666667
  %v3611 = vmul.f32 %v3355, 0.16666667
  %v3612 = vmul.f32 %v3356, 0.16666667
  %v3613 = vmul.f32 %v3357, 0.16666667
  %v3614 = vmul.f32 %v3358, 0.16666667
  %v3615 = vmul.f32 %v3359, 0.16666667
  %v3616 = vmul.f32 %v3360, 0.16666667
  %v3617 = vmul.f32 %v3361, 0.16666667
  %v3618 = vmul.f32 %v3362, 0.16666667
  %v3619 = vmul.f32 %v3363, 0.16666667
  %v3620 = vmul.f32 %v3364, 0.16666667
  %v3621 = vmul.f32 %v3365, 0.16666667
  %v3622 = vmul.f32 %v3366, 0.16666667
  %v3623 = vmul.f32 %v3367, 0.16666667
  %v3624 = vmul.f32 %v3368, 0.16666667
  %v3625 = vmul.f32 %v3369, 0.16666667
  %v3626 = vmul.f32 %v3370, 0.16666667
  %v3627 = vmul.f32 %v3371, 0.16666667
  %v3628 = vmul.f32 %v3372, 0.16666667
  %v3629 = vmul.f32 %v3373, 0.16666667
  %v3630 = vmul.f32 %v3374, 0.16666667
  %v3631 = vmul.f32 %v3375, 0.16666667
  %v3632 = vmul.f32 %v3376, 0.16666667
  %v3633 = vmul.f32 %v3377, 0.16666667
  %v3634 = vmul.f32 %v3378, 0.16666667
  %v3635 = vmul.f32 %v3379, 0.16666667
  %v3636 = vmul.f32 %v3380, 0.16666667
  %v3637 = vmul.f32 %v3381, 0.16666667
  %v3638 = vmul.f32 %v3382, 0.16666667
  %v3639 = vmul.f32 %v3383, 0.16666667
  %v3640 = vmul.f32 %v3384, 0.16666667
  %v3641 = vmul.f32 %v3385, 0.16666667
  %v3642 = vmul.f32 %v3386, 0.16666667
  %v3643 = vmul.f32 %v3387, 0.16666667
  %v3644 = vmul.f32 %v3388, 0.16666667
  %v3645 = vmul.f32 %v3389, 0.16666667
  %v3646 = vmul.f32 %v3390, 0.16666667
  %v3647 = vmul.f32 %v3391, 0.16666667
  %v3648 = vmul.f32 %v3392, 0.16666667
  %v3649 = vmul.f32 %v3393, 0.16666667
  %v3650 = vmul.f32 %v3394, 0.16666667
  %v3651 = vmul.f32 %v3395, 0.16666667
  %v3652 = vmul.f32 %v3396, 0.16666667
  %v3653 = vmul.f32 %v3397, 0.16666667
  %v3654 = vmul.f32 %v3398, 0.16666667
  %v3655 = vmul.f32 %v3399, 0.16666667
  %v3656 = vmul.f32 %v3400, 0.16666667
  %v3657 = vmul.f32 %v3401, 0.16666667
  %v3658 = vmul.f32 %v3402, 0.16666667
  %v3659 = vmul.f32 %v3403, 0.16666667
  %v3660 = vmul.f32 %v3404, 0.16666667
  %v3661 = vmul.f32 %v3405, 0.16666667
  %v3662 = vpack.c.bf16 %v3407, %v3406
  %v3663 = vpack.c.bf16 %v3409, %v3408
  %v3664 = vpack.c.bf16 %v3411, %v3410
  %v3665 = vpack.c.bf16 %v3413, %v3412
  %v3666 = vpack.c.bf16 %v3415, %v3414
  %v3667 = vpack.c.bf16 %v3417, %v3416
  %v3668 = vpack.c.bf16 %v3419, %v3418
  %v3669 = vpack.c.bf16 %v3421, %v3420
  %v3670 = vpack.c.bf16 %v3423, %v3422
  %v3671 = vpack.c.bf16 %v3425, %v3424
  %v3672 = vpack.c.bf16 %v3427, %v3426
  %v3673 = vpack.c.bf16 %v3429, %v3428
  %v3674 = vpack.c.bf16 %v3431, %v3430
  %v3675 = vpack.c.bf16 %v3433, %v3432
  %v3676 = vpack.c.bf16 %v3435, %v3434
  %v3677 = vpack.c.bf16 %v3437, %v3436
  %v3678 = vpack.c.bf16 %v3439, %v3438
  %v3679 = vpack.c.bf16 %v3441, %v3440
  %v3680 = vpack.c.bf16 %v3443, %v3442
  %v3681 = vpack.c.bf16 %v3445, %v3444
  %v3682 = vpack.c.bf16 %v3447, %v3446
  %v3683 = vpack.c.bf16 %v3449, %v3448
  %v3684 = vpack.c.bf16 %v3451, %v3450
  %v3685 = vpack.c.bf16 %v3453, %v3452
  %v3686 = vpack.c.bf16 %v3455, %v3454
  %v3687 = vpack.c.bf16 %v3457, %v3456
  %v3688 = vpack.c.bf16 %v3459, %v3458
  %v3689 = vpack.c.bf16 %v3461, %v3460
  %v3690 = vpack.c.bf16 %v3463, %v3462
  %v3691 = vpack.c.bf16 %v3465, %v3464
  %v3692 = vpack.c.bf16 %v3467, %v3466
  %v3693 = vpack.c.bf16 %v3469, %v3468
  %v3694 = vpack.c.bf16 %v3471, %v3470
  %v3695 = vpack.c.bf16 %v3473, %v3472
  %v3696 = vpack.c.bf16 %v3475, %v3474
  %v3697 = vpack.c.bf16 %v3477, %v3476
  %v3698 = vpack.c.bf16 %v3479, %v3478
  %v3699 = vpack.c.bf16 %v3481, %v3480
  %v3700 = vpack.c.bf16 %v3483, %v3482
  %v3701 = vpack.c.bf16 %v3485, %v3484
  %v3702 = vpack.c.bf16 %v3487, %v3486
  %v3703 = vpack.c.bf16 %v3489, %v3488
  %v3704 = vpack.c.bf16 %v3491, %v3490
  %v3705 = vpack.c.bf16 %v3493, %v3492
  %v3706 = vpack.c.bf16 %v3495, %v3494
  %v3707 = vpack.c.bf16 %v3497, %v3496
  %v3708 = vpack.c.bf16 %v3499, %v3498
  %v3709 = vpack.c.bf16 %v3501, %v3500
  %v3710 = vpack.c.bf16 %v3503, %v3502
  %v3711 = vpack.c.bf16 %v3505, %v3504
  %v3712 = vpack.c.bf16 %v3507, %v3506
  %v3713 = vpack.c.bf16 %v3509, %v3508
  %v3714 = vpack.c.bf16 %v3511, %v3510
  %v3715 = vpack.c.bf16 %v3513, %v3512
  %v3716 = vpack.c.bf16 %v3515, %v3514
  %v3717 = vpack.c.bf16 %v3517, %v3516
  %v3718 = vpack.c.bf16 %v3519, %v3518
  %v3719 = vpack.c.bf16 %v3521, %v3520
  %v3720 = vpack.c.bf16 %v3523, %v3522
  %v3721 = vpack.c.bf16 %v3525, %v3524
  %v3722 = vpack.c.bf16 %v3527, %v3526
  %v3723 = vpack.c.bf16 %v3529, %v3528
  %v3724 = vpack.c.bf16 %v3531, %v3530
  %v3725 = vpack.c.bf16 %v3533, %v3532
  %v3726 = vpack.c.bf16 %v3535, %v3534
  %v3727 = vpack.c.bf16 %v3537, %v3536
  %v3728 = vpack.c.bf16 %v3539, %v3538
  %v3729 = vpack.c.bf16 %v3541, %v3540
  %v3730 = vpack.c.bf16 %v3543, %v3542
  %v3731 = vpack.c.bf16 %v3545, %v3544
  %v3732 = vpack.c.bf16 %v3547, %v3546
  %v3733 = vpack.c.bf16 %v3549, %v3548
  %v3734 = vpack.c.bf16 %v3551, %v3550
  %v3735 = vpack.c.bf16 %v3553, %v3552
  %v3736 = vpack.c.bf16 %v3555, %v3554
  %v3737 = vpack.c.bf16 %v3557, %v3556
  %v3738 = vpack.c.bf16 %v3559, %v3558
  %v3739 = vpack.c.bf16 %v3561, %v3560
  %v3740 = vpack.c.bf16 %v3563, %v3562
  %v3741 = vpack.c.bf16 %v3565, %v3564
  %v3742 = vpack.c.bf16 %v3567, %v3566
  %v3743 = vpack.c.bf16 %v3569, %v3568
  %v3744 = vpack.c.bf16 %v3571, %v3570
  %v3745 = vpack.c.bf16 %v3573, %v3572
  %v3746 = vpack.c.bf16 %v3575, %v3574
  %v3747 = vpack.c.bf16 %v3577, %v3576
  %v3748 = vpack.c.bf16 %v3579, %v3578
  %v3749 = vpack.c.bf16 %v3581, %v3580
  %v3750 = vpack.c.bf16 %v3583, %v3582
  %v3751 = vpack.c.bf16 %v3585, %v3584
  %v3752 = vpack.c.bf16 %v3587, %v3586
  %v3753 = vpack.c.bf16 %v3589, %v3588
  %v3754 = vpack.c.bf16 %v3591, %v3590
  %v3755 = vpack.c.bf16 %v3593, %v3592
  %v3756 = vpack.c.bf16 %v3595, %v3594
  %v3757 = vpack.c.bf16 %v3597, %v3596
  %v3758 = vpack.c.bf16 %v3599, %v3598
  %v3759 = vpack.c.bf16 %v3601, %v3600
  %v3760 = vpack.c.bf16 %v3603, %v3602
  %v3761 = vpack.c.bf16 %v3605, %v3604
  %v3762 = vpack.c.bf16 %v3607, %v3606
  %v3763 = vpack.c.bf16 %v3609, %v3608
  %v3764 = vpack.c.bf16 %v3611, %v3610
  %v3765 = vpack.c.bf16 %v3613, %v3612
  %v3766 = vpack.c.bf16 %v3615, %v3614
  %v3767 = vpack.c.bf16 %v3617, %v3616
  %v3768 = vpack.c.bf16 %v3619, %v3618
  %v3769 = vpack.c.bf16 %v3621, %v3620
  %v3770 = vpack.c.bf16 %v3623, %v3622
  %v3771 = vpack.c.bf16 %v3625, %v3624
  %v3772 = vpack.c.bf16 %v3627, %v3626
  %v3773 = vpack.c.bf16 %v3629, %v3628
  %v3774 = vpack.c.bf16 %v3631, %v3630
  %v3775 = vpack.c.bf16 %v3633, %v3632
  %v3776 = vpack.c.bf16 %v3635, %v3634
  %v3777 = vpack.c.bf16 %v3637, %v3636
  %v3778 = vpack.c.bf16 %v3639, %v3638
  %v3779 = vpack.c.bf16 %v3641, %v3640
  %v3780 = vpack.c.bf16 %v3643, %v3642
  %v3781 = vpack.c.bf16 %v3645, %v3644
  %v3782 = vpack.c.bf16 %v3647, %v3646
  %v3783 = vpack.c.bf16 %v3649, %v3648
  %v3784 = vpack.c.bf16 %v3651, %v3650
  %v3785 = vpack.c.bf16 %v3653, %v3652
  %v3786 = vpack.c.bf16 %v3655, %v3654
  %v3787 = vpack.c.bf16 %v3657, %v3656
  %v3788 = vpack.c.bf16 %v3659, %v3658
  %v3789 = vpack.c.bf16 %v3661, %v3660
  %v3918 = vunpack.c.l.b16 %v3662
  %v3919 = vunpack.c.h.b16 %v3662
  %v3920 = vunpack.c.l.b16 %v3663
  %v3921 = vunpack.c.h.b16 %v3663
  %v3922 = vunpack.c.l.b16 %v3664
  %v3923 = vunpack.c.h.b16 %v3664
  %v3924 = vunpack.c.l.b16 %v3665
  %v3925 = vunpack.c.h.b16 %v3665
  %v3926 = vunpack.c.l.b16 %v3666
  %v3927 = vunpack.c.h.b16 %v3666
  %v3928 = vunpack.c.l.b16 %v3667
  %v3929 = vunpack.c.h.b16 %v3667
  %v3930 = vunpack.c.l.b16 %v3668
  %v3931 = vunpack.c.h.b16 %v3668
  %v3932 = vunpack.c.l.b16 %v3669
  %v3933 = vunpack.c.h.b16 %v3669
  %v3934 = vunpack.c.l.b16 %v3670
  %v3935 = vunpack.c.h.b16 %v3670
  %v3936 = vunpack.c.l.b16 %v3671
  %v3937 = vunpack.c.h.b16 %v3671
  %v3938 = vunpack.c.l.b16 %v3672
  %v3939 = vunpack.c.h.b16 %v3672
  %v3940 = vunpack.c.l.b16 %v3673
  %v3941 = vunpack.c.h.b16 %v3673
  %v3942 = vunpack.c.l.b16 %v3674
  %v3943 = vunpack.c.h.b16 %v3674
  %v3944 = vunpack.c.l.b16 %v3675
  %v3945 = vunpack.c.h.b16 %v3675
  %v3946 = vunpack.c.l.b16 %v3676
  %v3947 = vunpack.c.h.b16 %v3676
  %v3948 = vunpack.c.l.b16 %v3677
  %v3949 = vunpack.c.h.b16 %v3677
  %v3950 = vunpack.c.l.b16 %v3678
  %v3951 = vunpack.c.h.b16 %v3678
  %v3952 = vunpack.c.l.b16 %v3679
  %v3953 = vunpack.c.h.b16 %v3679
  %v3954 = vunpack.c.l.b16 %v3680
  %v3955 = vunpack.c.h.b16 %v3680
  %v3956 = vunpack.c.l.b16 %v3681
  %v3957 = vunpack.c.h.b16 %v3681
  %v3958 = vunpack.c.l.b16 %v3682
  %v3959 = vunpack.c.h.b16 %v3682
  %v3960 = vunpack.c.l.b16 %v3683
  %v3961 = vunpack.c.h.b16 %v3683
  %v3962 = vunpack.c.l.b16 %v3684
  %v3963 = vunpack.c.h.b16 %v3684
  %v3964 = vunpack.c.l.b16 %v3685
  %v3965 = vunpack.c.h.b16 %v3685
  %v3966 = vunpack.c.l.b16 %v3686
  %v3967 = vunpack.c.h.b16 %v3686
  %v3968 = vunpack.c.l.b16 %v3687
  %v3969 = vunpack.c.h.b16 %v3687
  %v3970 = vunpack.c.l.b16 %v3688
  %v3971 = vunpack.c.h.b16 %v3688
  %v3972 = vunpack.c.l.b16 %v3689
  %v3973 = vunpack.c.h.b16 %v3689
  %v3974 = vunpack.c.l.b16 %v3690
  %v3975 = vunpack.c.h.b16 %v3690
  %v3976 = vunpack.c.l.b16 %v3691
  %v3977 = vunpack.c.h.b16 %v3691
  %v3978 = vunpack.c.l.b16 %v3692
  %v3979 = vunpack.c.h.b16 %v3692
  %v3980 = vunpack.c.l.b16 %v3693
  %v3981 = vunpack.c.h.b16 %v3693
  %v3982 = vunpack.c.l.b16 %v3694
  %v3983 = vunpack.c.h.b16 %v3694
  %v3984 = vunpack.c.l.b16 %v3695
  %v3985 = vunpack.c.h.b16 %v3695
  %v3986 = vunpack.c.l.b16 %v3696
  %v3987 = vunpack.c.h.b16 %v3696
  %v3988 = vunpack.c.l.b16 %v3697
  %v3989 = vunpack.c.h.b16 %v3697
  %v3990 = vunpack.c.l.b16 %v3698
  %v3991 = vunpack.c.h.b16 %v3698
  %v3992 = vunpack.c.l.b16 %v3699
  %v3993 = vunpack.c.h.b16 %v3699
  %v3994 = vunpack.c.l.b16 %v3700
  %v3995 = vunpack.c.h.b16 %v3700
  %v3996 = vunpack.c.l.b16 %v3701
  %v3997 = vunpack.c.h.b16 %v3701
  %v3998 = vunpack.c.l.b16 %v3702
  %v3999 = vunpack.c.h.b16 %v3702
  %v4000 = vunpack.c.l.b16 %v3703
  %v4001 = vunpack.c.h.b16 %v3703
  %v4002 = vunpack.c.l.b16 %v3704
  %v4003 = vunpack.c.h.b16 %v3704
  %v4004 = vunpack.c.l.b16 %v3705
  %v4005 = vunpack.c.h.b16 %v3705
  %v4006 = vunpack.c.l.b16 %v3706
  %v4007 = vunpack.c.h.b16 %v3706
  %v4008 = vunpack.c.l.b16 %v3707
  %v4009 = vunpack.c.h.b16 %v3707
  %v4010 = vunpack.c.l.b16 %v3708
  %v4011 = vunpack.c.h.b16 %v3708
  %v4012 = vunpack.c.l.b16 %v3709
  %v4013 = vunpack.c.h.b16 %v3709
  %v4014 = vunpack.c.l.b16 %v3710
  %v4015 = vunpack.c.h.b16 %v3710
  %v4016 = vunpack.c.l.b16 %v3711
  %v4017 = vunpack.c.h.b16 %v3711
  %v4018 = vunpack.c.l.b16 %v3712
  %v4019 = vunpack.c.h.b16 %v3712
  %v4020 = vunpack.c.l.b16 %v3713
  %v4021 = vunpack.c.h.b16 %v3713
  %v4022 = vunpack.c.l.b16 %v3714
  %v4023 = vunpack.c.h.b16 %v3714
  %v4024 = vunpack.c.l.b16 %v3715
  %v4025 = vunpack.c.h.b16 %v3715
  %v4026 = vunpack.c.l.b16 %v3716
  %v4027 = vunpack.c.h.b16 %v3716
  %v4028 = vunpack.c.l.b16 %v3717
  %v4029 = vunpack.c.h.b16 %v3717
  %v4030 = vunpack.c.l.b16 %v3718
  %v4031 = vunpack.c.h.b16 %v3718
  %v4032 = vunpack.c.l.b16 %v3719
  %v4033 = vunpack.c.h.b16 %v3719
  %v4034 = vunpack.c.l.b16 %v3720
  %v4035 = vunpack.c.h.b16 %v3720
  %v4036 = vunpack.c.l.b16 %v3721
  %v4037 = vunpack.c.h.b16 %v3721
  %v4038 = vunpack.c.l.b16 %v3722
  %v4039 = vunpack.c.h.b16 %v3722
  %v4040 = vunpack.c.l.b16 %v3723
  %v4041 = vunpack.c.h.b16 %v3723
  %v4042 = vunpack.c.l.b16 %v3724
  %v4043 = vunpack.c.h.b16 %v3724
  %v4044 = vunpack.c.l.b16 %v3725
  %v4045 = vunpack.c.h.b16 %v3725
  %v4046 = vunpack.c.l.b16 %v3726
  %v4047 = vunpack.c.h.b16 %v3726
  %v4048 = vunpack.c.l.b16 %v3727
  %v4049 = vunpack.c.h.b16 %v3727
  %v4050 = vunpack.c.l.b16 %v3728
  %v4051 = vunpack.c.h.b16 %v3728
  %v4052 = vunpack.c.l.b16 %v3729
  %v4053 = vunpack.c.h.b16 %v3729
  %v4054 = vunpack.c.l.b16 %v3730
  %v4055 = vunpack.c.h.b16 %v3730
  %v4056 = vunpack.c.l.b16 %v3731
  %v4057 = vunpack.c.h.b16 %v3731
  %v4058 = vunpack.c.l.b16 %v3732
  %v4059 = vunpack.c.h.b16 %v3732
  %v4060 = vunpack.c.l.b16 %v3733
  %v4061 = vunpack.c.h.b16 %v3733
  %v4062 = vunpack.c.l.b16 %v3734
  %v4063 = vunpack.c.h.b16 %v3734
  %v4064 = vunpack.c.l.b16 %v3735
  %v4065 = vunpack.c.h.b16 %v3735
  %v4066 = vunpack.c.l.b16 %v3736
  %v4067 = vunpack.c.h.b16 %v3736
  %v4068 = vunpack.c.l.b16 %v3737
  %v4069 = vunpack.c.h.b16 %v3737
  %v4070 = vunpack.c.l.b16 %v3738
  %v4071 = vunpack.c.h.b16 %v3738
  %v4072 = vunpack.c.l.b16 %v3739
  %v4073 = vunpack.c.h.b16 %v3739
  %v4074 = vunpack.c.l.b16 %v3740
  %v4075 = vunpack.c.h.b16 %v3740
  %v4076 = vunpack.c.l.b16 %v3741
  %v4077 = vunpack.c.h.b16 %v3741
  %v4078 = vunpack.c.l.b16 %v3742
  %v4079 = vunpack.c.h.b16 %v3742
  %v4080 = vunpack.c.l.b16 %v3743
  %v4081 = vunpack.c.h.b16 %v3743
  %v4082 = vunpack.c.l.b16 %v3744
  %v4083 = vunpack.c.h.b16 %v3744
  %v4084 = vunpack.c.l.b16 %v3745
  %v4085 = vunpack.c.h.b16 %v3745
  %v4086 = vunpack.c.l.b16 %v3746
  %v4087 = vunpack.c.h.b16 %v3746
  %v4088 = vunpack.c.l.b16 %v3747
  %v4089 = vunpack.c.h.b16 %v3747
  %v4090 = vunpack.c.l.b16 %v3748
  %v4091 = vunpack.c.h.b16 %v3748
  %v4092 = vunpack.c.l.b16 %v3749
  %v4093 = vunpack.c.h.b16 %v3749
  %v4094 = vunpack.c.l.b16 %v3750
  %v4095 = vunpack.c.h.b16 %v3750
  %v4096 = vunpack.c.l.b16 %v3751
  %v4097 = vunpack.c.h.b16 %v3751
  %v4098 = vunpack.c.l.b16 %v3752
  %v4099 = vunpack.c.h.b16 %v3752
  %v4100 = vunpack.c.l.b16 %v3753
  %v4101 = vunpack.c.h.b16 %v3753
  %v4102 = vunpack.c.l.b16 %v3754
  %v4103 = vunpack.c.h.b16 %v3754
  %v4104 = vunpack.c.l.b16 %v3755
  %v4105 = vunpack.c.h.b16 %v3755
  %v4106 = vunpack.c.l.b16 %v3756
  %v4107 = vunpack.c.h.b16 %v3756
  %v4108 = vunpack.c.l.b16 %v3757
  %v4109 = vunpack.c.h.b16 %v3757
  %v4110 = vunpack.c.l.b16 %v3758
  %v4111 = vunpack.c.h.b16 %v3758
  %v4112 = vunpack.c.l.b16 %v3759
  %v4113 = vunpack.c.h.b16 %v3759
  %v4114 = vunpack.c.l.b16 %v3760
  %v4115 = vunpack.c.h.b16 %v3760
  %v4116 = vunpack.c.l.b16 %v3761
  %v4117 = vunpack.c.h.b16 %v3761
  %v4118 = vunpack.c.l.b16 %v3762
  %v4119 = vunpack.c.h.b16 %v3762
  %v4120 = vunpack.c.l.b16 %v3763
  %v4121 = vunpack.c.h.b16 %v3763
  %v4122 = vunpack.c.l.b16 %v3764
  %v4123 = vunpack.c.h.b16 %v3764
  %v4124 = vunpack.c.l.b16 %v3765
  %v4125 = vunpack.c.h.b16 %v3765
  %v4126 = vunpack.c.l.b16 %v3766
  %v4127 = vunpack.c.h.b16 %v3766
  %v4128 = vunpack.c.l.b16 %v3767
  %v4129 = vunpack.c.h.b16 %v3767
  %v4130 = vunpack.c.l.b16 %v3768
  %v4131 = vunpack.c.h.b16 %v3768
  %v4132 = vunpack.c.l.b16 %v3769
  %v4133 = vunpack.c.h.b16 %v3769
  %v4134 = vunpack.c.l.b16 %v3770
  %v4135 = vunpack.c.h.b16 %v3770
  %v4136 = vunpack.c.l.b16 %v3771
  %v4137 = vunpack.c.h.b16 %v3771
  %v4138 = vunpack.c.l.b16 %v3772
  %v4139 = vunpack.c.h.b16 %v3772
  %v4140 = vunpack.c.l.b16 %v3773
  %v4141 = vunpack.c.h.b16 %v3773
  %v4142 = vunpack.c.l.b16 %v3774
  %v4143 = vunpack.c.h.b16 %v3774
  %v4144 = vunpack.c.l.b16 %v3775
  %v4145 = vunpack.c.h.b16 %v3775
  %v4146 = vunpack.c.l.b16 %v3776
  %v4147 = vunpack.c.h.b16 %v3776
  %v4148 = vunpack.c.l.b16 %v3777
  %v4149 = vunpack.c.h.b16 %v3777
  %v4150 = vunpack.c.l.b16 %v3778
  %v4151 = vunpack.c.h.b16 %v3778
  %v4152 = vunpack.c.l.b16 %v3779
  %v4153 = vunpack.c.h.b16 %v3779
  %v4154 = vunpack.c.l.b16 %v3780
  %v4155 = vunpack.c.h.b16 %v3780
  %v4156 = vunpack.c.l.b16 %v3781
  %v4157 = vunpack.c.h.b16 %v3781
  %v4158 = vunpack.c.l.b16 %v3782
  %v4159 = vunpack.c.h.b16 %v3782
  %v4160 = vunpack.c.l.b16 %v3783
  %v4161 = vunpack.c.h.b16 %v3783
  %v4162 = vunpack.c.l.b16 %v3784
  %v4163 = vunpack.c.h.b16 %v3784
  %v4164 = vunpack.c.l.b16 %v3785
  %v4165 = vunpack.c.h.b16 %v3785
  %v4166 = vunpack.c.l.b16 %v3786
  %v4167 = vunpack.c.h.b16 %v3786
  %v4168 = vunpack.c.l.b16 %v3787
  %v4169 = vunpack.c.h.b16 %v3787
  %v4170 = vunpack.c.l.b16 %v3788
  %v4171 = vunpack.c.h.b16 %v3788
  %v4172 = vunpack.c.l.b16 %v3789
  %v4173 = vunpack.c.h.b16 %v3789
  %v4174 = vpack.c.b16 %v3918, %v3918
  %v4175 = vpack.c.b16 %v3919, %v3919
  %v4176 = vpack.c.b16 %v3920, %v3920
  %v4177 = vpack.c.b16 %v3921, %v3921
  %v4178 = vpack.c.b16 %v3922, %v3922
  %v4179 = vpack.c.b16 %v3923, %v3923
  %v4180 = vpack.c.b16 %v3924, %v3924
  %v4181 = vpack.c.b16 %v3925, %v3925
  %v4182 = vpack.c.b16 %v3926, %v3926
  %v4183 = vpack.c.b16 %v3927, %v3927
  %v4184 = vpack.c.b16 %v3928, %v3928
  %v4185 = vpack.c.b16 %v3929, %v3929
  %v4186 = vpack.c.b16 %v3930, %v3930
  %v4187 = vpack.c.b16 %v3931, %v3931
  %v4188 = vpack.c.b16 %v3932, %v3932
  %v4189 = vpack.c.b16 %v3933, %v3933
  %v4190 = vpack.c.b16 %v3934, %v3934
  %v4191 = vpack.c.b16 %v3935, %v3935
  %v4192 = vpack.c.b16 %v3936, %v3936
  %v4193 = vpack.c.b16 %v3937, %v3937
  %v4194 = vpack.c.b16 %v3938, %v3938
  %v4195 = vpack.c.b16 %v3939, %v3939
  %v4196 = vpack.c.b16 %v3940, %v3940
  %v4197 = vpack.c.b16 %v3941, %v3941
  %v4198 = vpack.c.b16 %v3942, %v3942
  %v4199 = vpack.c.b16 %v3943, %v3943
  %v4200 = vpack.c.b16 %v3944, %v3944
  %v4201 = vpack.c.b16 %v3945, %v3945
  %v4202 = vpack.c.b16 %v3946, %v3946
  %v4203 = vpack.c.b16 %v3947, %v3947
  %v4204 = vpack.c.b16 %v3948, %v3948
  %v4205 = vpack.c.b16 %v3949, %v3949
  %v4206 = vpack.c.b16 %v3950, %v3950
  %v4207 = vpack.c.b16 %v3951, %v3951
  %v4208 = vpack.c.b16 %v3952, %v3952
  %v4209 = vpack.c.b16 %v3953, %v3953
  %v4210 = vpack.c.b16 %v3954, %v3954
  %v4211 = vpack.c.b16 %v3955, %v3955
  %v4212 = vpack.c.b16 %v3956, %v3956
  %v4213 = vpack.c.b16 %v3957, %v3957
  %v4214 = vpack.c.b16 %v3958, %v3958
  %v4215 = vpack.c.b16 %v3959, %v3959
  %v4216 = vpack.c.b16 %v3960, %v3960
  %v4217 = vpack.c.b16 %v3961, %v3961
  %v4218 = vpack.c.b16 %v3962, %v3962
  %v4219 = vpack.c.b16 %v3963, %v3963
  %v4220 = vpack.c.b16 %v3964, %v3964
  %v4221 = vpack.c.b16 %v3965, %v3965
  %v4222 = vpack.c.b16 %v3966, %v3966
  %v4223 = vpack.c.b16 %v3967, %v3967
  %v4224 = vpack.c.b16 %v3968, %v3968
  %v4225 = vpack.c.b16 %v3969, %v3969
  %v4226 = vpack.c.b16 %v3970, %v3970
  %v4227 = vpack.c.b16 %v3971, %v3971
  %v4228 = vpack.c.b16 %v3972, %v3972
  %v4229 = vpack.c.b16 %v3973, %v3973
  %v4230 = vpack.c.b16 %v3974, %v3974
  %v4231 = vpack.c.b16 %v3975, %v3975
  %v4232 = vpack.c.b16 %v3976, %v3976
  %v4233 = vpack.c.b16 %v3977, %v3977
  %v4234 = vpack.c.b16 %v3978, %v3978
  %v4235 = vpack.c.b16 %v3979, %v3979
  %v4236 = vpack.c.b16 %v3980, %v3980
  %v4237 = vpack.c.b16 %v3981, %v3981
  %v4238 = vpack.c.b16 %v3982, %v3982
  %v4239 = vpack.c.b16 %v3983, %v3983
  %v4240 = vpack.c.b16 %v3984, %v3984
  %v4241 = vpack.c.b16 %v3985, %v3985
  %v4242 = vpack.c.b16 %v3986, %v3986
  %v4243 = vpack.c.b16 %v3987, %v3987
  %v4244 = vpack.c.b16 %v3988, %v3988
  %v4245 = vpack.c.b16 %v3989, %v3989
  %v4246 = vpack.c.b16 %v3990, %v3990
  %v4247 = vpack.c.b16 %v3991, %v3991
  %v4248 = vpack.c.b16 %v3992, %v3992
  %v4249 = vpack.c.b16 %v3993, %v3993
  %v4250 = vpack.c.b16 %v3994, %v3994
  %v4251 = vpack.c.b16 %v3995, %v3995
  %v4252 = vpack.c.b16 %v3996, %v3996
  %v4253 = vpack.c.b16 %v3997, %v3997
  %v4254 = vpack.c.b16 %v3998, %v3998
  %v4255 = vpack.c.b16 %v3999, %v3999
  %v4256 = vpack.c.b16 %v4000, %v4000
  %v4257 = vpack.c.b16 %v4001, %v4001
  %v4258 = vpack.c.b16 %v4002, %v4002
  %v4259 = vpack.c.b16 %v4003, %v4003
  %v4260 = vpack.c.b16 %v4004, %v4004
  %v4261 = vpack.c.b16 %v4005, %v4005
  %v4262 = vpack.c.b16 %v4006, %v4006
  %v4263 = vpack.c.b16 %v4007, %v4007
  %v4264 = vpack.c.b16 %v4008, %v4008
  %v4265 = vpack.c.b16 %v4009, %v4009
  %v4266 = vpack.c.b16 %v4010, %v4010
  %v4267 = vpack.c.b16 %v4011, %v4011
  %v4268 = vpack.c.b16 %v4012, %v4012
  %v4269 = vpack.c.b16 %v4013, %v4013
  %v4270 = vpack.c.b16 %v4014, %v4014
  %v4271 = vpack.c.b16 %v4015, %v4015
  %v4272 = vpack.c.b16 %v4016, %v4016
  %v4273 = vpack.c.b16 %v4017, %v4017
  %v4274 = vpack.c.b16 %v4018, %v4018
  %v4275 = vpack.c.b16 %v4019, %v4019
  %v4276 = vpack.c.b16 %v4020, %v4020
  %v4277 = vpack.c.b16 %v4021, %v4021
  %v4278 = vpack.c.b16 %v4022, %v4022
  %v4279 = vpack.c.b16 %v4023, %v4023
  %v4280 = vpack.c.b16 %v4024, %v4024
  %v4281 = vpack.c.b16 %v4025, %v4025
  %v4282 = vpack.c.b16 %v4026, %v4026
  %v4283 = vpack.c.b16 %v4027, %v4027
  %v4284 = vpack.c.b16 %v4028, %v4028
  %v4285 = vpack.c.b16 %v4029, %v4029
  %v4286 = vpack.c.b16 %v4030, %v4030
  %v4287 = vpack.c.b16 %v4031, %v4031
  %v4288 = vpack.c.b16 %v4032, %v4032
  %v4289 = vpack.c.b16 %v4033, %v4033
  %v4290 = vpack.c.b16 %v4034, %v4034
  %v4291 = vpack.c.b16 %v4035, %v4035
  %v4292 = vpack.c.b16 %v4036, %v4036
  %v4293 = vpack.c.b16 %v4037, %v4037
  %v4294 = vpack.c.b16 %v4038, %v4038
  %v4295 = vpack.c.b16 %v4039, %v4039
  %v4296 = vpack.c.b16 %v4040, %v4040
  %v4297 = vpack.c.b16 %v4041, %v4041
  %v4298 = vpack.c.b16 %v4042, %v4042
  %v4299 = vpack.c.b16 %v4043, %v4043
  %v4300 = vpack.c.b16 %v4044, %v4044
  %v4301 = vpack.c.b16 %v4045, %v4045
  %v4302 = vpack.c.b16 %v4046, %v4046
  %v4303 = vpack.c.b16 %v4047, %v4047
  %v4304 = vpack.c.b16 %v4048, %v4048
  %v4305 = vpack.c.b16 %v4049, %v4049
  %v4306 = vpack.c.b16 %v4050, %v4050
  %v4307 = vpack.c.b16 %v4051, %v4051
  %v4308 = vpack.c.b16 %v4052, %v4052
  %v4309 = vpack.c.b16 %v4053, %v4053
  %v4310 = vpack.c.b16 %v4054, %v4054
  %v4311 = vpack.c.b16 %v4055, %v4055
  %v4312 = vpack.c.b16 %v4056, %v4056
  %v4313 = vpack.c.b16 %v4057, %v4057
  %v4314 = vpack.c.b16 %v4058, %v4058
  %v4315 = vpack.c.b16 %v4059, %v4059
  %v4316 = vpack.c.b16 %v4060, %v4060
  %v4317 = vpack.c.b16 %v4061, %v4061
  %v4318 = vpack.c.b16 %v4062, %v4062
  %v4319 = vpack.c.b16 %v4063, %v4063
  %v4320 = vpack.c.b16 %v4064, %v4064
  %v4321 = vpack.c.b16 %v4065, %v4065
  %v4322 = vpack.c.b16 %v4066, %v4066
  %v4323 = vpack.c.b16 %v4067, %v4067
  %v4324 = vpack.c.b16 %v4068, %v4068
  %v4325 = vpack.c.b16 %v4069, %v4069
  %v4326 = vpack.c.b16 %v4070, %v4070
  %v4327 = vpack.c.b16 %v4071, %v4071
  %v4328 = vpack.c.b16 %v4072, %v4072
  %v4329 = vpack.c.b16 %v4073, %v4073
  %v4330 = vpack.c.b16 %v4074, %v4074
  %v4331 = vpack.c.b16 %v4075, %v4075
  %v4332 = vpack.c.b16 %v4076, %v4076
  %v4333 = vpack.c.b16 %v4077, %v4077
  %v4334 = vpack.c.b16 %v4078, %v4078
  %v4335 = vpack.c.b16 %v4079, %v4079
  %v4336 = vpack.c.b16 %v4080, %v4080
  %v4337 = vpack.c.b16 %v4081, %v4081
  %v4338 = vpack.c.b16 %v4082, %v4082
  %v4339 = vpack.c.b16 %v4083, %v4083
  %v4340 = vpack.c.b16 %v4084, %v4084
  %v4341 = vpack.c.b16 %v4085, %v4085
  %v4342 = vpack.c.b16 %v4086, %v4086
  %v4343 = vpack.c.b16 %v4087, %v4087
  %v4344 = vpack.c.b16 %v4088, %v4088
  %v4345 = vpack.c.b16 %v4089, %v4089
  %v4346 = vpack.c.b16 %v4090, %v4090
  %v4347 = vpack.c.b16 %v4091, %v4091
  %v4348 = vpack.c.b16 %v4092, %v4092
  %v4349 = vpack.c.b16 %v4093, %v4093
  %v4350 = vpack.c.b16 %v4094, %v4094
  %v4351 = vpack.c.b16 %v4095, %v4095
  %v4352 = vpack.c.b16 %v4096, %v4096
  %v4353 = vpack.c.b16 %v4097, %v4097
  %v4354 = vpack.c.b16 %v4098, %v4098
  %v4355 = vpack.c.b16 %v4099, %v4099
  %v4356 = vpack.c.b16 %v4100, %v4100
  %v4357 = vpack.c.b16 %v4101, %v4101
  %v4358 = vpack.c.b16 %v4102, %v4102
  %v4359 = vpack.c.b16 %v4103, %v4103
  %v4360 = vpack.c.b16 %v4104, %v4104
  %v4361 = vpack.c.b16 %v4105, %v4105
  %v4362 = vpack.c.b16 %v4106, %v4106
  %v4363 = vpack.c.b16 %v4107, %v4107
  %v4364 = vpack.c.b16 %v4108, %v4108
  %v4365 = vpack.c.b16 %v4109, %v4109
  %v4366 = vpack.c.b16 %v4110, %v4110
  %v4367 = vpack.c.b16 %v4111, %v4111
  %v4368 = vpack.c.b16 %v4112, %v4112
  %v4369 = vpack.c.b16 %v4113, %v4113
  %v4370 = vpack.c.b16 %v4114, %v4114
  %v4371 = vpack.c.b16 %v4115, %v4115
  %v4372 = vpack.c.b16 %v4116, %v4116
  %v4373 = vpack.c.b16 %v4117, %v4117
  %v4374 = vpack.c.b16 %v4118, %v4118
  %v4375 = vpack.c.b16 %v4119, %v4119
  %v4376 = vpack.c.b16 %v4120, %v4120
  %v4377 = vpack.c.b16 %v4121, %v4121
  %v4378 = vpack.c.b16 %v4122, %v4122
  %v4379 = vpack.c.b16 %v4123, %v4123
  %v4380 = vpack.c.b16 %v4124, %v4124
  %v4381 = vpack.c.b16 %v4125, %v4125
  %v4382 = vpack.c.b16 %v4126, %v4126
  %v4383 = vpack.c.b16 %v4127, %v4127
  %v4384 = vpack.c.b16 %v4128, %v4128
  %v4385 = vpack.c.b16 %v4129, %v4129
  %v4386 = vpack.c.b16 %v4130, %v4130
  %v4387 = vpack.c.b16 %v4131, %v4131
  %v4388 = vpack.c.b16 %v4132, %v4132
  %v4389 = vpack.c.b16 %v4133, %v4133
  %v4390 = vpack.c.b16 %v4134, %v4134
  %v4391 = vpack.c.b16 %v4135, %v4135
  %v4392 = vpack.c.b16 %v4136, %v4136
  %v4393 = vpack.c.b16 %v4137, %v4137
  %v4394 = vpack.c.b16 %v4138, %v4138
  %v4395 = vpack.c.b16 %v4139, %v4139
  %v4396 = vpack.c.b16 %v4140, %v4140
  %v4397 = vpack.c.b16 %v4141, %v4141
  %v4398 = vpack.c.b16 %v4142, %v4142
  %v4399 = vpack.c.b16 %v4143, %v4143
  %v4400 = vpack.c.b16 %v4144, %v4144
  %v4401 = vpack.c.b16 %v4145, %v4145
  %v4402 = vpack.c.b16 %v4146, %v4146
  %v4403 = vpack.c.b16 %v4147, %v4147
  %v4404 = vpack.c.b16 %v4148, %v4148
  %v4405 = vpack.c.b16 %v4149, %v4149
  %v4406 = vpack.c.b16 %v4150, %v4150
  %v4407 = vpack.c.b16 %v4151, %v4151
  %v4408 = vpack.c.b16 %v4152, %v4152
  %v4409 = vpack.c.b16 %v4153, %v4153
  %v4410 = vpack.c.b16 %v4154, %v4154
  %v4411 = vpack.c.b16 %v4155, %v4155
  %v4412 = vpack.c.b16 %v4156, %v4156
  %v4413 = vpack.c.b16 %v4157, %v4157
  %v4414 = vpack.c.b16 %v4158, %v4158
  %v4415 = vpack.c.b16 %v4159, %v4159
  %v4416 = vpack.c.b16 %v4160, %v4160
  %v4417 = vpack.c.b16 %v4161, %v4161
  %v4418 = vpack.c.b16 %v4162, %v4162
  %v4419 = vpack.c.b16 %v4163, %v4163
  %v4420 = vpack.c.b16 %v4164, %v4164
  %v4421 = vpack.c.b16 %v4165, %v4165
  %v4422 = vpack.c.b16 %v4166, %v4166
  %v4423 = vpack.c.b16 %v4167, %v4167
  %v4424 = vpack.c.b16 %v4168, %v4168
  %v4425 = vpack.c.b16 %v4169, %v4169
  %v4426 = vpack.c.b16 %v4170, %v4170
  %v4427 = vpack.c.b16 %v4171, %v4171
  %v4428 = vpack.c.b16 %v4172, %v4172
  %v4429 = vpack.c.b16 %v4173, %v4173
  %vm4686 = vcmask 125952
  %4687 = vst.msk [vmem:[%s3] sm:$0xf] %vm4686, %v4174
  %4688 = vst.msk [vmem:[%s3 + $0x4] sm:$0xf] %vm4686, %v4175
  %4689 = vst.msk [vmem:[%s3 + $0x8] sm:$0xf] %vm4686, %v4176
  %4690 = vst.msk [vmem:[%s3 + $0xc] sm:$0xf] %vm4686, %v4177
  %4691 = vst.msk [vmem:[%s3 + $0x10] sm:$0xf] %vm4686, %v4178
  %4692 = vst.msk [vmem:[%s3 + $0x14] sm:$0xf] %vm4686, %v4179
  %4693 = vst.msk [vmem:[%s3 + $0x18] sm:$0xf] %vm4686, %v4180
  %4694 = vst.msk [vmem:[%s3 + $0x1c] sm:$0xf] %vm4686, %v4181
  %4695 = vst.msk [vmem:[%s3 + $0x20] sm:$0xf] %vm4686, %v4182
  %4696 = vst.msk [vmem:[%s3 + $0x24] sm:$0xf] %vm4686, %v4183
  %4697 = vst.msk [vmem:[%s3 + $0x28] sm:$0xf] %vm4686, %v4184
  %4698 = vst.msk [vmem:[%s3 + $0x2c] sm:$0xf] %vm4686, %v4185
  %4699 = vst.msk [vmem:[%s3 + $0x30] sm:$0xf] %vm4686, %v4186
  %4700 = vst.msk [vmem:[%s3 + $0x34] sm:$0xf] %vm4686, %v4187
  %4701 = vst.msk [vmem:[%s3 + $0x38] sm:$0xf] %vm4686, %v4188
  %4702 = vst.msk [vmem:[%s3 + $0x3c] sm:$0xf] %vm4686, %v4189
  %4703 = vst.msk [vmem:[%s3 + $0x40] sm:$0xf] %vm4686, %v4190
  %4704 = vst.msk [vmem:[%s3 + $0x44] sm:$0xf] %vm4686, %v4191
  %4705 = vst.msk [vmem:[%s3 + $0x48] sm:$0xf] %vm4686, %v4192
  %4706 = vst.msk [vmem:[%s3 + $0x4c] sm:$0xf] %vm4686, %v4193
  %4707 = vst.msk [vmem:[%s3 + $0x50] sm:$0xf] %vm4686, %v4194
  %4708 = vst.msk [vmem:[%s3 + $0x54] sm:$0xf] %vm4686, %v4195
  %4709 = vst.msk [vmem:[%s3 + $0x58] sm:$0xf] %vm4686, %v4196
  %4710 = vst.msk [vmem:[%s3 + $0x5c] sm:$0xf] %vm4686, %v4197
  %4711 = vst.msk [vmem:[%s3 + $0x60] sm:$0xf] %vm4686, %v4198
  %4712 = vst.msk [vmem:[%s3 + $0x64] sm:$0xf] %vm4686, %v4199
  %4713 = vst.msk [vmem:[%s3 + $0x68] sm:$0xf] %vm4686, %v4200
  %4714 = vst.msk [vmem:[%s3 + $0x6c] sm:$0xf] %vm4686, %v4201
  %4715 = vst.msk [vmem:[%s3 + $0x70] sm:$0xf] %vm4686, %v4202
  %4716 = vst.msk [vmem:[%s3 + $0x74] sm:$0xf] %vm4686, %v4203
  %4717 = vst.msk [vmem:[%s3 + $0x78] sm:$0xf] %vm4686, %v4204
  %4718 = vst.msk [vmem:[%s3 + $0x7c] sm:$0xf] %vm4686, %v4205
  %4719 = vst.msk [vmem:[%s3 + $0x80] sm:$0xf] %vm4686, %v4206
  %4720 = vst.msk [vmem:[%s3 + $0x84] sm:$0xf] %vm4686, %v4207
  %4721 = vst.msk [vmem:[%s3 + $0x88] sm:$0xf] %vm4686, %v4208
  %4722 = vst.msk [vmem:[%s3 + $0x8c] sm:$0xf] %vm4686, %v4209
  %4723 = vst.msk [vmem:[%s3 + $0x90] sm:$0xf] %vm4686, %v4210
  %4724 = vst.msk [vmem:[%s3 + $0x94] sm:$0xf] %vm4686, %v4211
  %4725 = vst.msk [vmem:[%s3 + $0x98] sm:$0xf] %vm4686, %v4212
  %4726 = vst.msk [vmem:[%s3 + $0x9c] sm:$0xf] %vm4686, %v4213
  %4727 = vst.msk [vmem:[%s3 + $0xa0] sm:$0xf] %vm4686, %v4214
  %4728 = vst.msk [vmem:[%s3 + $0xa4] sm:$0xf] %vm4686, %v4215
  %4729 = vst.msk [vmem:[%s3 + $0xa8] sm:$0xf] %vm4686, %v4216
  %4730 = vst.msk [vmem:[%s3 + $0xac] sm:$0xf] %vm4686, %v4217
  %4731 = vst.msk [vmem:[%s3 + $0xb0] sm:$0xf] %vm4686, %v4218
  %4732 = vst.msk [vmem:[%s3 + $0xb4] sm:$0xf] %vm4686, %v4219
  %4733 = vst.msk [vmem:[%s3 + $0xb8] sm:$0xf] %vm4686, %v4220
  %4734 = vst.msk [vmem:[%s3 + $0xbc] sm:$0xf] %vm4686, %v4221
  %4735 = vst.msk [vmem:[%s3 + $0xc0] sm:$0xf] %vm4686, %v4222
  %4736 = vst.msk [vmem:[%s3 + $0xc4] sm:$0xf] %vm4686, %v4223
  %4737 = vst.msk [vmem:[%s3 + $0xc8] sm:$0xf] %vm4686, %v4224
  %4738 = vst.msk [vmem:[%s3 + $0xcc] sm:$0xf] %vm4686, %v4225
  %4739 = vst.msk [vmem:[%s3 + $0xd0] sm:$0xf] %vm4686, %v4226
  %4740 = vst.msk [vmem:[%s3 + $0xd4] sm:$0xf] %vm4686, %v4227
  %4741 = vst.msk [vmem:[%s3 + $0xd8] sm:$0xf] %vm4686, %v4228
  %4742 = vst.msk [vmem:[%s3 + $0xdc] sm:$0xf] %vm4686, %v4229
  %4743 = vst.msk [vmem:[%s3 + $0xe0] sm:$0xf] %vm4686, %v4230
  %4744 = vst.msk [vmem:[%s3 + $0xe4] sm:$0xf] %vm4686, %v4231
  %4745 = vst.msk [vmem:[%s3 + $0xe8] sm:$0xf] %vm4686, %v4232
  %4746 = vst.msk [vmem:[%s3 + $0xec] sm:$0xf] %vm4686, %v4233
  %4747 = vst.msk [vmem:[%s3 + $0xf0] sm:$0xf] %vm4686, %v4234
  %4748 = vst.msk [vmem:[%s3 + $0xf4] sm:$0xf] %vm4686, %v4235
  %4749 = vst.msk [vmem:[%s3 + $0xf8] sm:$0xf] %vm4686, %v4236
  %4750 = vst.msk [vmem:[%s3 + $0xfc] sm:$0xf] %vm4686, %v4237
  %4751 = vst.msk [vmem:[%s3 + $0x100] sm:$0xf] %vm4686, %v4238
  %4752 = vst.msk [vmem:[%s3 + $0x104] sm:$0xf] %vm4686, %v4239
  %4753 = vst.msk [vmem:[%s3 + $0x108] sm:$0xf] %vm4686, %v4240
  %4754 = vst.msk [vmem:[%s3 + $0x10c] sm:$0xf] %vm4686, %v4241
  %4755 = vst.msk [vmem:[%s3 + $0x110] sm:$0xf] %vm4686, %v4242
  %4756 = vst.msk [vmem:[%s3 + $0x114] sm:$0xf] %vm4686, %v4243
  %4757 = vst.msk [vmem:[%s3 + $0x118] sm:$0xf] %vm4686, %v4244
  %4758 = vst.msk [vmem:[%s3 + $0x11c] sm:$0xf] %vm4686, %v4245
  %4759 = vst.msk [vmem:[%s3 + $0x120] sm:$0xf] %vm4686, %v4246
  %4760 = vst.msk [vmem:[%s3 + $0x124] sm:$0xf] %vm4686, %v4247
  %4761 = vst.msk [vmem:[%s3 + $0x128] sm:$0xf] %vm4686, %v4248
  %4762 = vst.msk [vmem:[%s3 + $0x12c] sm:$0xf] %vm4686, %v4249
  %4763 = vst.msk [vmem:[%s3 + $0x130] sm:$0xf] %vm4686, %v4250
  %4764 = vst.msk [vmem:[%s3 + $0x134] sm:$0xf] %vm4686, %v4251
  %4765 = vst.msk [vmem:[%s3 + $0x138] sm:$0xf] %vm4686, %v4252
  %4766 = vst.msk [vmem:[%s3 + $0x13c] sm:$0xf] %vm4686, %v4253
  %4767 = vst.msk [vmem:[%s3 + $0x140] sm:$0xf] %vm4686, %v4254
  %4768 = vst.msk [vmem:[%s3 + $0x144] sm:$0xf] %vm4686, %v4255
  %4769 = vst.msk [vmem:[%s3 + $0x148] sm:$0xf] %vm4686, %v4256
  %4770 = vst.msk [vmem:[%s3 + $0x14c] sm:$0xf] %vm4686, %v4257
  %4771 = vst.msk [vmem:[%s3 + $0x150] sm:$0xf] %vm4686, %v4258
  %4772 = vst.msk [vmem:[%s3 + $0x154] sm:$0xf] %vm4686, %v4259
  %4773 = vst.msk [vmem:[%s3 + $0x158] sm:$0xf] %vm4686, %v4260
  %4774 = vst.msk [vmem:[%s3 + $0x15c] sm:$0xf] %vm4686, %v4261
  %4775 = vst.msk [vmem:[%s3 + $0x160] sm:$0xf] %vm4686, %v4262
  %4776 = vst.msk [vmem:[%s3 + $0x164] sm:$0xf] %vm4686, %v4263
  %4777 = vst.msk [vmem:[%s3 + $0x168] sm:$0xf] %vm4686, %v4264
  %4778 = vst.msk [vmem:[%s3 + $0x16c] sm:$0xf] %vm4686, %v4265
  %4779 = vst.msk [vmem:[%s3 + $0x170] sm:$0xf] %vm4686, %v4266
  %4780 = vst.msk [vmem:[%s3 + $0x174] sm:$0xf] %vm4686, %v4267
  %4781 = vst.msk [vmem:[%s3 + $0x178] sm:$0xf] %vm4686, %v4268
  %4782 = vst.msk [vmem:[%s3 + $0x17c] sm:$0xf] %vm4686, %v4269
  %4783 = vst.msk [vmem:[%s3 + $0x180] sm:$0xf] %vm4686, %v4270
  %4784 = vst.msk [vmem:[%s3 + $0x184] sm:$0xf] %vm4686, %v4271
  %4785 = vst.msk [vmem:[%s3 + $0x188] sm:$0xf] %vm4686, %v4272
  %4786 = vst.msk [vmem:[%s3 + $0x18c] sm:$0xf] %vm4686, %v4273
  %4787 = vst.msk [vmem:[%s3 + $0x190] sm:$0xf] %vm4686, %v4274
  %4788 = vst.msk [vmem:[%s3 + $0x194] sm:$0xf] %vm4686, %v4275
  %4789 = vst.msk [vmem:[%s3 + $0x198] sm:$0xf] %vm4686, %v4276
  %4790 = vst.msk [vmem:[%s3 + $0x19c] sm:$0xf] %vm4686, %v4277
  %4791 = vst.msk [vmem:[%s3 + $0x1a0] sm:$0xf] %vm4686, %v4278
  %4792 = vst.msk [vmem:[%s3 + $0x1a4] sm:$0xf] %vm4686, %v4279
  %4793 = vst.msk [vmem:[%s3 + $0x1a8] sm:$0xf] %vm4686, %v4280
  %4794 = vst.msk [vmem:[%s3 + $0x1ac] sm:$0xf] %vm4686, %v4281
  %4795 = vst.msk [vmem:[%s3 + $0x1b0] sm:$0xf] %vm4686, %v4282
  %4796 = vst.msk [vmem:[%s3 + $0x1b4] sm:$0xf] %vm4686, %v4283
  %4797 = vst.msk [vmem:[%s3 + $0x1b8] sm:$0xf] %vm4686, %v4284
  %4798 = vst.msk [vmem:[%s3 + $0x1bc] sm:$0xf] %vm4686, %v4285
  %4799 = vst.msk [vmem:[%s3 + $0x1c0] sm:$0xf] %vm4686, %v4286
  %4800 = vst.msk [vmem:[%s3 + $0x1c4] sm:$0xf] %vm4686, %v4287
  %4801 = vst.msk [vmem:[%s3 + $0x1c8] sm:$0xf] %vm4686, %v4288
  %4802 = vst.msk [vmem:[%s3 + $0x1cc] sm:$0xf] %vm4686, %v4289
  %4803 = vst.msk [vmem:[%s3 + $0x1d0] sm:$0xf] %vm4686, %v4290
  %4804 = vst.msk [vmem:[%s3 + $0x1d4] sm:$0xf] %vm4686, %v4291
  %4805 = vst.msk [vmem:[%s3 + $0x1d8] sm:$0xf] %vm4686, %v4292
  %4806 = vst.msk [vmem:[%s3 + $0x1dc] sm:$0xf] %vm4686, %v4293
  %4807 = vst.msk [vmem:[%s3 + $0x1e0] sm:$0xf] %vm4686, %v4294
  %4808 = vst.msk [vmem:[%s3 + $0x1e4] sm:$0xf] %vm4686, %v4295
  %4809 = vst.msk [vmem:[%s3 + $0x1e8] sm:$0xf] %vm4686, %v4296
  %4810 = vst.msk [vmem:[%s3 + $0x1ec] sm:$0xf] %vm4686, %v4297
  %4811 = vst.msk [vmem:[%s3 + $0x1f0] sm:$0xf] %vm4686, %v4298
  %4812 = vst.msk [vmem:[%s3 + $0x1f4] sm:$0xf] %vm4686, %v4299
  %4813 = vst.msk [vmem:[%s3 + $0x1f8] sm:$0xf] %vm4686, %v4300
  %4814 = vst.msk [vmem:[%s3 + $0x1fc] sm:$0xf] %vm4686, %v4301
  %4815 = vst.msk [vmem:[%s3 + $0x200] sm:$0xf] %vm4686, %v4302
  %4816 = vst.msk [vmem:[%s3 + $0x204] sm:$0xf] %vm4686, %v4303
  %4817 = vst.msk [vmem:[%s3 + $0x208] sm:$0xf] %vm4686, %v4304
  %4818 = vst.msk [vmem:[%s3 + $0x20c] sm:$0xf] %vm4686, %v4305
  %4819 = vst.msk [vmem:[%s3 + $0x210] sm:$0xf] %vm4686, %v4306
  %4820 = vst.msk [vmem:[%s3 + $0x214] sm:$0xf] %vm4686, %v4307
  %4821 = vst.msk [vmem:[%s3 + $0x218] sm:$0xf] %vm4686, %v4308
  %4822 = vst.msk [vmem:[%s3 + $0x21c] sm:$0xf] %vm4686, %v4309
  %4823 = vst.msk [vmem:[%s3 + $0x220] sm:$0xf] %vm4686, %v4310
  %4824 = vst.msk [vmem:[%s3 + $0x224] sm:$0xf] %vm4686, %v4311
  %4825 = vst.msk [vmem:[%s3 + $0x228] sm:$0xf] %vm4686, %v4312
  %4826 = vst.msk [vmem:[%s3 + $0x22c] sm:$0xf] %vm4686, %v4313
  %4827 = vst.msk [vmem:[%s3 + $0x230] sm:$0xf] %vm4686, %v4314
  %4828 = vst.msk [vmem:[%s3 + $0x234] sm:$0xf] %vm4686, %v4315
  %4829 = vst.msk [vmem:[%s3 + $0x238] sm:$0xf] %vm4686, %v4316
  %4830 = vst.msk [vmem:[%s3 + $0x23c] sm:$0xf] %vm4686, %v4317
  %4831 = vst.msk [vmem:[%s3 + $0x240] sm:$0xf] %vm4686, %v4318
  %4832 = vst.msk [vmem:[%s3 + $0x244] sm:$0xf] %vm4686, %v4319
  %4833 = vst.msk [vmem:[%s3 + $0x248] sm:$0xf] %vm4686, %v4320
  %4834 = vst.msk [vmem:[%s3 + $0x24c] sm:$0xf] %vm4686, %v4321
  %4835 = vst.msk [vmem:[%s3 + $0x250] sm:$0xf] %vm4686, %v4322
  %4836 = vst.msk [vmem:[%s3 + $0x254] sm:$0xf] %vm4686, %v4323
  %4837 = vst.msk [vmem:[%s3 + $0x258] sm:$0xf] %vm4686, %v4324
  %4838 = vst.msk [vmem:[%s3 + $0x25c] sm:$0xf] %vm4686, %v4325
  %4839 = vst.msk [vmem:[%s3 + $0x260] sm:$0xf] %vm4686, %v4326
  %4840 = vst.msk [vmem:[%s3 + $0x264] sm:$0xf] %vm4686, %v4327
  %4841 = vst.msk [vmem:[%s3 + $0x268] sm:$0xf] %vm4686, %v4328
  %4842 = vst.msk [vmem:[%s3 + $0x26c] sm:$0xf] %vm4686, %v4329
  %4843 = vst.msk [vmem:[%s3 + $0x270] sm:$0xf] %vm4686, %v4330
  %4844 = vst.msk [vmem:[%s3 + $0x274] sm:$0xf] %vm4686, %v4331
  %4845 = vst.msk [vmem:[%s3 + $0x278] sm:$0xf] %vm4686, %v4332
  %4846 = vst.msk [vmem:[%s3 + $0x27c] sm:$0xf] %vm4686, %v4333
  %4847 = vst.msk [vmem:[%s3 + $0x280] sm:$0xf] %vm4686, %v4334
  %4848 = vst.msk [vmem:[%s3 + $0x284] sm:$0xf] %vm4686, %v4335
  %4849 = vst.msk [vmem:[%s3 + $0x288] sm:$0xf] %vm4686, %v4336
  %4850 = vst.msk [vmem:[%s3 + $0x28c] sm:$0xf] %vm4686, %v4337
  %4851 = vst.msk [vmem:[%s3 + $0x290] sm:$0xf] %vm4686, %v4338
  %4852 = vst.msk [vmem:[%s3 + $0x294] sm:$0xf] %vm4686, %v4339
  %4853 = vst.msk [vmem:[%s3 + $0x298] sm:$0xf] %vm4686, %v4340
  %4854 = vst.msk [vmem:[%s3 + $0x29c] sm:$0xf] %vm4686, %v4341
  %4855 = vst.msk [vmem:[%s3 + $0x2a0] sm:$0xf] %vm4686, %v4342
  %4856 = vst.msk [vmem:[%s3 + $0x2a4] sm:$0xf] %vm4686, %v4343
  %4857 = vst.msk [vmem:[%s3 + $0x2a8] sm:$0xf] %vm4686, %v4344
  %4858 = vst.msk [vmem:[%s3 + $0x2ac] sm:$0xf] %vm4686, %v4345
  %4859 = vst.msk [vmem:[%s3 + $0x2b0] sm:$0xf] %vm4686, %v4346
  %4860 = vst.msk [vmem:[%s3 + $0x2b4] sm:$0xf] %vm4686, %v4347
  %4861 = vst.msk [vmem:[%s3 + $0x2b8] sm:$0xf] %vm4686, %v4348
  %4862 = vst.msk [vmem:[%s3 + $0x2bc] sm:$0xf] %vm4686, %v4349
  %4863 = vst.msk [vmem:[%s3 + $0x2c0] sm:$0xf] %vm4686, %v4350
  %4864 = vst.msk [vmem:[%s3 + $0x2c4] sm:$0xf] %vm4686, %v4351
  %4865 = vst.msk [vmem:[%s3 + $0x2c8] sm:$0xf] %vm4686, %v4352
  %4866 = vst.msk [vmem:[%s3 + $0x2cc] sm:$0xf] %vm4686, %v4353
  %4867 = vst.msk [vmem:[%s3 + $0x2d0] sm:$0xf] %vm4686, %v4354
  %4868 = vst.msk [vmem:[%s3 + $0x2d4] sm:$0xf] %vm4686, %v4355
  %4869 = vst.msk [vmem:[%s3 + $0x2d8] sm:$0xf] %vm4686, %v4356
  %4870 = vst.msk [vmem:[%s3 + $0x2dc] sm:$0xf] %vm4686, %v4357
  %4871 = vst.msk [vmem:[%s3 + $0x2e0] sm:$0xf] %vm4686, %v4358
  %4872 = vst.msk [vmem:[%s3 + $0x2e4] sm:$0xf] %vm4686, %v4359
  %4873 = vst.msk [vmem:[%s3 + $0x2e8] sm:$0xf] %vm4686, %v4360
  %4874 = vst.msk [vmem:[%s3 + $0x2ec] sm:$0xf] %vm4686, %v4361
  %4875 = vst.msk [vmem:[%s3 + $0x2f0] sm:$0xf] %vm4686, %v4362
  %4876 = vst.msk [vmem:[%s3 + $0x2f4] sm:$0xf] %vm4686, %v4363
  %4877 = vst.msk [vmem:[%s3 + $0x2f8] sm:$0xf] %vm4686, %v4364
  %4878 = vst.msk [vmem:[%s3 + $0x2fc] sm:$0xf] %vm4686, %v4365
  %4879 = vst.msk [vmem:[%s3 + $0x300] sm:$0xf] %vm4686, %v4366
  %4880 = vst.msk [vmem:[%s3 + $0x304] sm:$0xf] %vm4686, %v4367
  %4881 = vst.msk [vmem:[%s3 + $0x308] sm:$0xf] %vm4686, %v4368
  %4882 = vst.msk [vmem:[%s3 + $0x30c] sm:$0xf] %vm4686, %v4369
  %4883 = vst.msk [vmem:[%s3 + $0x310] sm:$0xf] %vm4686, %v4370
  %4884 = vst.msk [vmem:[%s3 + $0x314] sm:$0xf] %vm4686, %v4371
  %4885 = vst.msk [vmem:[%s3 + $0x318] sm:$0xf] %vm4686, %v4372
  %4886 = vst.msk [vmem:[%s3 + $0x31c] sm:$0xf] %vm4686, %v4373
  %4887 = vst.msk [vmem:[%s3 + $0x320] sm:$0xf] %vm4686, %v4374
  %4888 = vst.msk [vmem:[%s3 + $0x324] sm:$0xf] %vm4686, %v4375
  %4889 = vst.msk [vmem:[%s3 + $0x328] sm:$0xf] %vm4686, %v4376
  %4890 = vst.msk [vmem:[%s3 + $0x32c] sm:$0xf] %vm4686, %v4377
  %4891 = vst.msk [vmem:[%s3 + $0x330] sm:$0xf] %vm4686, %v4378
  %4892 = vst.msk [vmem:[%s3 + $0x334] sm:$0xf] %vm4686, %v4379
  %4893 = vst.msk [vmem:[%s3 + $0x338] sm:$0xf] %vm4686, %v4380
  %4894 = vst.msk [vmem:[%s3 + $0x33c] sm:$0xf] %vm4686, %v4381
  %4895 = vst.msk [vmem:[%s3 + $0x340] sm:$0xf] %vm4686, %v4382
  %4896 = vst.msk [vmem:[%s3 + $0x344] sm:$0xf] %vm4686, %v4383
  %4897 = vst.msk [vmem:[%s3 + $0x348] sm:$0xf] %vm4686, %v4384
  %4898 = vst.msk [vmem:[%s3 + $0x34c] sm:$0xf] %vm4686, %v4385
  %4899 = vst.msk [vmem:[%s3 + $0x350] sm:$0xf] %vm4686, %v4386
  %4900 = vst.msk [vmem:[%s3 + $0x354] sm:$0xf] %vm4686, %v4387
  %4901 = vst.msk [vmem:[%s3 + $0x358] sm:$0xf] %vm4686, %v4388
  %4902 = vst.msk [vmem:[%s3 + $0x35c] sm:$0xf] %vm4686, %v4389
  %4903 = vst.msk [vmem:[%s3 + $0x360] sm:$0xf] %vm4686, %v4390
  %4904 = vst.msk [vmem:[%s3 + $0x364] sm:$0xf] %vm4686, %v4391
  %4905 = vst.msk [vmem:[%s3 + $0x368] sm:$0xf] %vm4686, %v4392
  %4906 = vst.msk [vmem:[%s3 + $0x36c] sm:$0xf] %vm4686, %v4393
  %4907 = vst.msk [vmem:[%s3 + $0x370] sm:$0xf] %vm4686, %v4394
  %4908 = vst.msk [vmem:[%s3 + $0x374] sm:$0xf] %vm4686, %v4395
  %4909 = vst.msk [vmem:[%s3 + $0x378] sm:$0xf] %vm4686, %v4396
  %4910 = vst.msk [vmem:[%s3 + $0x37c] sm:$0xf] %vm4686, %v4397
  %4911 = vst.msk [vmem:[%s3 + $0x380] sm:$0xf] %vm4686, %v4398
  %4912 = vst.msk [vmem:[%s3 + $0x384] sm:$0xf] %vm4686, %v4399
  %4913 = vst.msk [vmem:[%s3 + $0x388] sm:$0xf] %vm4686, %v4400
  %4914 = vst.msk [vmem:[%s3 + $0x38c] sm:$0xf] %vm4686, %v4401
  %4915 = vst.msk [vmem:[%s3 + $0x390] sm:$0xf] %vm4686, %v4402
  %4916 = vst.msk [vmem:[%s3 + $0x394] sm:$0xf] %vm4686, %v4403
  %4917 = vst.msk [vmem:[%s3 + $0x398] sm:$0xf] %vm4686, %v4404
  %4918 = vst.msk [vmem:[%s3 + $0x39c] sm:$0xf] %vm4686, %v4405
  %4919 = vst.msk [vmem:[%s3 + $0x3a0] sm:$0xf] %vm4686, %v4406
  %4920 = vst.msk [vmem:[%s3 + $0x3a4] sm:$0xf] %vm4686, %v4407
  %4921 = vst.msk [vmem:[%s3 + $0x3a8] sm:$0xf] %vm4686, %v4408
  %4922 = vst.msk [vmem:[%s3 + $0x3ac] sm:$0xf] %vm4686, %v4409
  %4923 = vst.msk [vmem:[%s3 + $0x3b0] sm:$0xf] %vm4686, %v4410
  %4924 = vst.msk [vmem:[%s3 + $0x3b4] sm:$0xf] %vm4686, %v4411
  %4925 = vst.msk [vmem:[%s3 + $0x3b8] sm:$0xf] %vm4686, %v4412
  %4926 = vst.msk [vmem:[%s3 + $0x3bc] sm:$0xf] %vm4686, %v4413
  %4927 = vst.msk [vmem:[%s3 + $0x3c0] sm:$0xf] %vm4686, %v4414
  %4928 = vst.msk [vmem:[%s3 + $0x3c4] sm:$0xf] %vm4686, %v4415
  %4929 = vst.msk [vmem:[%s3 + $0x3c8] sm:$0xf] %vm4686, %v4416
  %4930 = vst.msk [vmem:[%s3 + $0x3cc] sm:$0xf] %vm4686, %v4417
  %4931 = vst.msk [vmem:[%s3 + $0x3d0] sm:$0xf] %vm4686, %v4418
  %4932 = vst.msk [vmem:[%s3 + $0x3d4] sm:$0xf] %vm4686, %v4419
  %4933 = vst.msk [vmem:[%s3 + $0x3d8] sm:$0xf] %vm4686, %v4420
  %4934 = vst.msk [vmem:[%s3 + $0x3dc] sm:$0xf] %vm4686, %v4421
  %4935 = vst.msk [vmem:[%s3 + $0x3e0] sm:$0xf] %vm4686, %v4422
  %4936 = vst.msk [vmem:[%s3 + $0x3e4] sm:$0xf] %vm4686, %v4423
  %4937 = vst.msk [vmem:[%s3 + $0x3e8] sm:$0xf] %vm4686, %v4424
  %4938 = vst.msk [vmem:[%s3 + $0x3ec] sm:$0xf] %vm4686, %v4425
  %4939 = vst.msk [vmem:[%s3 + $0x3f0] sm:$0xf] %vm4686, %v4426
  %4940 = vst.msk [vmem:[%s3 + $0x3f4] sm:$0xf] %vm4686, %v4427
  %4941 = vst.msk [vmem:[%s3 + $0x3f8] sm:$0xf] %vm4686, %v4428
  %4942 = vst.msk [vmem:[%s3 + $0x3fc] sm:$0xf] %vm4686, %v4429
  // Predicated region
  $region14: #{basic_block_forward.3} parent=0 // pred_check
    _
  $region15: #{basic_block_forward.3} parent=0 // pred_check_branch
    %4944 = sbr.rel (0) target = $region17
  $region16: #{basic_block_forward.3} parent=0 // pred_region
    _
  $region17: #{basic_block_forward.3} parent=0 // pred_fallthru
    _
  // Predicated region
  $region18: #{basic_block_forward.3} parent=0 // pred_check
    _
  $region19: #{basic_block_forward.3} parent=0 // pred_check_branch
    %4946 = sbr.rel (0) target = $region21
  $region20: #{basic_block_forward.3} parent=0 // pred_region
    _
  $region21: #{basic_block_forward.3} parent=0 // pred_fallthru
    _

// kernel: basic_block_forward.4
$region0: #{basic_block_forward.4}
  #allocation0 [shape = 'u32[]', space=smem, size = 0x4, offset = 0x4, fixed_abs, tag = 'smem constant byte address 0x4 - core index']
  #allocation1 [shape = 'u32[144,128]{1,0:T(1,128)}', space=vmem, size = 0x12000, scoped, tag = 'internal scratch']
  %s0 = inlined_call_operand.vmem [shape: bf16[512,144], index: 0, kind: input, shape index: {}]
  %s1 = inlined_call_operand.vmem [shape: bf16[144,24], index: 1, kind: input, shape index: {}]
  %s2 = inlined_call_operand.vmem [shape: f32[1,24], index: 2, kind: input, shape index: {}]
  %s3 = inlined_call_operand.vmem [shape: bf16[512,24], index: 3, kind: output, shape index: {}]
  %s4 = sld [smem:[#allocation0]]
  $region22: #{basic_block_forward.4} parent=0
    _
  %s6 = ssub.s32 1, %s4
  %s7 = scalar_select 0, %s6, %s4
  // Predicated region
  $region2: #{basic_block_forward.4} parent=0 // pred_check
    _
  $region3: #{basic_block_forward.4} parent=0 // pred_check_branch
    %9 = sbr.rel (0) target = $region5
  $region4: #{basic_block_forward.4} parent=0 // pred_region
    _
  $region5: #{basic_block_forward.4} parent=0 // pred_fallthru
    _
  // Predicated region
  $region6: #{basic_block_forward.4} parent=0 // pred_check
    _
  $region7: #{basic_block_forward.4} parent=0 // pred_check_branch
    %11 = sbr.rel (0) target = $region9
  $region8: #{basic_block_forward.4} parent=0 // pred_region
    _
  $region9: #{basic_block_forward.4} parent=0 // pred_fallthru
    _
  // Predicated region
  $region10: #{basic_block_forward.4} parent=0 // pred_check
    _
  $region11: #{basic_block_forward.4} parent=0 // pred_check_branch
    %13 = sbr.rel (0) target = $region13
  $region12: #{basic_block_forward.4} parent=0 // pred_region
    _
  $region13: #{basic_block_forward.4} parent=0 // pred_fallthru
    _
  %v15 = vld [vmem:[%s0] sm:$0xff]
  %v16 = vld [vmem:[%s0 + $0x8] sm:$0xff]
  %v17 = vld [vmem:[%s0 + $0x10] sm:$0xff]
  %v18 = vld [vmem:[%s0 + $0x18] sm:$0xff]
  %v19 = vld [vmem:[%s0 + $0x20] sm:$0xff]
  %v20 = vld [vmem:[%s0 + $0x28] sm:$0xff]
  %v21 = vld [vmem:[%s0 + $0x30] sm:$0xff]
  %v22 = vld [vmem:[%s0 + $0x38] sm:$0xff]
  %v23 = vld [vmem:[%s0 + $0x40] sm:$0xff]
  %v24 = vld [vmem:[%s0 + $0x48] sm:$0xff]
  %v25 = vld [vmem:[%s0 + $0x50] sm:$0xff]
  %v26 = vld [vmem:[%s0 + $0x58] sm:$0xff]
  %v27 = vld [vmem:[%s0 + $0x60] sm:$0xff]
  %v28 = vld [vmem:[%s0 + $0x68] sm:$0xff]
  %v29 = vld [vmem:[%s0 + $0x70] sm:$0xff]
  %v30 = vld [vmem:[%s0 + $0x78] sm:$0xff]
  %v31 = vld [vmem:[%s0 + $0x80] sm:$0xff]
  %v32 = vld [vmem:[%s0 + $0x88] sm:$0xff]
  %v33 = vld [vmem:[%s0 + $0x90] sm:$0xff]
  %v34 = vld [vmem:[%s0 + $0x98] sm:$0xff]
  %v35 = vld [vmem:[%s0 + $0xa0] sm:$0xff]
  %v36 = vld [vmem:[%s0 + $0xa8] sm:$0xff]
  %v37 = vld [vmem:[%s0 + $0xb0] sm:$0xff]
  %v38 = vld [vmem:[%s0 + $0xb8] sm:$0xff]
  %v39 = vld [vmem:[%s0 + $0xc0] sm:$0xff]
  %v40 = vld [vmem:[%s0 + $0xc8] sm:$0xff]
  %v41 = vld [vmem:[%s0 + $0xd0] sm:$0xff]
  %v42 = vld [vmem:[%s0 + $0xd8] sm:$0xff]
  %v43 = vld [vmem:[%s0 + $0xe0] sm:$0xff]
  %v44 = vld [vmem:[%s0 + $0xe8] sm:$0xff]
  %v45 = vld [vmem:[%s0 + $0xf0] sm:$0xff]
  %v46 = vld [vmem:[%s0 + $0xf8] sm:$0xff]
  %v47 = vld [vmem:[%s0 + $0x100] sm:$0xff]
  %v48 = vld [vmem:[%s0 + $0x108] sm:$0xff]
  %v49 = vld [vmem:[%s0 + $0x110] sm:$0xff]
  %v50 = vld [vmem:[%s0 + $0x118] sm:$0xff]
  %v51 = vld [vmem:[%s0 + $0x120] sm:$0xff]
  %v52 = vld [vmem:[%s0 + $0x128] sm:$0xff]
  %v53 = vld [vmem:[%s0 + $0x130] sm:$0xff]
  %v54 = vld [vmem:[%s0 + $0x138] sm:$0xff]
  %v55 = vld [vmem:[%s0 + $0x140] sm:$0xff]
  %v56 = vld [vmem:[%s0 + $0x148] sm:$0xff]
  %v57 = vld [vmem:[%s0 + $0x150] sm:$0xff]
  %v58 = vld [vmem:[%s0 + $0x158] sm:$0xff]
  %v59 = vld [vmem:[%s0 + $0x160] sm:$0xff]
  %v60 = vld [vmem:[%s0 + $0x168] sm:$0xff]
  %v61 = vld [vmem:[%s0 + $0x170] sm:$0xff]
  %v62 = vld [vmem:[%s0 + $0x178] sm:$0xff]
  %v63 = vld [vmem:[%s0 + $0x180] sm:$0xff]
  %v64 = vld [vmem:[%s0 + $0x188] sm:$0xff]
  %v65 = vld [vmem:[%s0 + $0x190] sm:$0xff]
  %v66 = vld [vmem:[%s0 + $0x198] sm:$0xff]
  %v67 = vld [vmem:[%s0 + $0x1a0] sm:$0xff]
  %v68 = vld [vmem:[%s0 + $0x1a8] sm:$0xff]
  %v69 = vld [vmem:[%s0 + $0x1b0] sm:$0xff]
  %v70 = vld [vmem:[%s0 + $0x1b8] sm:$0xff]
  %v71 = vld [vmem:[%s0 + $0x1c0] sm:$0xff]
  %v72 = vld [vmem:[%s0 + $0x1c8] sm:$0xff]
  %v73 = vld [vmem:[%s0 + $0x1d0] sm:$0xff]
  %v74 = vld [vmem:[%s0 + $0x1d8] sm:$0xff]
  %v75 = vld [vmem:[%s0 + $0x1e0] sm:$0xff]
  %v76 = vld [vmem:[%s0 + $0x1e8] sm:$0xff]
  %v77 = vld [vmem:[%s0 + $0x1f0] sm:$0xff]
  %v78 = vld [vmem:[%s0 + $0x1f8] sm:$0xff]
  %v79 = vld [vmem:[%s1] sm:$0xf]
  %v80 = vld [vmem:[%s1 + $0x4] sm:$0xf]
  %v81 = vld [vmem:[%s1 + $0x8] sm:$0xf]
  %v82 = vld [vmem:[%s1 + $0xc] sm:$0xf]
  %v83 = vld [vmem:[%s1 + $0x10] sm:$0xf]
  %v84 = vld [vmem:[%s1 + $0x14] sm:$0xf]
  %v85 = vld [vmem:[%s1 + $0x18] sm:$0xf]
  %v86 = vld [vmem:[%s1 + $0x1c] sm:$0xf]
  %v87 = vld [vmem:[%s1 + $0x20] sm:$0xf]
  %v88 = vld [vmem:[%s1 + $0x24] sm:$0xf]
  %v89 = vld [vmem:[%s1 + $0x28] sm:$0xf]
  %v90 = vld [vmem:[%s1 + $0x2c] sm:$0xf]
  %v91 = vld [vmem:[%s1 + $0x30] sm:$0xf]
  %v92 = vld [vmem:[%s1 + $0x34] sm:$0xf]
  %v93 = vld [vmem:[%s1 + $0x38] sm:$0xf]
  %v94 = vld [vmem:[%s1 + $0x3c] sm:$0xf]
  %v95 = vld [vmem:[%s1 + $0x40] sm:$0xf]
  %v96 = vld [vmem:[%s1 + $0x44] sm:$0xf]
  %v97 = vld [vmem:[%s2] sm:$0x1]
  %v99 = vlaneseq
  %v100 = vshrl.u32 %v99, 7
  %v101 = vsub.s32 0, %v100
  %v102 = vrot.slane %v97, %v101
  %v168 = vunpack.c.l.b16 %v15
  %v169 = vunpack.c.h.b16 %v15
  %v170 = vunpack.c.l.b16 %v16
  %v171 = vunpack.c.h.b16 %v16
  %v172 = vunpack.c.l.b16 %v17
  %v173 = vunpack.c.h.b16 %v17
  %v174 = vunpack.c.l.b16 %v18
  %v175 = vunpack.c.h.b16 %v18
  %v176 = vunpack.c.l.b16 %v19
  %v177 = vunpack.c.h.b16 %v19
  %v178 = vunpack.c.l.b16 %v20
  %v179 = vunpack.c.h.b16 %v20
  %v180 = vunpack.c.l.b16 %v21
  %v181 = vunpack.c.h.b16 %v21
  %v182 = vunpack.c.l.b16 %v22
  %v183 = vunpack.c.h.b16 %v22
  %v184 = vunpack.c.l.b16 %v23
  %v185 = vunpack.c.h.b16 %v23
  %v186 = vunpack.c.l.b16 %v24
  %v187 = vunpack.c.h.b16 %v24
  %v188 = vunpack.c.l.b16 %v25
  %v189 = vunpack.c.h.b16 %v25
  %v190 = vunpack.c.l.b16 %v26
  %v191 = vunpack.c.h.b16 %v26
  %v192 = vunpack.c.l.b16 %v27
  %v193 = vunpack.c.h.b16 %v27
  %v194 = vunpack.c.l.b16 %v28
  %v195 = vunpack.c.h.b16 %v28
  %v196 = vunpack.c.l.b16 %v29
  %v197 = vunpack.c.h.b16 %v29
  %v198 = vunpack.c.l.b16 %v30
  %v199 = vunpack.c.h.b16 %v30
  %v200 = vunpack.c.l.b16 %v31
  %v201 = vunpack.c.h.b16 %v31
  %v202 = vunpack.c.l.b16 %v32
  %v203 = vunpack.c.h.b16 %v32
  %v204 = vunpack.c.l.b16 %v33
  %v205 = vunpack.c.h.b16 %v33
  %v206 = vunpack.c.l.b16 %v34
  %v207 = vunpack.c.h.b16 %v34
  %v208 = vunpack.c.l.b16 %v35
  %v209 = vunpack.c.h.b16 %v35
  %v210 = vunpack.c.l.b16 %v36
  %v211 = vunpack.c.h.b16 %v36
  %v212 = vunpack.c.l.b16 %v37
  %v213 = vunpack.c.h.b16 %v37
  %v214 = vunpack.c.l.b16 %v38
  %v215 = vunpack.c.h.b16 %v38
  %v216 = vunpack.c.l.b16 %v39
  %v217 = vunpack.c.h.b16 %v39
  %v218 = vunpack.c.l.b16 %v40
  %v219 = vunpack.c.h.b16 %v40
  %v220 = vunpack.c.l.b16 %v41
  %v221 = vunpack.c.h.b16 %v41
  %v222 = vunpack.c.l.b16 %v42
  %v223 = vunpack.c.h.b16 %v42
  %v224 = vunpack.c.l.b16 %v43
  %v225 = vunpack.c.h.b16 %v43
  %v226 = vunpack.c.l.b16 %v44
  %v227 = vunpack.c.h.b16 %v44
  %v228 = vunpack.c.l.b16 %v45
  %v229 = vunpack.c.h.b16 %v45
  %v230 = vunpack.c.l.b16 %v46
  %v231 = vunpack.c.h.b16 %v46
  %v232 = vunpack.c.l.b16 %v47
  %v233 = vunpack.c.h.b16 %v47
  %v234 = vunpack.c.l.b16 %v48
  %v235 = vunpack.c.h.b16 %v48
  %v236 = vunpack.c.l.b16 %v49
  %v237 = vunpack.c.h.b16 %v49
  %v238 = vunpack.c.l.b16 %v50
  %v239 = vunpack.c.h.b16 %v50
  %v240 = vunpack.c.l.b16 %v51
  %v241 = vunpack.c.h.b16 %v51
  %v242 = vunpack.c.l.b16 %v52
  %v243 = vunpack.c.h.b16 %v52
  %v244 = vunpack.c.l.b16 %v53
  %v245 = vunpack.c.h.b16 %v53
  %v246 = vunpack.c.l.b16 %v54
  %v247 = vunpack.c.h.b16 %v54
  %v248 = vunpack.c.l.b16 %v55
  %v249 = vunpack.c.h.b16 %v55
  %v250 = vunpack.c.l.b16 %v56
  %v251 = vunpack.c.h.b16 %v56
  %v252 = vunpack.c.l.b16 %v57
  %v253 = vunpack.c.h.b16 %v57
  %v254 = vunpack.c.l.b16 %v58
  %v255 = vunpack.c.h.b16 %v58
  %v256 = vunpack.c.l.b16 %v59
  %v257 = vunpack.c.h.b16 %v59
  %v258 = vunpack.c.l.b16 %v60
  %v259 = vunpack.c.h.b16 %v60
  %v260 = vunpack.c.l.b16 %v61
  %v261 = vunpack.c.h.b16 %v61
  %v262 = vunpack.c.l.b16 %v62
  %v263 = vunpack.c.h.b16 %v62
  %v264 = vunpack.c.l.b16 %v63
  %v265 = vunpack.c.h.b16 %v63
  %v266 = vunpack.c.l.b16 %v64
  %v267 = vunpack.c.h.b16 %v64
  %v268 = vunpack.c.l.b16 %v65
  %v269 = vunpack.c.h.b16 %v65
  %v270 = vunpack.c.l.b16 %v66
  %v271 = vunpack.c.h.b16 %v66
  %v272 = vunpack.c.l.b16 %v67
  %v273 = vunpack.c.h.b16 %v67
  %v274 = vunpack.c.l.b16 %v68
  %v275 = vunpack.c.h.b16 %v68
  %v276 = vunpack.c.l.b16 %v69
  %v277 = vunpack.c.h.b16 %v69
  %v278 = vunpack.c.l.b16 %v70
  %v279 = vunpack.c.h.b16 %v70
  %v280 = vunpack.c.l.b16 %v71
  %v281 = vunpack.c.h.b16 %v71
  %v282 = vunpack.c.l.b16 %v72
  %v283 = vunpack.c.h.b16 %v72
  %v284 = vunpack.c.l.b16 %v73
  %v285 = vunpack.c.h.b16 %v73
  %v286 = vunpack.c.l.b16 %v74
  %v287 = vunpack.c.h.b16 %v74
  %v288 = vunpack.c.l.b16 %v75
  %v289 = vunpack.c.h.b16 %v75
  %v290 = vunpack.c.l.b16 %v76
  %v291 = vunpack.c.h.b16 %v76
  %v292 = vunpack.c.l.b16 %v77
  %v293 = vunpack.c.h.b16 %v77
  %v294 = vunpack.c.l.b16 %v78
  %v295 = vunpack.c.h.b16 %v78
  %v296 = vpack.c.b16 %v170, %v168
  %v297 = vpack.c.b16 %v171, %v169
  %v298 = vpack.c.b16 %v174, %v172
  %v299 = vpack.c.b16 %v175, %v173
  %v300 = vpack.c.b16 %v178, %v176
  %v301 = vpack.c.b16 %v179, %v177
  %v302 = vpack.c.b16 %v182, %v180
  %v303 = vpack.c.b16 %v183, %v181
  %v304 = vpack.c.b16 %v186, %v184
  %v305 = vpack.c.b16 %v187, %v185
  %v306 = vpack.c.b16 %v190, %v188
  %v307 = vpack.c.b16 %v191, %v189
  %v308 = vpack.c.b16 %v194, %v192
  %v309 = vpack.c.b16 %v195, %v193
  %v310 = vpack.c.b16 %v198, %v196
  %v311 = vpack.c.b16 %v199, %v197
  %v312 = vpack.c.b16 %v202, %v200
  %v313 = vpack.c.b16 %v203, %v201
  %v314 = vpack.c.b16 %v206, %v204
  %v315 = vpack.c.b16 %v207, %v205
  %v316 = vpack.c.b16 %v210, %v208
  %v317 = vpack.c.b16 %v211, %v209
  %v318 = vpack.c.b16 %v214, %v212
  %v319 = vpack.c.b16 %v215, %v213
  %v320 = vpack.c.b16 %v218, %v216
  %v321 = vpack.c.b16 %v219, %v217
  %v322 = vpack.c.b16 %v222, %v220
  %v323 = vpack.c.b16 %v223, %v221
  %v324 = vpack.c.b16 %v226, %v224
  %v325 = vpack.c.b16 %v227, %v225
  %v326 = vpack.c.b16 %v230, %v228
  %v327 = vpack.c.b16 %v231, %v229
  %v328 = vpack.c.b16 %v234, %v232
  %v329 = vpack.c.b16 %v235, %v233
  %v330 = vpack.c.b16 %v238, %v236
  %v331 = vpack.c.b16 %v239, %v237
  %v332 = vpack.c.b16 %v242, %v240
  %v333 = vpack.c.b16 %v243, %v241
  %v334 = vpack.c.b16 %v246, %v244
  %v335 = vpack.c.b16 %v247, %v245
  %v336 = vpack.c.b16 %v250, %v248
  %v337 = vpack.c.b16 %v251, %v249
  %v338 = vpack.c.b16 %v254, %v252
  %v339 = vpack.c.b16 %v255, %v253
  %v340 = vpack.c.b16 %v258, %v256
  %v341 = vpack.c.b16 %v259, %v257
  %v342 = vpack.c.b16 %v262, %v260
  %v343 = vpack.c.b16 %v263, %v261
  %v344 = vpack.c.b16 %v266, %v264
  %v345 = vpack.c.b16 %v267, %v265
  %v346 = vpack.c.b16 %v270, %v268
  %v347 = vpack.c.b16 %v271, %v269
  %v348 = vpack.c.b16 %v274, %v272
  %v349 = vpack.c.b16 %v275, %v273
  %v350 = vpack.c.b16 %v278, %v276
  %v351 = vpack.c.b16 %v279, %v277
  %v352 = vpack.c.b16 %v282, %v280
  %v353 = vpack.c.b16 %v283, %v281
  %v354 = vpack.c.b16 %v286, %v284
  %v355 = vpack.c.b16 %v287, %v285
  %v356 = vpack.c.b16 %v290, %v288
  %v357 = vpack.c.b16 %v291, %v289
  %v358 = vpack.c.b16 %v294, %v292
  %v359 = vpack.c.b16 %v295, %v293
  %v410 = vunpack.c.l.b16 %v79
  %v411 = vunpack.c.l.b16 %v80
  %v412 = vunpack.c.l.b16 %v81
  %v413 = vunpack.c.l.b16 %v82
  %v414 = vunpack.c.l.b16 %v83
  %v415 = vunpack.c.l.b16 %v84
  %v416 = vunpack.c.l.b16 %v85
  %v417 = vunpack.c.l.b16 %v86
  %v418 = vunpack.c.l.b16 %v87
  %v419 = vunpack.c.l.b16 %v88
  %v420 = vunpack.c.l.b16 %v89
  %v421 = vunpack.c.l.b16 %v90
  %v422 = vunpack.c.l.b16 %v91
  %v423 = vunpack.c.l.b16 %v92
  %v424 = vunpack.c.l.b16 %v93
  %v425 = vunpack.c.l.b16 %v94
  %v426 = vunpack.c.l.b16 %v95
  %v427 = vunpack.c.l.b16 %v96
  %v428 = vpack.c.b16 %v411, %v410
  %v429 = vpack.c.b16 %v413, %v412
  %v430 = vpack.c.b16 %v415, %v414
  %v431 = vpack.c.b16 %v417, %v416
  %v432 = vpack.c.b16 %v419, %v418
  %v433 = vpack.c.b16 %v421, %v420
  %v434 = vpack.c.b16 %v423, %v422
  %v435 = vpack.c.b16 %v425, %v424
  %v436 = vpack.c.b16 %v427, %v426
  %vm446 = vcmask 130048
  %v448 = vsel %vm446, %v297, 0
  %v451 = vsel %vm446, %v299, 0
  %v454 = vsel %vm446, %v301, 0
  %v457 = vsel %vm446, %v303, 0
  %v460 = vsel %vm446, %v305, 0
  %v463 = vsel %vm446, %v307, 0
  %v466 = vsel %vm446, %v309, 0
  %v469 = vsel %vm446, %v311, 0
  %v472 = vsel %vm446, %v313, 0
  %v475 = vsel %vm446, %v315, 0
  %v478 = vsel %vm446, %v317, 0
  %v481 = vsel %vm446, %v319, 0
  %v484 = vsel %vm446, %v321, 0
  %v487 = vsel %vm446, %v323, 0
  %v490 = vsel %vm446, %v325, 0
  %v493 = vsel %vm446, %v327, 0
  %v496 = vsel %vm446, %v329, 0
  %v499 = vsel %vm446, %v331, 0
  %v502 = vsel %vm446, %v333, 0
  %v505 = vsel %vm446, %v335, 0
  %v508 = vsel %vm446, %v337, 0
  %v511 = vsel %vm446, %v339, 0
  %v514 = vsel %vm446, %v341, 0
  %v517 = vsel %vm446, %v343, 0
  %v520 = vsel %vm446, %v345, 0
  %v523 = vsel %vm446, %v347, 0
  %v526 = vsel %vm446, %v349, 0
  %v529 = vsel %vm446, %v351, 0
  %v532 = vsel %vm446, %v353, 0
  %v535 = vsel %vm446, %v355, 0
  %v538 = vsel %vm446, %v357, 0
  %v541 = vsel %vm446, %v359, 0
  %543 = vmatprep.subr.bf16.mxu0 0
  %544 = vmatpush1.bf16.msra.mxu0 %v428
  %545 = vmatprep.subr.bf16.mxu0 0
  %546 = vmatpush1.bf16.msra.mxu0 %v429
  %547 = vmatprep.subr.bf16.mxu0 0
  %548 = vmatpush1.bf16.msra.mxu0 %v430
  %549 = vmatprep.subr.bf16.mxu0 0
  %550 = vmatpush1.bf16.msra.mxu0 %v431
  %551 = vmatprep.subr.bf16.mxu0 0
  %552 = vmatpush1.bf16.msra.mxu0 %v432
  %553 = vmatprep.subr.bf16.mxu0 0
  %554 = vmatpush1.bf16.msra.mxu0 %v433
  %555 = vmatprep.subr.bf16.mxu0 0
  %556 = vmatpush1.bf16.msra.mxu0 %v434
  %557 = vmatprep.subr.bf16.mxu0 0
  %558 = vmatpush1.bf16.msra.mxu0 %v435
  %559 = vmatprep.subr.bf16.mxu0 0
  %560 = vmatpush1.bf16.msra.mxu0 %v436
  %561 = vmatprep.subr.bf16.mxu0 0
  %562 = vmatpush1.bf16.msra.mxu0 0
  %563 = vmatprep.subr.bf16.mxu0 0
  %564 = vmatpush1.bf16.msra.mxu0 0
  %565 = vmatprep.subr.bf16.mxu0 0
  %566 = vmatpush1.bf16.msra.mxu0 0
  %567 = vmatprep.subr.bf16.mxu0 0
  %568 = vmatpush1.bf16.msra.mxu0 0
  %569 = vmatprep.subr.bf16.mxu0 0
  %570 = vmatpush1.bf16.msra.mxu0 0
  %571 = vmatprep.subr.bf16.mxu0 0
  %572 = vmatpush1.bf16.msra.mxu0 0
  %573 = vmatprep.subr.bf16.mxu0 0
  %574 = vmatpush1.bf16.msra.mxu0 0
  %575 = vmatprep.mubr.bf16.mxu0 %v448
  %576 = vmatmul.mubr.bf16.gmra.mrb[0].mxu0 %v296
  %v577 = vpop.f32.mrb[0].mxu0
  %v578 = vadd.f32 %v102, %v577
  %v579 = vpop.f32.mrb[0].mxu0
  %v580 = vpop.f32.mrb[0].mxu0
  %v581 = vadd.f32 %v102, %v580
  %v582 = vpop.f32.mrb[0].mxu0
  %583 = vmatprep.mubr.bf16.mxu0 %v451
  %584 = vmatmul.mubr.bf16.gmra.mrb[0].mxu0 %v298
  %v585 = vpop.f32.mrb[0].mxu0
  %v586 = vadd.f32 %v102, %v585
  %v587 = vpop.f32.mrb[0].mxu0
  %v588 = vpop.f32.mrb[0].mxu0
  %v589 = vadd.f32 %v102, %v588
  %v590 = vpop.f32.mrb[0].mxu0
  %591 = vmatprep.mubr.bf16.mxu0 %v454
  %592 = vmatmul.mubr.bf16.gmra.mrb[0].mxu0 %v300
  %v593 = vpop.f32.mrb[0].mxu0
  %v594 = vadd.f32 %v102, %v593
  %v595 = vpop.f32.mrb[0].mxu0
  %v596 = vpop.f32.mrb[0].mxu0
  %v597 = vadd.f32 %v102, %v596
  %v598 = vpop.f32.mrb[0].mxu0
  %599 = vmatprep.mubr.bf16.mxu0 %v457
  %600 = vmatmul.mubr.bf16.gmra.mrb[0].mxu0 %v302
  %v601 = vpop.f32.mrb[0].mxu0
  %v602 = vadd.f32 %v102, %v601
  %v603 = vpop.f32.mrb[0].mxu0
  %v604 = vpop.f32.mrb[0].mxu0
  %v605 = vadd.f32 %v102, %v604
  %v606 = vpop.f32.mrb[0].mxu0
  %607 = vmatprep.mubr.bf16.mxu0 %v460
  %608 = vmatmul.mubr.bf16.gmra.mrb[0].mxu0 %v304
  %v609 = vpop.f32.mrb[0].mxu0
  %v610 = vadd.f32 %v102, %v609
  %v611 = vpop.f32.mrb[0].mxu0
  %v612 = vpop.f32.mrb[0].mxu0
  %v613 = vadd.f32 %v102, %v612
  %v614 = vpop.f32.mrb[0].mxu0
  %615 = vmatprep.mubr.bf16.mxu0 %v463
  %616 = vmatmul.mubr.bf16.gmra.mrb[0].mxu0 %v306
  %v617 = vpop.f32.mrb[0].mxu0
  %v618 = vadd.f32 %v102, %v617
  %v619 = vpop.f32.mrb[0].mxu0
  %v620 = vpop.f32.mrb[0].mxu0
  %v621 = vadd.f32 %v102, %v620
  %v622 = vpop.f32.mrb[0].mxu0
  %623 = vmatprep.mubr.bf16.mxu0 %v466
  %624 = vmatmul.mubr.bf16.gmra.mrb[0].mxu0 %v308
  %v625 = vpop.f32.mrb[0].mxu0
  %v626 = vadd.f32 %v102, %v625
  %v627 = vpop.f32.mrb[0].mxu0
  %v628 = vpop.f32.mrb[0].mxu0
  %v629 = vadd.f32 %v102, %v628
  %v630 = vpop.f32.mrb[0].mxu0
  %631 = vmatprep.mubr.bf16.mxu0 %v469
  %632 = vmatmul.mubr.bf16.gmra.mrb[0].mxu0 %v310
  %v633 = vpop.f32.mrb[0].mxu0
  %v634 = vadd.f32 %v102, %v633
  %v635 = vpop.f32.mrb[0].mxu0
  %v636 = vpop.f32.mrb[0].mxu0
  %v637 = vadd.f32 %v102, %v636
  %v638 = vpop.f32.mrb[0].mxu0
  %639 = vmatprep.mubr.bf16.mxu0 %v472
  %640 = vmatmul.mubr.bf16.gmra.mrb[0].mxu0 %v312
  %v641 = vpop.f32.mrb[0].mxu0
  %v642 = vadd.f32 %v102, %v641
  %v643 = vpop.f32.mrb[0].mxu0
  %v644 = vpop.f32.mrb[0].mxu0
  %v645 = vadd.f32 %v102, %v644
  %v646 = vpop.f32.mrb[0].mxu0
  %647 = vmatprep.mubr.bf16.mxu0 %v475
  %648 = vmatmul.mubr.bf16.gmra.mrb[0].mxu0 %v314
  %v649 = vpop.f32.mrb[0].mxu0
  %v650 = vadd.f32 %v102, %v649
  %v651 = vpop.f32.mrb[0].mxu0
  %v652 = vpop.f32.mrb[0].mxu0
  %v653 = vadd.f32 %v102, %v652
  %v654 = vpop.f32.mrb[0].mxu0
  %655 = vmatprep.mubr.bf16.mxu0 %v478
  %656 = vmatmul.mubr.bf16.gmra.mrb[0].mxu0 %v316
  %v657 = vpop.f32.mrb[0].mxu0
  %v658 = vadd.f32 %v102, %v657
  %v659 = vpop.f32.mrb[0].mxu0
  %v660 = vpop.f32.mrb[0].mxu0
  %v661 = vadd.f32 %v102, %v660
  %v662 = vpop.f32.mrb[0].mxu0
  %663 = vmatprep.mubr.bf16.mxu0 %v481
  %664 = vmatmul.mubr.bf16.gmra.mrb[0].mxu0 %v318
  %v665 = vpop.f32.mrb[0].mxu0
  %v666 = vadd.f32 %v102, %v665
  %v667 = vpop.f32.mrb[0].mxu0
  %v668 = vpop.f32.mrb[0].mxu0
  %v669 = vadd.f32 %v102, %v668
  %v670 = vpop.f32.mrb[0].mxu0
  %671 = vmatprep.mubr.bf16.mxu0 %v484
  %672 = vmatmul.mubr.bf16.gmra.mrb[0].mxu0 %v320
  %v673 = vpop.f32.mrb[0].mxu0
  %v674 = vadd.f32 %v102, %v673
  %v675 = vpop.f32.mrb[0].mxu0
  %v676 = vpop.f32.mrb[0].mxu0
  %v677 = vadd.f32 %v102, %v676
  %v678 = vpop.f32.mrb[0].mxu0
  %679 = vmatprep.mubr.bf16.mxu0 %v487
  %680 = vmatmul.mubr.bf16.gmra.mrb[0].mxu0 %v322
  %v681 = vpop.f32.mrb[0].mxu0
  %v682 = vadd.f32 %v102, %v681
  %v683 = vpop.f32.mrb[0].mxu0
  %v684 = vpop.f32.mrb[0].mxu0
  %v685 = vadd.f32 %v102, %v684
  %v686 = vpop.f32.mrb[0].mxu0
  %687 = vmatprep.mubr.bf16.mxu0 %v490
  %688 = vmatmul.mubr.bf16.gmra.mrb[0].mxu0 %v324
  %v689 = vpop.f32.mrb[0].mxu0
  %v690 = vadd.f32 %v102, %v689
  %v691 = vpop.f32.mrb[0].mxu0
  %v692 = vpop.f32.mrb[0].mxu0
  %v693 = vadd.f32 %v102, %v692
  %v694 = vpop.f32.mrb[0].mxu0
  %695 = vmatprep.mubr.bf16.mxu0 %v493
  %696 = vmatmul.mubr.bf16.gmra.mrb[0].mxu0 %v326
  %v697 = vpop.f32.mrb[0].mxu0
  %v698 = vadd.f32 %v102, %v697
  %v699 = vpop.f32.mrb[0].mxu0
  %v700 = vpop.f32.mrb[0].mxu0
  %v701 = vadd.f32 %v102, %v700
  %v702 = vpop.f32.mrb[0].mxu0
  %703 = vmatprep.mubr.bf16.mxu0 %v496
  %704 = vmatmul.mubr.bf16.gmra.mrb[0].mxu0 %v328
  %v705 = vpop.f32.mrb[0].mxu0
  %v706 = vadd.f32 %v102, %v705
  %v707 = vpop.f32.mrb[0].mxu0
  %v708 = vpop.f32.mrb[0].mxu0
  %v709 = vadd.f32 %v102, %v708
  %v710 = vpop.f32.mrb[0].mxu0
  %711 = vmatprep.mubr.bf16.mxu0 %v499
  %712 = vmatmul.mubr.bf16.gmra.mrb[0].mxu0 %v330
  %v713 = vpop.f32.mrb[0].mxu0
  %v714 = vadd.f32 %v102, %v713
  %v715 = vpop.f32.mrb[0].mxu0
  %v716 = vpop.f32.mrb[0].mxu0
  %v717 = vadd.f32 %v102, %v716
  %v718 = vpop.f32.mrb[0].mxu0
  %719 = vmatprep.mubr.bf16.mxu0 %v502
  %720 = vmatmul.mubr.bf16.gmra.mrb[0].mxu0 %v332
  %v721 = vpop.f32.mrb[0].mxu0
  %v722 = vadd.f32 %v102, %v721
  %v723 = vpop.f32.mrb[0].mxu0
  %v724 = vpop.f32.mrb[0].mxu0
  %v725 = vadd.f32 %v102, %v724
  %v726 = vpop.f32.mrb[0].mxu0
  %727 = vmatprep.mubr.bf16.mxu0 %v505
  %728 = vmatmul.mubr.bf16.gmra.mrb[0].mxu0 %v334
  %v729 = vpop.f32.mrb[0].mxu0
  %v730 = vadd.f32 %v102, %v729
  %v731 = vpop.f32.mrb[0].mxu0
  %v732 = vpop.f32.mrb[0].mxu0
  %v733 = vadd.f32 %v102, %v732
  %v734 = vpop.f32.mrb[0].mxu0
  %735 = vmatprep.mubr.bf16.mxu0 %v508
  %736 = vmatmul.mubr.bf16.gmra.mrb[0].mxu0 %v336
  %v737 = vpop.f32.mrb[0].mxu0
  %v738 = vadd.f32 %v102, %v737
  %v739 = vpop.f32.mrb[0].mxu0
  %v740 = vpop.f32.mrb[0].mxu0
  %v741 = vadd.f32 %v102, %v740
  %v742 = vpop.f32.mrb[0].mxu0
  %743 = vmatprep.mubr.bf16.mxu0 %v511
  %744 = vmatmul.mubr.bf16.gmra.mrb[0].mxu0 %v338
  %v745 = vpop.f32.mrb[0].mxu0
  %v746 = vadd.f32 %v102, %v745
  %v747 = vpop.f32.mrb[0].mxu0
  %v748 = vpop.f32.mrb[0].mxu0
  %v749 = vadd.f32 %v102, %v748
  %v750 = vpop.f32.mrb[0].mxu0
  %751 = vmatprep.mubr.bf16.mxu0 %v514
  %752 = vmatmul.mubr.bf16.gmra.mrb[0].mxu0 %v340
  %v753 = vpop.f32.mrb[0].mxu0
  %v754 = vadd.f32 %v102, %v753
  %v755 = vpop.f32.mrb[0].mxu0
  %v756 = vpop.f32.mrb[0].mxu0
  %v757 = vadd.f32 %v102, %v756
  %v758 = vpop.f32.mrb[0].mxu0
  %759 = vmatprep.mubr.bf16.mxu0 %v517
  %760 = vmatmul.mubr.bf16.gmra.mrb[0].mxu0 %v342
  %v761 = vpop.f32.mrb[0].mxu0
  %v762 = vadd.f32 %v102, %v761
  %v763 = vpop.f32.mrb[0].mxu0
  %v764 = vpop.f32.mrb[0].mxu0
  %v765 = vadd.f32 %v102, %v764
  %v766 = vpop.f32.mrb[0].mxu0
  %767 = vmatprep.mubr.bf16.mxu0 %v520
  %768 = vmatmul.mubr.bf16.gmra.mrb[0].mxu0 %v344
  %v769 = vpop.f32.mrb[0].mxu0
  %v770 = vadd.f32 %v102, %v769
  %v771 = vpop.f32.mrb[0].mxu0
  %v772 = vpop.f32.mrb[0].mxu0
  %v773 = vadd.f32 %v102, %v772
  %v774 = vpop.f32.mrb[0].mxu0
  %775 = vmatprep.mubr.bf16.mxu0 %v523
  %776 = vmatmul.mubr.bf16.gmra.mrb[0].mxu0 %v346
  %v777 = vpop.f32.mrb[0].mxu0
  %v778 = vadd.f32 %v102, %v777
  %v779 = vpop.f32.mrb[0].mxu0
  %v780 = vpop.f32.mrb[0].mxu0
  %v781 = vadd.f32 %v102, %v780
  %v782 = vpop.f32.mrb[0].mxu0
  %783 = vmatprep.mubr.bf16.mxu0 %v526
  %784 = vmatmul.mubr.bf16.gmra.mrb[0].mxu0 %v348
  %v785 = vpop.f32.mrb[0].mxu0
  %v786 = vadd.f32 %v102, %v785
  %v787 = vpop.f32.mrb[0].mxu0
  %v788 = vpop.f32.mrb[0].mxu0
  %v789 = vadd.f32 %v102, %v788
  %v790 = vpop.f32.mrb[0].mxu0
  %791 = vmatprep.mubr.bf16.mxu0 %v529
  %792 = vmatmul.mubr.bf16.gmra.mrb[0].mxu0 %v350
  %v793 = vpop.f32.mrb[0].mxu0
  %v794 = vadd.f32 %v102, %v793
  %v795 = vpop.f32.mrb[0].mxu0
  %v796 = vpop.f32.mrb[0].mxu0
  %v797 = vadd.f32 %v102, %v796
  %v798 = vpop.f32.mrb[0].mxu0
  %799 = vmatprep.mubr.bf16.mxu0 %v532
  %800 = vmatmul.mubr.bf16.gmra.mrb[0].mxu0 %v352
  %v801 = vpop.f32.mrb[0].mxu0
  %v802 = vadd.f32 %v102, %v801
  %v803 = vpop.f32.mrb[0].mxu0
  %v804 = vpop.f32.mrb[0].mxu0
  %v805 = vadd.f32 %v102, %v804
  %v806 = vpop.f32.mrb[0].mxu0
  %807 = vmatprep.mubr.bf16.mxu0 %v535
  %808 = vmatmul.mubr.bf16.gmra.mrb[0].mxu0 %v354
  %v809 = vpop.f32.mrb[0].mxu0
  %v810 = vadd.f32 %v102, %v809
  %v811 = vpop.f32.mrb[0].mxu0
  %v812 = vpop.f32.mrb[0].mxu0
  %v813 = vadd.f32 %v102, %v812
  %v814 = vpop.f32.mrb[0].mxu0
  %815 = vmatprep.mubr.bf16.mxu0 %v538
  %816 = vmatmul.mubr.bf16.gmra.mrb[0].mxu0 %v356
  %v817 = vpop.f32.mrb[0].mxu0
  %v818 = vadd.f32 %v102, %v817
  %v819 = vpop.f32.mrb[0].mxu0
  %v820 = vpop.f32.mrb[0].mxu0
  %v821 = vadd.f32 %v102, %v820
  %v822 = vpop.f32.mrb[0].mxu0
  %823 = vmatprep.mubr.bf16.mxu0 %v541
  %824 = vmatmul.mubr.bf16.gmra.mrb[0].mxu0 %v358
  %v825 = vpop.f32.mrb[0].mxu0
  %v826 = vadd.f32 %v102, %v825
  %v827 = vpop.f32.mrb[0].mxu0
  %v828 = vpop.f32.mrb[0].mxu0
  %v829 = vadd.f32 %v102, %v828
  %v830 = vpop.f32.mrb[0].mxu0
  %831 = vdwg.mxu0
  %v832 = vadd.f32 %v578, 3.0
  %v833 = vadd.f32 %v581, 3.0
  %v834 = vadd.f32 %v586, 3.0
  %v835 = vadd.f32 %v589, 3.0
  %v836 = vadd.f32 %v594, 3.0
  %v837 = vadd.f32 %v597, 3.0
  %v838 = vadd.f32 %v602, 3.0
  %v839 = vadd.f32 %v605, 3.0
  %v840 = vadd.f32 %v610, 3.0
  %v841 = vadd.f32 %v613, 3.0
  %v842 = vadd.f32 %v618, 3.0
  %v843 = vadd.f32 %v621, 3.0
  %v844 = vadd.f32 %v626, 3.0
  %v845 = vadd.f32 %v629, 3.0
  %v846 = vadd.f32 %v634, 3.0
  %v847 = vadd.f32 %v637, 3.0
  %v848 = vadd.f32 %v642, 3.0
  %v849 = vadd.f32 %v645, 3.0
  %v850 = vadd.f32 %v650, 3.0
  %v851 = vadd.f32 %v653, 3.0
  %v852 = vadd.f32 %v658, 3.0
  %v853 = vadd.f32 %v661, 3.0
  %v854 = vadd.f32 %v666, 3.0
  %v855 = vadd.f32 %v669, 3.0
  %v856 = vadd.f32 %v674, 3.0
  %v857 = vadd.f32 %v677, 3.0
  %v858 = vadd.f32 %v682, 3.0
  %v859 = vadd.f32 %v685, 3.0
  %v860 = vadd.f32 %v690, 3.0
  %v861 = vadd.f32 %v693, 3.0
  %v862 = vadd.f32 %v698, 3.0
  %v863 = vadd.f32 %v701, 3.0
  %v864 = vadd.f32 %v706, 3.0
  %v865 = vadd.f32 %v709, 3.0
  %v866 = vadd.f32 %v714, 3.0
  %v867 = vadd.f32 %v717, 3.0
  %v868 = vadd.f32 %v722, 3.0
  %v869 = vadd.f32 %v725, 3.0
  %v870 = vadd.f32 %v730, 3.0
  %v871 = vadd.f32 %v733, 3.0
  %v872 = vadd.f32 %v738, 3.0
  %v873 = vadd.f32 %v741, 3.0
  %v874 = vadd.f32 %v746, 3.0
  %v875 = vadd.f32 %v749, 3.0
  %v876 = vadd.f32 %v754, 3.0
  %v877 = vadd.f32 %v757, 3.0
  %v878 = vadd.f32 %v762, 3.0
  %v879 = vadd.f32 %v765, 3.0
  %v880 = vadd.f32 %v770, 3.0
  %v881 = vadd.f32 %v773, 3.0
  %v882 = vadd.f32 %v778, 3.0
  %v883 = vadd.f32 %v781, 3.0
  %v884 = vadd.f32 %v786, 3.0
  %v885 = vadd.f32 %v789, 3.0
  %v886 = vadd.f32 %v794, 3.0
  %v887 = vadd.f32 %v797, 3.0
  %v888 = vadd.f32 %v802, 3.0
  %v889 = vadd.f32 %v805, 3.0
  %v890 = vadd.f32 %v810, 3.0
  %v891 = vadd.f32 %v813, 3.0
  %v892 = vadd.f32 %v818, 3.0
  %v893 = vadd.f32 %v821, 3.0
  %v894 = vadd.f32 %v826, 3.0
  %v895 = vadd.f32 %v829, 3.0
  %v896 = vmax.f32 %v832, 0.0
  %v897 = vmax.f32 %v833, 0.0
  %v898 = vmax.f32 %v834, 0.0
  %v899 = vmax.f32 %v835, 0.0
  %v900 = vmax.f32 %v836, 0.0
  %v901 = vmax.f32 %v837, 0.0
  %v902 = vmax.f32 %v838, 0.0
  %v903 = vmax.f32 %v839, 0.0
  %v904 = vmax.f32 %v840, 0.0
  %v905 = vmax.f32 %v841, 0.0
  %v906 = vmax.f32 %v842, 0.0
  %v907 = vmax.f32 %v843, 0.0
  %v908 = vmax.f32 %v844, 0.0
  %v909 = vmax.f32 %v845, 0.0
  %v910 = vmax.f32 %v846, 0.0
  %v911 = vmax.f32 %v847, 0.0
  %v912 = vmax.f32 %v848, 0.0
  %v913 = vmax.f32 %v849, 0.0
  %v914 = vmax.f32 %v850, 0.0
  %v915 = vmax.f32 %v851, 0.0
  %v916 = vmax.f32 %v852, 0.0
  %v917 = vmax.f32 %v853, 0.0
  %v918 = vmax.f32 %v854, 0.0
  %v919 = vmax.f32 %v855, 0.0
  %v920 = vmax.f32 %v856, 0.0
  %v921 = vmax.f32 %v857, 0.0
  %v922 = vmax.f32 %v858, 0.0
  %v923 = vmax.f32 %v859, 0.0
  %v924 = vmax.f32 %v860, 0.0
  %v925 = vmax.f32 %v861, 0.0
  %v926 = vmax.f32 %v862, 0.0
  %v927 = vmax.f32 %v863, 0.0
  %v928 = vmax.f32 %v864, 0.0
  %v929 = vmax.f32 %v865, 0.0
  %v930 = vmax.f32 %v866, 0.0
  %v931 = vmax.f32 %v867, 0.0
  %v932 = vmax.f32 %v868, 0.0
  %v933 = vmax.f32 %v869, 0.0
  %v934 = vmax.f32 %v870, 0.0
  %v935 = vmax.f32 %v871, 0.0
  %v936 = vmax.f32 %v872, 0.0
  %v937 = vmax.f32 %v873, 0.0
  %v938 = vmax.f32 %v874, 0.0
  %v939 = vmax.f32 %v875, 0.0
  %v940 = vmax.f32 %v876, 0.0
  %v941 = vmax.f32 %v877, 0.0
  %v942 = vmax.f32 %v878, 0.0
  %v943 = vmax.f32 %v879, 0.0
  %v944 = vmax.f32 %v880, 0.0
  %v945 = vmax.f32 %v881, 0.0
  %v946 = vmax.f32 %v882, 0.0
  %v947 = vmax.f32 %v883, 0.0
  %v948 = vmax.f32 %v884, 0.0
  %v949 = vmax.f32 %v885, 0.0
  %v950 = vmax.f32 %v886, 0.0
  %v951 = vmax.f32 %v887, 0.0
  %v952 = vmax.f32 %v888, 0.0
  %v953 = vmax.f32 %v889, 0.0
  %v954 = vmax.f32 %v890, 0.0
  %v955 = vmax.f32 %v891, 0.0
  %v956 = vmax.f32 %v892, 0.0
  %v957 = vmax.f32 %v893, 0.0
  %v958 = vmax.f32 %v894, 0.0
  %v959 = vmax.f32 %v895, 0.0
  %v960 = vmin.f32 %v896, 6.0
  %v961 = vmin.f32 %v897, 6.0
  %v962 = vmin.f32 %v898, 6.0
  %v963 = vmin.f32 %v899, 6.0
  %v964 = vmin.f32 %v900, 6.0
  %v965 = vmin.f32 %v901, 6.0
  %v966 = vmin.f32 %v902, 6.0
  %v967 = vmin.f32 %v903, 6.0
  %v968 = vmin.f32 %v904, 6.0
  %v969 = vmin.f32 %v905, 6.0
  %v970 = vmin.f32 %v906, 6.0
  %v971 = vmin.f32 %v907, 6.0
  %v972 = vmin.f32 %v908, 6.0
  %v973 = vmin.f32 %v909, 6.0
  %v974 = vmin.f32 %v910, 6.0
  %v975 = vmin.f32 %v911, 6.0
  %v976 = vmin.f32 %v912, 6.0
  %v977 = vmin.f32 %v913, 6.0
  %v978 = vmin.f32 %v914, 6.0
  %v979 = vmin.f32 %v915, 6.0
  %v980 = vmin.f32 %v916, 6.0
  %v981 = vmin.f32 %v917, 6.0
  %v982 = vmin.f32 %v918, 6.0
  %v983 = vmin.f32 %v919, 6.0
  %v984 = vmin.f32 %v920, 6.0
  %v985 = vmin.f32 %v921, 6.0
  %v986 = vmin.f32 %v922, 6.0
  %v987 = vmin.f32 %v923, 6.0
  %v988 = vmin.f32 %v924, 6.0
  %v989 = vmin.f32 %v925, 6.0
  %v990 = vmin.f32 %v926, 6.0
  %v991 = vmin.f32 %v927, 6.0
  %v992 = vmin.f32 %v928, 6.0
  %v993 = vmin.f32 %v929, 6.0
  %v994 = vmin.f32 %v930, 6.0
  %v995 = vmin.f32 %v931, 6.0
  %v996 = vmin.f32 %v932, 6.0
  %v997 = vmin.f32 %v933, 6.0
  %v998 = vmin.f32 %v934, 6.0
  %v999 = vmin.f32 %v935, 6.0
  %v1000 = vmin.f32 %v936, 6.0
  %v1001 = vmin.f32 %v937, 6.0
  %v1002 = vmin.f32 %v938, 6.0
  %v1003 = vmin.f32 %v939, 6.0
  %v1004 = vmin.f32 %v940, 6.0
  %v1005 = vmin.f32 %v941, 6.0
  %v1006 = vmin.f32 %v942, 6.0
  %v1007 = vmin.f32 %v943, 6.0
  %v1008 = vmin.f32 %v944, 6.0
  %v1009 = vmin.f32 %v945, 6.0
  %v1010 = vmin.f32 %v946, 6.0
  %v1011 = vmin.f32 %v947, 6.0
  %v1012 = vmin.f32 %v948, 6.0
  %v1013 = vmin.f32 %v949, 6.0
  %v1014 = vmin.f32 %v950, 6.0
  %v1015 = vmin.f32 %v951, 6.0
  %v1016 = vmin.f32 %v952, 6.0
  %v1017 = vmin.f32 %v953, 6.0
  %v1018 = vmin.f32 %v954, 6.0
  %v1019 = vmin.f32 %v955, 6.0
  %v1020 = vmin.f32 %v956, 6.0
  %v1021 = vmin.f32 %v957, 6.0
  %v1022 = vmin.f32 %v958, 6.0
  %v1023 = vmin.f32 %v959, 6.0
  %v1024 = vmul.f32 %v578, %v960
  %v1025 = vmul.f32 %v581, %v961
  %v1026 = vmul.f32 %v586, %v962
  %v1027 = vmul.f32 %v589, %v963
  %v1028 = vmul.f32 %v594, %v964
  %v1029 = vmul.f32 %v597, %v965
  %v1030 = vmul.f32 %v602, %v966
  %v1031 = vmul.f32 %v605, %v967
  %v1032 = vmul.f32 %v610, %v968
  %v1033 = vmul.f32 %v613, %v969
  %v1034 = vmul.f32 %v618, %v970
  %v1035 = vmul.f32 %v621, %v971
  %v1036 = vmul.f32 %v626, %v972
  %v1037 = vmul.f32 %v629, %v973
  %v1038 = vmul.f32 %v634, %v974
  %v1039 = vmul.f32 %v637, %v975
  %v1040 = vmul.f32 %v642, %v976
  %v1041 = vmul.f32 %v645, %v977
  %v1042 = vmul.f32 %v650, %v978
  %v1043 = vmul.f32 %v653, %v979
  %v1044 = vmul.f32 %v658, %v980
  %v1045 = vmul.f32 %v661, %v981
  %v1046 = vmul.f32 %v666, %v982
  %v1047 = vmul.f32 %v669, %v983
  %v1048 = vmul.f32 %v674, %v984
  %v1049 = vmul.f32 %v677, %v985
  %v1050 = vmul.f32 %v682, %v986
  %v1051 = vmul.f32 %v685, %v987
  %v1052 = vmul.f32 %v690, %v988
  %v1053 = vmul.f32 %v693, %v989
  %v1054 = vmul.f32 %v698, %v990
  %v1055 = vmul.f32 %v701, %v991
  %v1056 = vmul.f32 %v706, %v992
  %v1057 = vmul.f32 %v709, %v993
  %v1058 = vmul.f32 %v714, %v994
  %v1059 = vmul.f32 %v717, %v995
  %v1060 = vmul.f32 %v722, %v996
  %v1061 = vmul.f32 %v725, %v997
  %v1062 = vmul.f32 %v730, %v998
  %v1063 = vmul.f32 %v733, %v999
  %v1064 = vmul.f32 %v738, %v1000
  %v1065 = vmul.f32 %v741, %v1001
  %v1066 = vmul.f32 %v746, %v1002
  %v1067 = vmul.f32 %v749, %v1003
  %v1068 = vmul.f32 %v754, %v1004
  %v1069 = vmul.f32 %v757, %v1005
  %v1070 = vmul.f32 %v762, %v1006
  %v1071 = vmul.f32 %v765, %v1007
  %v1072 = vmul.f32 %v770, %v1008
  %v1073 = vmul.f32 %v773, %v1009
  %v1074 = vmul.f32 %v778, %v1010
  %v1075 = vmul.f32 %v781, %v1011
  %v1076 = vmul.f32 %v786, %v1012
  %v1077 = vmul.f32 %v789, %v1013
  %v1078 = vmul.f32 %v794, %v1014
  %v1079 = vmul.f32 %v797, %v1015
  %v1080 = vmul.f32 %v802, %v1016
  %v1081 = vmul.f32 %v805, %v1017
  %v1082 = vmul.f32 %v810, %v1018
  %v1083 = vmul.f32 %v813, %v1019
  %v1084 = vmul.f32 %v818, %v1020
  %v1085 = vmul.f32 %v821, %v1021
  %v1086 = vmul.f32 %v826, %v1022
  %v1087 = vmul.f32 %v829, %v1023
  %v1088 = vmul.f32 %v1024, 0.16666667
  %v1089 = vmul.f32 %v1025, 0.16666667
  %v1090 = vmul.f32 %v1026, 0.16666667
  %v1091 = vmul.f32 %v1027, 0.16666667
  %v1092 = vmul.f32 %v1028, 0.16666667
  %v1093 = vmul.f32 %v1029, 0.16666667
  %v1094 = vmul.f32 %v1030, 0.16666667
  %v1095 = vmul.f32 %v1031, 0.16666667
  %v1096 = vmul.f32 %v1032, 0.16666667
  %v1097 = vmul.f32 %v1033, 0.16666667
  %v1098 = vmul.f32 %v1034, 0.16666667
  %v1099 = vmul.f32 %v1035, 0.16666667
  %v1100 = vmul.f32 %v1036, 0.16666667
  %v1101 = vmul.f32 %v1037, 0.16666667
  %v1102 = vmul.f32 %v1038, 0.16666667
  %v1103 = vmul.f32 %v1039, 0.16666667
  %v1104 = vmul.f32 %v1040, 0.16666667
  %v1105 = vmul.f32 %v1041, 0.16666667
  %v1106 = vmul.f32 %v1042, 0.16666667
  %v1107 = vmul.f32 %v1043, 0.16666667
  %v1108 = vmul.f32 %v1044, 0.16666667
  %v1109 = vmul.f32 %v1045, 0.16666667
  %v1110 = vmul.f32 %v1046, 0.16666667
  %v1111 = vmul.f32 %v1047, 0.16666667
  %v1112 = vmul.f32 %v1048, 0.16666667
  %v1113 = vmul.f32 %v1049, 0.16666667
  %v1114 = vmul.f32 %v1050, 0.16666667
  %v1115 = vmul.f32 %v1051, 0.16666667
  %v1116 = vmul.f32 %v1052, 0.16666667
  %v1117 = vmul.f32 %v1053, 0.16666667
  %v1118 = vmul.f32 %v1054, 0.16666667
  %v1119 = vmul.f32 %v1055, 0.16666667
  %v1120 = vmul.f32 %v1056, 0.16666667
  %v1121 = vmul.f32 %v1057, 0.16666667
  %v1122 = vmul.f32 %v1058, 0.16666667
  %v1123 = vmul.f32 %v1059, 0.16666667
  %v1124 = vmul.f32 %v1060, 0.16666667
  %v1125 = vmul.f32 %v1061, 0.16666667
  %v1126 = vmul.f32 %v1062, 0.16666667
  %v1127 = vmul.f32 %v1063, 0.16666667
  %v1128 = vmul.f32 %v1064, 0.16666667
  %v1129 = vmul.f32 %v1065, 0.16666667
  %v1130 = vmul.f32 %v1066, 0.16666667
  %v1131 = vmul.f32 %v1067, 0.16666667
  %v1132 = vmul.f32 %v1068, 0.16666667
  %v1133 = vmul.f32 %v1069, 0.16666667
  %v1134 = vmul.f32 %v1070, 0.16666667
  %v1135 = vmul.f32 %v1071, 0.16666667
  %v1136 = vmul.f32 %v1072, 0.16666667
  %v1137 = vmul.f32 %v1073, 0.16666667
  %v1138 = vmul.f32 %v1074, 0.16666667
  %v1139 = vmul.f32 %v1075, 0.16666667
  %v1140 = vmul.f32 %v1076, 0.16666667
  %v1141 = vmul.f32 %v1077, 0.16666667
  %v1142 = vmul.f32 %v1078, 0.16666667
  %v1143 = vmul.f32 %v1079, 0.16666667
  %v1144 = vmul.f32 %v1080, 0.16666667
  %v1145 = vmul.f32 %v1081, 0.16666667
  %v1146 = vmul.f32 %v1082, 0.16666667
  %v1147 = vmul.f32 %v1083, 0.16666667
  %v1148 = vmul.f32 %v1084, 0.16666667
  %v1149 = vmul.f32 %v1085, 0.16666667
  %v1150 = vmul.f32 %v1086, 0.16666667
  %v1151 = vmul.f32 %v1087, 0.16666667
  %v1152 = vpack.c.bf16 %v1089, %v1088
  %v1153 = vpack.c.bf16 %v1091, %v1090
  %v1154 = vpack.c.bf16 %v1093, %v1092
  %v1155 = vpack.c.bf16 %v1095, %v1094
  %v1156 = vpack.c.bf16 %v1097, %v1096
  %v1157 = vpack.c.bf16 %v1099, %v1098
  %v1158 = vpack.c.bf16 %v1101, %v1100
  %v1159 = vpack.c.bf16 %v1103, %v1102
  %v1160 = vpack.c.bf16 %v1105, %v1104
  %v1161 = vpack.c.bf16 %v1107, %v1106
  %v1162 = vpack.c.bf16 %v1109, %v1108
  %v1163 = vpack.c.bf16 %v1111, %v1110
  %v1164 = vpack.c.bf16 %v1113, %v1112
  %v1165 = vpack.c.bf16 %v1115, %v1114
  %v1166 = vpack.c.bf16 %v1117, %v1116
  %v1167 = vpack.c.bf16 %v1119, %v1118
  %v1168 = vpack.c.bf16 %v1121, %v1120
  %v1169 = vpack.c.bf16 %v1123, %v1122
  %v1170 = vpack.c.bf16 %v1125, %v1124
  %v1171 = vpack.c.bf16 %v1127, %v1126
  %v1172 = vpack.c.bf16 %v1129, %v1128
  %v1173 = vpack.c.bf16 %v1131, %v1130
  %v1174 = vpack.c.bf16 %v1133, %v1132
  %v1175 = vpack.c.bf16 %v1135, %v1134
  %v1176 = vpack.c.bf16 %v1137, %v1136
  %v1177 = vpack.c.bf16 %v1139, %v1138
  %v1178 = vpack.c.bf16 %v1141, %v1140
  %v1179 = vpack.c.bf16 %v1143, %v1142
  %v1180 = vpack.c.bf16 %v1145, %v1144
  %v1181 = vpack.c.bf16 %v1147, %v1146
  %v1182 = vpack.c.bf16 %v1149, %v1148
  %v1183 = vpack.c.bf16 %v1151, %v1150
  %v1216 = vunpack.c.l.b16 %v1152
  %v1217 = vunpack.c.h.b16 %v1152
  %v1218 = vunpack.c.l.b16 %v1153
  %v1219 = vunpack.c.h.b16 %v1153
  %v1220 = vunpack.c.l.b16 %v1154
  %v1221 = vunpack.c.h.b16 %v1154
  %v1222 = vunpack.c.l.b16 %v1155
  %v1223 = vunpack.c.h.b16 %v1155
  %v1224 = vunpack.c.l.b16 %v1156
  %v1225 = vunpack.c.h.b16 %v1156
  %v1226 = vunpack.c.l.b16 %v1157
  %v1227 = vunpack.c.h.b16 %v1157
  %v1228 = vunpack.c.l.b16 %v1158
  %v1229 = vunpack.c.h.b16 %v1158
  %v1230 = vunpack.c.l.b16 %v1159
  %v1231 = vunpack.c.h.b16 %v1159
  %v1232 = vunpack.c.l.b16 %v1160
  %v1233 = vunpack.c.h.b16 %v1160
  %v1234 = vunpack.c.l.b16 %v1161
  %v1235 = vunpack.c.h.b16 %v1161
  %v1236 = vunpack.c.l.b16 %v1162
  %v1237 = vunpack.c.h.b16 %v1162
  %v1238 = vunpack.c.l.b16 %v1163
  %v1239 = vunpack.c.h.b16 %v1163
  %v1240 = vunpack.c.l.b16 %v1164
  %v1241 = vunpack.c.h.b16 %v1164
  %v1242 = vunpack.c.l.b16 %v1165
  %v1243 = vunpack.c.h.b16 %v1165
  %v1244 = vunpack.c.l.b16 %v1166
  %v1245 = vunpack.c.h.b16 %v1166
  %v1246 = vunpack.c.l.b16 %v1167
  %v1247 = vunpack.c.h.b16 %v1167
  %v1248 = vunpack.c.l.b16 %v1168
  %v1249 = vunpack.c.h.b16 %v1168
  %v1250 = vunpack.c.l.b16 %v1169
  %v1251 = vunpack.c.h.b16 %v1169
  %v1252 = vunpack.c.l.b16 %v1170
  %v1253 = vunpack.c.h.b16 %v1170
  %v1254 = vunpack.c.l.b16 %v1171
  %v1255 = vunpack.c.h.b16 %v1171
  %v1256 = vunpack.c.l.b16 %v1172
  %v1257 = vunpack.c.h.b16 %v1172
  %v1258 = vunpack.c.l.b16 %v1173
  %v1259 = vunpack.c.h.b16 %v1173
  %v1260 = vunpack.c.l.b16 %v1174
  %v1261 = vunpack.c.h.b16 %v1174
  %v1262 = vunpack.c.l.b16 %v1175
  %v1263 = vunpack.c.h.b16 %v1175
  %v1264 = vunpack.c.l.b16 %v1176
  %v1265 = vunpack.c.h.b16 %v1176
  %v1266 = vunpack.c.l.b16 %v1177
  %v1267 = vunpack.c.h.b16 %v1177
  %v1268 = vunpack.c.l.b16 %v1178
  %v1269 = vunpack.c.h.b16 %v1178
  %v1270 = vunpack.c.l.b16 %v1179
  %v1271 = vunpack.c.h.b16 %v1179
  %v1272 = vunpack.c.l.b16 %v1180
  %v1273 = vunpack.c.h.b16 %v1180
  %v1274 = vunpack.c.l.b16 %v1181
  %v1275 = vunpack.c.h.b16 %v1181
  %v1276 = vunpack.c.l.b16 %v1182
  %v1277 = vunpack.c.h.b16 %v1182
  %v1278 = vunpack.c.l.b16 %v1183
  %v1279 = vunpack.c.h.b16 %v1183
  %v1280 = vpack.c.b16 %v1216, %v1216
  %v1281 = vpack.c.b16 %v1217, %v1217
  %v1282 = vpack.c.b16 %v1218, %v1218
  %v1283 = vpack.c.b16 %v1219, %v1219
  %v1284 = vpack.c.b16 %v1220, %v1220
  %v1285 = vpack.c.b16 %v1221, %v1221
  %v1286 = vpack.c.b16 %v1222, %v1222
  %v1287 = vpack.c.b16 %v1223, %v1223
  %v1288 = vpack.c.b16 %v1224, %v1224
  %v1289 = vpack.c.b16 %v1225, %v1225
  %v1290 = vpack.c.b16 %v1226, %v1226
  %v1291 = vpack.c.b16 %v1227, %v1227
  %v1292 = vpack.c.b16 %v1228, %v1228
  %v1293 = vpack.c.b16 %v1229, %v1229
  %v1294 = vpack.c.b16 %v1230, %v1230
  %v1295 = vpack.c.b16 %v1231, %v1231
  %v1296 = vpack.c.b16 %v1232, %v1232
  %v1297 = vpack.c.b16 %v1233, %v1233
  %v1298 = vpack.c.b16 %v1234, %v1234
  %v1299 = vpack.c.b16 %v1235, %v1235
  %v1300 = vpack.c.b16 %v1236, %v1236
  %v1301 = vpack.c.b16 %v1237, %v1237
  %v1302 = vpack.c.b16 %v1238, %v1238
  %v1303 = vpack.c.b16 %v1239, %v1239
  %v1304 = vpack.c.b16 %v1240, %v1240
  %v1305 = vpack.c.b16 %v1241, %v1241
  %v1306 = vpack.c.b16 %v1242, %v1242
  %v1307 = vpack.c.b16 %v1243, %v1243
  %v1308 = vpack.c.b16 %v1244, %v1244
  %v1309 = vpack.c.b16 %v1245, %v1245
  %v1310 = vpack.c.b16 %v1246, %v1246
  %v1311 = vpack.c.b16 %v1247, %v1247
  %v1312 = vpack.c.b16 %v1248, %v1248
  %v1313 = vpack.c.b16 %v1249, %v1249
  %v1314 = vpack.c.b16 %v1250, %v1250
  %v1315 = vpack.c.b16 %v1251, %v1251
  %v1316 = vpack.c.b16 %v1252, %v1252
  %v1317 = vpack.c.b16 %v1253, %v1253
  %v1318 = vpack.c.b16 %v1254, %v1254
  %v1319 = vpack.c.b16 %v1255, %v1255
  %v1320 = vpack.c.b16 %v1256, %v1256
  %v1321 = vpack.c.b16 %v1257, %v1257
  %v1322 = vpack.c.b16 %v1258, %v1258
  %v1323 = vpack.c.b16 %v1259, %v1259
  %v1324 = vpack.c.b16 %v1260, %v1260
  %v1325 = vpack.c.b16 %v1261, %v1261
  %v1326 = vpack.c.b16 %v1262, %v1262
  %v1327 = vpack.c.b16 %v1263, %v1263
  %v1328 = vpack.c.b16 %v1264, %v1264
  %v1329 = vpack.c.b16 %v1265, %v1265
  %v1330 = vpack.c.b16 %v1266, %v1266
  %v1331 = vpack.c.b16 %v1267, %v1267
  %v1332 = vpack.c.b16 %v1268, %v1268
  %v1333 = vpack.c.b16 %v1269, %v1269
  %v1334 = vpack.c.b16 %v1270, %v1270
  %v1335 = vpack.c.b16 %v1271, %v1271
  %v1336 = vpack.c.b16 %v1272, %v1272
  %v1337 = vpack.c.b16 %v1273, %v1273
  %v1338 = vpack.c.b16 %v1274, %v1274
  %v1339 = vpack.c.b16 %v1275, %v1275
  %v1340 = vpack.c.b16 %v1276, %v1276
  %v1341 = vpack.c.b16 %v1277, %v1277
  %v1342 = vpack.c.b16 %v1278, %v1278
  %v1343 = vpack.c.b16 %v1279, %v1279
  %vm1408 = vcmask 191488
  %1409 = vst.msk [vmem:[%s3] sm:$0xf] %vm1408, %v1280
  %1410 = vst.msk [vmem:[%s3 + $0x4] sm:$0xf] %vm1408, %v1281
  %1411 = vst.msk [vmem:[%s3 + $0x8] sm:$0xf] %vm1408, %v1282
  %1412 = vst.msk [vmem:[%s3 + $0xc] sm:$0xf] %vm1408, %v1283
  %1413 = vst.msk [vmem:[%s3 + $0x10] sm:$0xf] %vm1408, %v1284
  %1414 = vst.msk [vmem:[%s3 + $0x14] sm:$0xf] %vm1408, %v1285
  %1415 = vst.msk [vmem:[%s3 + $0x18] sm:$0xf] %vm1408, %v1286
  %1416 = vst.msk [vmem:[%s3 + $0x1c] sm:$0xf] %vm1408, %v1287
  %1417 = vst.msk [vmem:[%s3 + $0x20] sm:$0xf] %vm1408, %v1288
  %1418 = vst.msk [vmem:[%s3 + $0x24] sm:$0xf] %vm1408, %v1289
  %1419 = vst.msk [vmem:[%s3 + $0x28] sm:$0xf] %vm1408, %v1290
  %1420 = vst.msk [vmem:[%s3 + $0x2c] sm:$0xf] %vm1408, %v1291
  %1421 = vst.msk [vmem:[%s3 + $0x30] sm:$0xf] %vm1408, %v1292
  %1422 = vst.msk [vmem:[%s3 + $0x34] sm:$0xf] %vm1408, %v1293
  %1423 = vst.msk [vmem:[%s3 + $0x38] sm:$0xf] %vm1408, %v1294
  %1424 = vst.msk [vmem:[%s3 + $0x3c] sm:$0xf] %vm1408, %v1295
  %1425 = vst.msk [vmem:[%s3 + $0x40] sm:$0xf] %vm1408, %v1296
  %1426 = vst.msk [vmem:[%s3 + $0x44] sm:$0xf] %vm1408, %v1297
  %1427 = vst.msk [vmem:[%s3 + $0x48] sm:$0xf] %vm1408, %v1298
  %1428 = vst.msk [vmem:[%s3 + $0x4c] sm:$0xf] %vm1408, %v1299
  %1429 = vst.msk [vmem:[%s3 + $0x50] sm:$0xf] %vm1408, %v1300
  %1430 = vst.msk [vmem:[%s3 + $0x54] sm:$0xf] %vm1408, %v1301
  %1431 = vst.msk [vmem:[%s3 + $0x58] sm:$0xf] %vm1408, %v1302
  %1432 = vst.msk [vmem:[%s3 + $0x5c] sm:$0xf] %vm1408, %v1303
  %1433 = vst.msk [vmem:[%s3 + $0x60] sm:$0xf] %vm1408, %v1304
  %1434 = vst.msk [vmem:[%s3 + $0x64] sm:$0xf] %vm1408, %v1305
  %1435 = vst.msk [vmem:[%s3 + $0x68] sm:$0xf] %vm1408, %v1306
  %1436 = vst.msk [vmem:[%s3 + $0x6c] sm:$0xf] %vm1408, %v1307
  %1437 = vst.msk [vmem:[%s3 + $0x70] sm:$0xf] %vm1408, %v1308
  %1438 = vst.msk [vmem:[%s3 + $0x74] sm:$0xf] %vm1408, %v1309
  %1439 = vst.msk [vmem:[%s3 + $0x78] sm:$0xf] %vm1408, %v1310
  %1440 = vst.msk [vmem:[%s3 + $0x7c] sm:$0xf] %vm1408, %v1311
  %1441 = vst.msk [vmem:[%s3 + $0x80] sm:$0xf] %vm1408, %v1312
  %1442 = vst.msk [vmem:[%s3 + $0x84] sm:$0xf] %vm1408, %v1313
  %1443 = vst.msk [vmem:[%s3 + $0x88] sm:$0xf] %vm1408, %v1314
  %1444 = vst.msk [vmem:[%s3 + $0x8c] sm:$0xf] %vm1408, %v1315
  %1445 = vst.msk [vmem:[%s3 + $0x90] sm:$0xf] %vm1408, %v1316
  %1446 = vst.msk [vmem:[%s3 + $0x94] sm:$0xf] %vm1408, %v1317
  %1447 = vst.msk [vmem:[%s3 + $0x98] sm:$0xf] %vm1408, %v1318
  %1448 = vst.msk [vmem:[%s3 + $0x9c] sm:$0xf] %vm1408, %v1319
  %1449 = vst.msk [vmem:[%s3 + $0xa0] sm:$0xf] %vm1408, %v1320
  %1450 = vst.msk [vmem:[%s3 + $0xa4] sm:$0xf] %vm1408, %v1321
  %1451 = vst.msk [vmem:[%s3 + $0xa8] sm:$0xf] %vm1408, %v1322
  %1452 = vst.msk [vmem:[%s3 + $0xac] sm:$0xf] %vm1408, %v1323
  %1453 = vst.msk [vmem:[%s3 + $0xb0] sm:$0xf] %vm1408, %v1324
  %1454 = vst.msk [vmem:[%s3 + $0xb4] sm:$0xf] %vm1408, %v1325
  %1455 = vst.msk [vmem:[%s3 + $0xb8] sm:$0xf] %vm1408, %v1326
  %1456 = vst.msk [vmem:[%s3 + $0xbc] sm:$0xf] %vm1408, %v1327
  %1457 = vst.msk [vmem:[%s3 + $0xc0] sm:$0xf] %vm1408, %v1328
  %1458 = vst.msk [vmem:[%s3 + $0xc4] sm:$0xf] %vm1408, %v1329
  %1459 = vst.msk [vmem:[%s3 + $0xc8] sm:$0xf] %vm1408, %v1330
  %1460 = vst.msk [vmem:[%s3 + $0xcc] sm:$0xf] %vm1408, %v1331
  %1461 = vst.msk [vmem:[%s3 + $0xd0] sm:$0xf] %vm1408, %v1332
  %1462 = vst.msk [vmem:[%s3 + $0xd4] sm:$0xf] %vm1408, %v1333
  %1463 = vst.msk [vmem:[%s3 + $0xd8] sm:$0xf] %vm1408, %v1334
  %1464 = vst.msk [vmem:[%s3 + $0xdc] sm:$0xf] %vm1408, %v1335
  %1465 = vst.msk [vmem:[%s3 + $0xe0] sm:$0xf] %vm1408, %v1336
  %1466 = vst.msk [vmem:[%s3 + $0xe4] sm:$0xf] %vm1408, %v1337
  %1467 = vst.msk [vmem:[%s3 + $0xe8] sm:$0xf] %vm1408, %v1338
  %1468 = vst.msk [vmem:[%s3 + $0xec] sm:$0xf] %vm1408, %v1339
  %1469 = vst.msk [vmem:[%s3 + $0xf0] sm:$0xf] %vm1408, %v1340
  %1470 = vst.msk [vmem:[%s3 + $0xf4] sm:$0xf] %vm1408, %v1341
  %1471 = vst.msk [vmem:[%s3 + $0xf8] sm:$0xf] %vm1408, %v1342
  %1472 = vst.msk [vmem:[%s3 + $0xfc] sm:$0xf] %vm1408, %v1343
  // Predicated region
  $region14: #{basic_block_forward.4} parent=0 // pred_check
    _
  $region15: #{basic_block_forward.4} parent=0 // pred_check_branch
    %1474 = sbr.rel (0) target = $region17
  $region16: #{basic_block_forward.4} parent=0 // pred_region
    _
  $region17: #{basic_block_forward.4} parent=0 // pred_fallthru
    _
  // Predicated region
  $region18: #{basic_block_forward.4} parent=0 // pred_check
    _
  $region19: #{basic_block_forward.4} parent=0 // pred_check_branch
    %1476 = sbr.rel (0) target = $region21
  $region20: #{basic_block_forward.4} parent=0 // pred_region
    _
  $region21: #{basic_block_forward.4} parent=0 // pred_fallthru
    _

// kernel: basic_block_forward.5
$region0: #{basic_block_forward.5}
  #allocation0 [shape = 'u32[]', space=smem, size = 0x4, offset = 0x4, fixed_abs, tag = 'smem constant byte address 0x4 - core index']
  #allocation1 [shape = 'u32[144,128]{1,0:T(1,128)}', space=vmem, size = 0x12000, scoped, tag = 'internal scratch']
  %s0 = inlined_call_operand.vmem [shape: bf16[128,216], index: 0, kind: input, shape index: {}]
  %s1 = inlined_call_operand.vmem [shape: bf16[216,40], index: 1, kind: input, shape index: {}]
  %s2 = inlined_call_operand.vmem [shape: f32[1,40], index: 2, kind: input, shape index: {}]
  %s3 = inlined_call_operand.vmem [shape: bf16[128,40], index: 3, kind: output, shape index: {}]
  %s4 = sld [smem:[#allocation0]]
  $region22: #{basic_block_forward.5} parent=0
    _
  %s6 = ssub.s32 1, %s4
  %s7 = scalar_select 0, %s6, %s4
  // Predicated region
  $region2: #{basic_block_forward.5} parent=0 // pred_check
    _
  $region3: #{basic_block_forward.5} parent=0 // pred_check_branch
    %9 = sbr.rel (0) target = $region5
  $region4: #{basic_block_forward.5} parent=0 // pred_region
    _
  $region5: #{basic_block_forward.5} parent=0 // pred_fallthru
    _
  // Predicated region
  $region6: #{basic_block_forward.5} parent=0 // pred_check
    _
  $region7: #{basic_block_forward.5} parent=0 // pred_check_branch
    %11 = sbr.rel (0) target = $region9
  $region8: #{basic_block_forward.5} parent=0 // pred_region
    _
  $region9: #{basic_block_forward.5} parent=0 // pred_fallthru
    _
  // Predicated region
  $region10: #{basic_block_forward.5} parent=0 // pred_check
    _
  $region11: #{basic_block_forward.5} parent=0 // pred_check_branch
    %13 = sbr.rel (0) target = $region13
  $region12: #{basic_block_forward.5} parent=0 // pred_region
    _
  $region13: #{basic_block_forward.5} parent=0 // pred_fallthru
    _
  %v15 = vld [vmem:[%s0] sm:$0xff]
  %v16 = vld [vmem:[%s0 + $0x8] sm:$0xff]
  %v17 = vld [vmem:[%s0 + $0x10] sm:$0xff]
  %v18 = vld [vmem:[%s0 + $0x18] sm:$0xff]
  %v19 = vld [vmem:[%s0 + $0x20] sm:$0xff]
  %v20 = vld [vmem:[%s0 + $0x28] sm:$0xff]
  %v21 = vld [vmem:[%s0 + $0x30] sm:$0xff]
  %v22 = vld [vmem:[%s0 + $0x38] sm:$0xff]
  %v23 = vld [vmem:[%s0 + $0x40] sm:$0xff]
  %v24 = vld [vmem:[%s0 + $0x48] sm:$0xff]
  %v25 = vld [vmem:[%s0 + $0x50] sm:$0xff]
  %v26 = vld [vmem:[%s0 + $0x58] sm:$0xff]
  %v27 = vld [vmem:[%s0 + $0x60] sm:$0xff]
  %v28 = vld [vmem:[%s0 + $0x68] sm:$0xff]
  %v29 = vld [vmem:[%s0 + $0x70] sm:$0xff]
  %v30 = vld [vmem:[%s0 + $0x78] sm:$0xff]
  %v31 = vld [vmem:[%s1] sm:$0xf]
  %v32 = vld [vmem:[%s1 + $0x4] sm:$0xf]
  %v33 = vld [vmem:[%s1 + $0x8] sm:$0xf]
  %v34 = vld [vmem:[%s1 + $0xc] sm:$0xf]
  %v35 = vld [vmem:[%s1 + $0x10] sm:$0xf]
  %v36 = vld [vmem:[%s1 + $0x14] sm:$0xf]
  %v37 = vld [vmem:[%s1 + $0x18] sm:$0xf]
  %v38 = vld [vmem:[%s1 + $0x1c] sm:$0xf]
  %v39 = vld [vmem:[%s1 + $0x20] sm:$0xf]
  %v40 = vld [vmem:[%s1 + $0x24] sm:$0xf]
  %v41 = vld [vmem:[%s1 + $0x28] sm:$0xf]
  %v42 = vld [vmem:[%s1 + $0x2c] sm:$0xf]
  %v43 = vld [vmem:[%s1 + $0x30] sm:$0xf]
  %v44 = vld [vmem:[%s1 + $0x34] sm:$0xf]
  %v45 = vld [vmem:[%s1 + $0x38] sm:$0xf]
  %v46 = vld [vmem:[%s1 + $0x3c] sm:$0xf]
  %v47 = vld [vmem:[%s1 + $0x40] sm:$0xf]
  %v48 = vld [vmem:[%s1 + $0x44] sm:$0xf]
  %v49 = vld [vmem:[%s1 + $0x48] sm:$0xf]
  %v50 = vld [vmem:[%s1 + $0x4c] sm:$0xf]
  %v51 = vld [vmem:[%s1 + $0x50] sm:$0xf]
  %v52 = vld [vmem:[%s1 + $0x54] sm:$0xf]
  %v53 = vld [vmem:[%s1 + $0x58] sm:$0xf]
  %v54 = vld [vmem:[%s1 + $0x5c] sm:$0xf]
  %v55 = vld [vmem:[%s1 + $0x60] sm:$0xf]
  %v56 = vld [vmem:[%s1 + $0x64] sm:$0xf]
  %v57 = vld [vmem:[%s1 + $0x68] sm:$0xf]
  %v58 = vld [vmem:[%s2] sm:$0x1]
  %v60 = vlaneseq
  %v61 = vshrl.u32 %v60, 7
  %v62 = vsub.s32 0, %v61
  %v63 = vrot.slane %v58, %v62
  %v81 = vunpack.c.l.b16 %v15
  %v82 = vunpack.c.h.b16 %v15
  %v83 = vunpack.c.l.b16 %v16
  %v84 = vunpack.c.h.b16 %v16
  %v85 = vunpack.c.l.b16 %v17
  %v86 = vunpack.c.h.b16 %v17
  %v87 = vunpack.c.l.b16 %v18
  %v88 = vunpack.c.h.b16 %v18
  %v89 = vunpack.c.l.b16 %v19
  %v90 = vunpack.c.h.b16 %v19
  %v91 = vunpack.c.l.b16 %v20
  %v92 = vunpack.c.h.b16 %v20
  %v93 = vunpack.c.l.b16 %v21
  %v94 = vunpack.c.h.b16 %v21
  %v95 = vunpack.c.l.b16 %v22
  %v96 = vunpack.c.h.b16 %v22
  %v97 = vunpack.c.l.b16 %v23
  %v98 = vunpack.c.h.b16 %v23
  %v99 = vunpack.c.l.b16 %v24
  %v100 = vunpack.c.h.b16 %v24
  %v101 = vunpack.c.l.b16 %v25
  %v102 = vunpack.c.h.b16 %v25
  %v103 = vunpack.c.l.b16 %v26
  %v104 = vunpack.c.h.b16 %v26
  %v105 = vunpack.c.l.b16 %v27
  %v106 = vunpack.c.h.b16 %v27
  %v107 = vunpack.c.l.b16 %v28
  %v108 = vunpack.c.h.b16 %v28
  %v109 = vunpack.c.l.b16 %v29
  %v110 = vunpack.c.h.b16 %v29
  %v111 = vunpack.c.l.b16 %v30
  %v112 = vunpack.c.h.b16 %v30
  %v113 = vpack.c.b16 %v83, %v81
  %v114 = vpack.c.b16 %v84, %v82
  %v115 = vpack.c.b16 %v87, %v85
  %v116 = vpack.c.b16 %v88, %v86
  %v117 = vpack.c.b16 %v91, %v89
  %v118 = vpack.c.b16 %v92, %v90
  %v119 = vpack.c.b16 %v95, %v93
  %v120 = vpack.c.b16 %v96, %v94
  %v121 = vpack.c.b16 %v99, %v97
  %v122 = vpack.c.b16 %v100, %v98
  %v123 = vpack.c.b16 %v103, %v101
  %v124 = vpack.c.b16 %v104, %v102
  %v125 = vpack.c.b16 %v107, %v105
  %v126 = vpack.c.b16 %v108, %v106
  %v127 = vpack.c.b16 %v111, %v109
  %v128 = vpack.c.b16 %v112, %v110
  %v164 = vunpack.c.l.b16 %v31
  %v165 = vunpack.c.l.b16 %v32
  %v166 = vunpack.c.l.b16 %v33
  %v167 = vunpack.c.l.b16 %v34
  %v168 = vunpack.c.l.b16 %v35
  %v169 = vunpack.c.l.b16 %v36
  %v170 = vunpack.c.l.b16 %v37
  %v171 = vunpack.c.l.b16 %v38
  %v172 = vunpack.c.l.b16 %v39
  %v173 = vunpack.c.l.b16 %v40
  %v174 = vunpack.c.l.b16 %v41
  %v175 = vunpack.c.l.b16 %v42
  %v176 = vunpack.c.l.b16 %v43
  %v177 = vunpack.c.l.b16 %v44
  %v178 = vunpack.c.l.b16 %v45
  %v179 = vunpack.c.l.b16 %v46
  %v180 = vunpack.c.l.b16 %v47
  %v181 = vunpack.c.l.b16 %v48
  %v182 = vunpack.c.l.b16 %v49
  %v183 = vunpack.c.l.b16 %v50
  %v184 = vunpack.c.l.b16 %v51
  %v185 = vunpack.c.l.b16 %v52
  %v186 = vunpack.c.l.b16 %v53
  %v187 = vunpack.c.l.b16 %v54
  %v188 = vunpack.c.l.b16 %v55
  %v189 = vunpack.c.l.b16 %v56
  %v190 = vunpack.c.l.b16 %v57
  %v191 = vpack.c.b16 %v165, %v164
  %v192 = vpack.c.b16 %v167, %v166
  %v193 = vpack.c.b16 %v169, %v168
  %v194 = vpack.c.b16 %v171, %v170
  %v195 = vpack.c.b16 %v173, %v172
  %v196 = vpack.c.b16 %v175, %v174
  %v197 = vpack.c.b16 %v177, %v176
  %v198 = vpack.c.b16 %v179, %v178
  %v199 = vpack.c.b16 %v181, %v180
  %v200 = vpack.c.b16 %v183, %v182
  %v201 = vpack.c.b16 %v185, %v184
  %v202 = vpack.c.b16 %v187, %v186
  %v203 = vpack.c.b16 %v189, %v188
  %v204 = vpack.c.b16 %v190, %v190
  %vm218 = vcmask 719872
  %v220 = vsel %vm218, %v114, 0
  %v223 = vsel %vm218, %v116, 0
  %v226 = vsel %vm218, %v118, 0
  %v229 = vsel %vm218, %v120, 0
  %v232 = vsel %vm218, %v122, 0
  %v235 = vsel %vm218, %v124, 0
  %v238 = vsel %vm218, %v126, 0
  %v241 = vsel %vm218, %v128, 0
  %vm243 = vcmask 1043456
  %v245 = vsel %vm243, %v204, 0
  %247 = vmatprep.subr.bf16.mxu0 0
  %248 = vmatpush1.bf16.msra.mxu0 %v191
  %249 = vmatprep.subr.bf16.mxu0 0
  %250 = vmatpush1.bf16.msra.mxu0 %v192
  %251 = vmatprep.subr.bf16.mxu0 0
  %252 = vmatpush1.bf16.msra.mxu0 %v193
  %253 = vmatprep.subr.bf16.mxu0 0
  %254 = vmatpush1.bf16.msra.mxu0 %v194
  %255 = vmatprep.subr.bf16.mxu0 0
  %256 = vmatpush1.bf16.msra.mxu0 %v195
  %257 = vmatprep.subr.bf16.mxu0 0
  %258 = vmatpush1.bf16.msra.mxu0 %v196
  %259 = vmatprep.subr.bf16.mxu0 0
  %260 = vmatpush1.bf16.msra.mxu0 %v197
  %261 = vmatprep.subr.bf16.mxu0 0
  %262 = vmatpush1.bf16.msra.mxu0 %v198
  %263 = vmatprep.subr.bf16.mxu0 0
  %264 = vmatpush1.bf16.msra.mxu0 %v199
  %265 = vmatprep.subr.bf16.mxu0 0
  %266 = vmatpush1.bf16.msra.mxu0 %v200
  %267 = vmatprep.subr.bf16.mxu0 0
  %268 = vmatpush1.bf16.msra.mxu0 %v201
  %269 = vmatprep.subr.bf16.mxu0 0
  %270 = vmatpush1.bf16.msra.mxu0 %v202
  %271 = vmatprep.subr.bf16.mxu0 0
  %272 = vmatpush1.bf16.msra.mxu0 %v203
  %273 = vmatprep.subr.bf16.mxu0 0
  %274 = vmatpush1.bf16.msra.mxu0 %v245
  %275 = vmatprep.subr.bf16.mxu0 0
  %276 = vmatpush1.bf16.msra.mxu0 0
  %277 = vmatprep.subr.bf16.mxu0 0
  %278 = vmatpush1.bf16.msra.mxu0 0
  %279 = vmatprep.mubr.bf16.mxu0 %v220
  %280 = vmatmul.mubr.bf16.gmra.mrb[0].mxu0 %v113
  %v281 = vpop.f32.mrb[0].mxu0
  %v282 = vadd.f32 %v63, %v281
  %v283 = vpop.f32.mrb[0].mxu0
  %v284 = vpop.f32.mrb[0].mxu0
  %v285 = vadd.f32 %v63, %v284
  %v286 = vpop.f32.mrb[0].mxu0
  %287 = vmatprep.mubr.bf16.mxu0 %v223
  %288 = vmatmul.mubr.bf16.gmra.mrb[0].mxu0 %v115
  %v289 = vpop.f32.mrb[0].mxu0
  %v290 = vadd.f32 %v63, %v289
  %v291 = vpop.f32.mrb[0].mxu0
  %v292 = vpop.f32.mrb[0].mxu0
  %v293 = vadd.f32 %v63, %v292
  %v294 = vpop.f32.mrb[0].mxu0
  %295 = vmatprep.mubr.bf16.mxu0 %v226
  %296 = vmatmul.mubr.bf16.gmra.mrb[0].mxu0 %v117
  %v297 = vpop.f32.mrb[0].mxu0
  %v298 = vadd.f32 %v63, %v297
  %v299 = vpop.f32.mrb[0].mxu0
  %v300 = vpop.f32.mrb[0].mxu0
  %v301 = vadd.f32 %v63, %v300
  %v302 = vpop.f32.mrb[0].mxu0
  %303 = vmatprep.mubr.bf16.mxu0 %v229
  %304 = vmatmul.mubr.bf16.gmra.mrb[0].mxu0 %v119
  %v305 = vpop.f32.mrb[0].mxu0
  %v306 = vadd.f32 %v63, %v305
  %v307 = vpop.f32.mrb[0].mxu0
  %v308 = vpop.f32.mrb[0].mxu0
  %v309 = vadd.f32 %v63, %v308
  %v310 = vpop.f32.mrb[0].mxu0
  %311 = vmatprep.mubr.bf16.mxu0 %v232
  %312 = vmatmul.mubr.bf16.gmra.mrb[0].mxu0 %v121
  %v313 = vpop.f32.mrb[0].mxu0
  %v314 = vadd.f32 %v63, %v313
  %v315 = vpop.f32.mrb[0].mxu0
  %v316 = vpop.f32.mrb[0].mxu0
  %v317 = vadd.f32 %v63, %v316
  %v318 = vpop.f32.mrb[0].mxu0
  %319 = vmatprep.mubr.bf16.mxu0 %v235
  %320 = vmatmul.mubr.bf16.gmra.mrb[0].mxu0 %v123
  %v321 = vpop.f32.mrb[0].mxu0
  %v322 = vadd.f32 %v63, %v321
  %v323 = vpop.f32.mrb[0].mxu0
  %v324 = vpop.f32.mrb[0].mxu0
  %v325 = vadd.f32 %v63, %v324
  %v326 = vpop.f32.mrb[0].mxu0
  %327 = vmatprep.mubr.bf16.mxu0 %v238
  %328 = vmatmul.mubr.bf16.gmra.mrb[0].mxu0 %v125
  %v329 = vpop.f32.mrb[0].mxu0
  %v330 = vadd.f32 %v63, %v329
  %v331 = vpop.f32.mrb[0].mxu0
  %v332 = vpop.f32.mrb[0].mxu0
  %v333 = vadd.f32 %v63, %v332
  %v334 = vpop.f32.mrb[0].mxu0
  %335 = vmatprep.mubr.bf16.mxu0 %v241
  %336 = vmatmul.mubr.bf16.gmra.mrb[0].mxu0 %v127
  %v337 = vpop.f32.mrb[0].mxu0
  %v338 = vadd.f32 %v63, %v337
  %v339 = vpop.f32.mrb[0].mxu0
  %v340 = vpop.f32.mrb[0].mxu0
  %v341 = vadd.f32 %v63, %v340
  %v342 = vpop.f32.mrb[0].mxu0
  %343 = vdwg.mxu0
  %v344 = vadd.f32 %v282, 3.0
  %v345 = vadd.f32 %v285, 3.0
  %v346 = vadd.f32 %v290, 3.0
  %v347 = vadd.f32 %v293, 3.0
  %v348 = vadd.f32 %v298, 3.0
  %v349 = vadd.f32 %v301, 3.0
  %v350 = vadd.f32 %v306, 3.0
  %v351 = vadd.f32 %v309, 3.0
  %v352 = vadd.f32 %v314, 3.0
  %v353 = vadd.f32 %v317, 3.0
  %v354 = vadd.f32 %v322, 3.0
  %v355 = vadd.f32 %v325, 3.0
  %v356 = vadd.f32 %v330, 3.0
  %v357 = vadd.f32 %v333, 3.0
  %v358 = vadd.f32 %v338, 3.0
  %v359 = vadd.f32 %v341, 3.0
  %v360 = vmax.f32 %v344, 0.0
  %v361 = vmax.f32 %v345, 0.0
  %v362 = vmax.f32 %v346, 0.0
  %v363 = vmax.f32 %v347, 0.0
  %v364 = vmax.f32 %v348, 0.0
  %v365 = vmax.f32 %v349, 0.0
  %v366 = vmax.f32 %v350, 0.0
  %v367 = vmax.f32 %v351, 0.0
  %v368 = vmax.f32 %v352, 0.0
  %v369 = vmax.f32 %v353, 0.0
  %v370 = vmax.f32 %v354, 0.0
  %v371 = vmax.f32 %v355, 0.0
  %v372 = vmax.f32 %v356, 0.0
  %v373 = vmax.f32 %v357, 0.0
  %v374 = vmax.f32 %v358, 0.0
  %v375 = vmax.f32 %v359, 0.0
  %v376 = vmin.f32 %v360, 6.0
  %v377 = vmin.f32 %v361, 6.0
  %v378 = vmin.f32 %v362, 6.0
  %v379 = vmin.f32 %v363, 6.0
  %v380 = vmin.f32 %v364, 6.0
  %v381 = vmin.f32 %v365, 6.0
  %v382 = vmin.f32 %v366, 6.0
  %v383 = vmin.f32 %v367, 6.0
  %v384 = vmin.f32 %v368, 6.0
  %v385 = vmin.f32 %v369, 6.0
  %v386 = vmin.f32 %v370, 6.0
  %v387 = vmin.f32 %v371, 6.0
  %v388 = vmin.f32 %v372, 6.0
  %v389 = vmin.f32 %v373, 6.0
  %v390 = vmin.f32 %v374, 6.0
  %v391 = vmin.f32 %v375, 6.0
  %v392 = vmul.f32 %v282, %v376
  %v393 = vmul.f32 %v285, %v377
  %v394 = vmul.f32 %v290, %v378
  %v395 = vmul.f32 %v293, %v379
  %v396 = vmul.f32 %v298, %v380
  %v397 = vmul.f32 %v301, %v381
  %v398 = vmul.f32 %v306, %v382
  %v399 = vmul.f32 %v309, %v383
  %v400 = vmul.f32 %v314, %v384
  %v401 = vmul.f32 %v317, %v385
  %v402 = vmul.f32 %v322, %v386
  %v403 = vmul.f32 %v325, %v387
  %v404 = vmul.f32 %v330, %v388
  %v405 = vmul.f32 %v333, %v389
  %v406 = vmul.f32 %v338, %v390
  %v407 = vmul.f32 %v341, %v391
  %v408 = vmul.f32 %v392, 0.16666667
  %v409 = vmul.f32 %v393, 0.16666667
  %v410 = vmul.f32 %v394, 0.16666667
  %v411 = vmul.f32 %v395, 0.16666667
  %v412 = vmul.f32 %v396, 0.16666667
  %v413 = vmul.f32 %v397, 0.16666667
  %v414 = vmul.f32 %v398, 0.16666667
  %v415 = vmul.f32 %v399, 0.16666667
  %v416 = vmul.f32 %v400, 0.16666667
  %v417 = vmul.f32 %v401, 0.16666667
  %v418 = vmul.f32 %v402, 0.16666667
  %v419 = vmul.f32 %v403, 0.16666667
  %v420 = vmul.f32 %v404, 0.16666667
  %v421 = vmul.f32 %v405, 0.16666667
  %v422 = vmul.f32 %v406, 0.16666667
  %v423 = vmul.f32 %v407, 0.16666667
  %v424 = vpack.c.bf16 %v409, %v408
  %v425 = vpack.c.bf16 %v411, %v410
  %v426 = vpack.c.bf16 %v413, %v412
  %v427 = vpack.c.bf16 %v415, %v414
  %v428 = vpack.c.bf16 %v417, %v416
  %v429 = vpack.c.bf16 %v419, %v418
  %v430 = vpack.c.bf16 %v421, %v420
  %v431 = vpack.c.bf16 %v423, %v422
  %v440 = vunpack.c.l.b16 %v424
  %v441 = vunpack.c.h.b16 %v424
  %v442 = vunpack.c.l.b16 %v425
  %v443 = vunpack.c.h.b16 %v425
  %v444 = vunpack.c.l.b16 %v426
  %v445 = vunpack.c.h.b16 %v426
  %v446 = vunpack.c.l.b16 %v427
  %v447 = vunpack.c.h.b16 %v427
  %v448 = vunpack.c.l.b16 %v428
  %v449 = vunpack.c.h.b16 %v428
  %v450 = vunpack.c.l.b16 %v429
  %v451 = vunpack.c.h.b16 %v429
  %v452 = vunpack.c.l.b16 %v430
  %v453 = vunpack.c.h.b16 %v430
  %v454 = vunpack.c.l.b16 %v431
  %v455 = vunpack.c.h.b16 %v431
  %v456 = vpack.c.b16 %v440, %v440
  %v457 = vpack.c.b16 %v441, %v441
  %v458 = vpack.c.b16 %v442, %v442
  %v459 = vpack.c.b16 %v443, %v443
  %v460 = vpack.c.b16 %v444, %v444
  %v461 = vpack.c.b16 %v445, %v445
  %v462 = vpack.c.b16 %v446, %v446
  %v463 = vpack.c.b16 %v447, %v447
  %v464 = vpack.c.b16 %v448, %v448
  %v465 = vpack.c.b16 %v449, %v449
  %v466 = vpack.c.b16 %v450, %v450
  %v467 = vpack.c.b16 %v451, %v451
  %v468 = vpack.c.b16 %v452, %v452
  %v469 = vpack.c.b16 %v453, %v453
  %v470 = vpack.c.b16 %v454, %v454
  %v471 = vpack.c.b16 %v455, %v455
  %vm488 = vcmask 322560
  %489 = vst.msk [vmem:[%s3] sm:$0xf] %vm488, %v456
  %490 = vst.msk [vmem:[%s3 + $0x4] sm:$0xf] %vm488, %v457
  %491 = vst.msk [vmem:[%s3 + $0x8] sm:$0xf] %vm488, %v458
  %492 = vst.msk [vmem:[%s3 + $0xc] sm:$0xf] %vm488, %v459
  %493 = vst.msk [vmem:[%s3 + $0x10] sm:$0xf] %vm488, %v460
  %494 = vst.msk [vmem:[%s3 + $0x14] sm:$0xf] %vm488, %v461
  %495 = vst.msk [vmem:[%s3 + $0x18] sm:$0xf] %vm488, %v462
  %496 = vst.msk [vmem:[%s3 + $0x1c] sm:$0xf] %vm488, %v463
  %497 = vst.msk [vmem:[%s3 + $0x20] sm:$0xf] %vm488, %v464
  %498 = vst.msk [vmem:[%s3 + $0x24] sm:$0xf] %vm488, %v465
  %499 = vst.msk [vmem:[%s3 + $0x28] sm:$0xf] %vm488, %v466
  %500 = vst.msk [vmem:[%s3 + $0x2c] sm:$0xf] %vm488, %v467
  %501 = vst.msk [vmem:[%s3 + $0x30] sm:$0xf] %vm488, %v468
  %502 = vst.msk [vmem:[%s3 + $0x34] sm:$0xf] %vm488, %v469
  %503 = vst.msk [vmem:[%s3 + $0x38] sm:$0xf] %vm488, %v470
  %504 = vst.msk [vmem:[%s3 + $0x3c] sm:$0xf] %vm488, %v471
  // Predicated region
  $region14: #{basic_block_forward.5} parent=0 // pred_check
    _
  $region15: #{basic_block_forward.5} parent=0 // pred_check_branch
    %506 = sbr.rel (0) target = $region17
  $region16: #{basic_block_forward.5} parent=0 // pred_region
    _
  $region17: #{basic_block_forward.5} parent=0 // pred_fallthru
    _
  // Predicated region
  $region18: #{basic_block_forward.5} parent=0 // pred_check
    _
  $region19: #{basic_block_forward.5} parent=0 // pred_check_branch
    %508 = sbr.rel (0) target = $region21
  $region20: #{basic_block_forward.5} parent=0 // pred_region
    _
  $region21: #{basic_block_forward.5} parent=0 // pred_fallthru
    _

</llo_original>
